<compile_context>
chip_gen: v7x
topology: tpu7x:2x2x1
jax: 0.10.0
libtpu: 0.0.40
codegen_flags: <defaults>
</compile_context>

<pallas_src>
import functools

import jax
import jax.numpy as jnp
from jax.experimental import pallas as pl
from jax.experimental.pallas import tpu as pltpu


def _round_up(n, m):
    return ((n + m - 1) // m) * m


def _vmem_limit_bytes():
    # Generation-aware VMEM budget: ~96 MiB on v5e/v6e (128 MiB phys), ~48 MiB on v7x.
    try:
        cap = int(pltpu.get_tpu_info().vmem_capacity_bytes)
        return (cap * 3) // 4
    except Exception:
        return 48 * 1024 * 1024


def _maybe_single_buffer(shape, index_map):
    # Constant-index inputs need no double buffer; halve their VMEM footprint.
    if hasattr(pl, "Buffered"):
        try:
            return pl.BlockSpec(tuple(shape), index_map, pipeline_mode=pl.Buffered(1))
        except Exception:
            pass
    return pl.BlockSpec(tuple(shape), index_map)


def _const_spec(shape):
    nd = len(shape)
    return _maybe_single_buffer(tuple(shape), lambda l, _nd=nd: (0,) * _nd)


def _layer_spec(shape):
    nd = len(shape)
    return pl.BlockSpec((None,) + tuple(shape[1:]),
                        lambda l, _nd=nd: (l,) + (0,) * (_nd - 1))


# --------------------------------------------------------------------------
# Pallas kernels
# --------------------------------------------------------------------------
def make_block_kernel(n_heads):
    """One grid step == one X2H attention sublayer; h persists in VMEM scratch."""

    def kernel(h0_ref, gsrc_ref, geo_ref, ew_ref, lbias_ref, pool_ref, expand_ref,
               wkvg_ref, wkvs_ref, bkv1_ref, lnkvg_ref, lnkvb_ref,
               wk2_ref, wv2_ref, bkv2_ref,
               wnode_ref, bq1_ref, lnqg_ref, lnqb_ref, wq2_ref, bq2_ref,
               hout_ref, hstate_ref):
        f32 = jnp.float32
        bf16 = jnp.bfloat16
        Np, H = h0_ref.shape
        NpK = geo_ref.shape[0]
        K = NpK // Np
        H2 = 2 * H

        layer = pl.program_id(0)

        @pl.when(layer == 0)
        def _init():
            hstate_ref[...] = h0_ref[...].astype(f32)

        h = hstate_ref[...]                                    # [Np, H] f32
        h_bf = h.astype(bf16)

        def layer_norm(u, g, b):
            mu = jnp.mean(u, axis=-1, keepdims=True)
            var = jnp.mean((u - mu) ** 2, axis=-1, keepdims=True)
            return (u - mu) * jax.lax.rsqrt(var + 1e-5) * g + b

        # ---- per-node fused projection: q hidden (cols [0,H)) and dst kv
        #      contribution (cols [H,3H)) from ONE MXU matmul. ----
        node = jnp.dot(h_bf, wnode_ref[...], preferred_element_type=f32)  # [Np, 3H]
        hd = node[:, H:]                                       # dst term, [Np, 2H]
        q1 = layer_norm(node[:, :H] + bq1_ref[...], lnqg_ref[...], lnqb_ref[...])
        q = (jnp.dot(jnp.maximum(q1, 0.0).astype(bf16), wq2_ref[...],
                     preferred_element_type=f32) + bq2_ref[...])          # [Np, H]

        # ---- src gather: one one-hot MXU matmul (dst gather eliminated). ----
        hs = jnp.dot(gsrc_ref[...], h_bf,
                     preferred_element_type=f32).astype(bf16)             # [NpK, H]

        # ---- fused k/v first linear, accumulated into one f32 buffer;
        #      dst term is a per-node broadcast along K (NOT a gather). ----
        pre = jnp.dot(geo_ref[...], wkvg_ref[...], preferred_element_type=f32)
        pre = pre + jnp.dot(hs, wkvs_ref[...], preferred_element_type=f32)
        hd_rep = jnp.broadcast_to(hd[:, None, :], (Np, K, H2)).reshape(NpK, H2)
        pre = pre + hd_rep + bkv1_ref[...]                     # [NpK, 2H] f32

        # Per-half LayerNorm; halves stay separate from here on (no lane concat,
        # no sub-128-lane split of a fused kv tensor later).
        lng = lnkvg_ref[...]
        lnb = lnkvb_ref[...]
        bkv2 = bkv2_ref[...]
        ak = jnp.maximum(layer_norm(pre[:, :H], lng[:, :H], lnb[:, :H]), 0.0)
        av = jnp.maximum(layer_norm(pre[:, H:], lng[:, H:], lnb[:, H:]), 0.0)
        k_e = (jnp.dot(ak.astype(bf16), wk2_ref[...],
                       preferred_element_type=f32) + bkv2[:, :H])         # [NpK, H]
        v_e = (jnp.dot(av.astype(bf16), wv2_ref[...],
                       preferred_element_type=f32) + bkv2[:, H:]) * ew_ref[...]

        # ---- attention: all heads at once (head-pool / head-expand ones matmuls,
        #      one joint masked softmax over K, one K-reduce for the message). ----
        q_rep = jnp.broadcast_to(q[:, None, :], (Np, K, H)).reshape(NpK, H)
        logit = jnp.dot((q_rep * k_e).astype(bf16), pool_ref[...],
                        preferred_element_type=f32)                       # [NpK, nh]
        logit = logit.reshape(Np, K, n_heads) + lbias_ref[...][:, :, None]
        m = jnp.max(logit, axis=1, keepdims=True)
        ee = jnp.exp(logit - m)
        alpha = ee * pl.reciprocal(jnp.sum(ee, axis=1, keepdims=True), approx=True)
        alpha_h = jnp.dot(alpha.reshape(NpK, n_heads).astype(bf16), expand_ref[...],
                          preferred_element_type=f32)                     # [NpK, H]
        msg = jnp.sum((alpha_h * v_e).reshape(Np, K, H), axis=1)          # [Np, H]

        hstate_ref[...] = h + msg                              # residual update

        @pl.when(layer == pl.num_programs(0) - 1)
        def _finalize():
            hout_ref[...] = hstate_ref[...].astype(hout_ref.dtype)

    return kernel


def eps_kernel(h_ref, w1_ref, b1_ref, w2_ref, b2_ref, w3_ref, b3_ref, out_ref):
    # Fused eps_rot_net + eps_crd_net: [H,4H] -> [4H,2H] (block-diag) -> [2H,128]
    # (last linear zero-padded to 128 lanes for unmasked stores; cols 0:6 are real).
    f32 = jnp.float32
    bf16 = jnp.bfloat16
    a = jnp.maximum(jnp.dot(h_ref[...].astype(bf16), w1_ref[...],
                            preferred_element_type=f32) + b1_ref[...], 0.0)
    a = jnp.maximum(jnp.dot(a.astype(bf16), w2_ref[...],
                            preferred_element_type=f32) + b2_ref[...], 0.0)
    out = jnp.dot(a.astype(bf16), w3_ref[...], preferred_element_type=f32) + b3_ref[...]
    out_ref[...] = out.astype(out_ref.dtype)


# --------------------------------------------------------------------------
# Pallas wrappers
# --------------------------------------------------------------------------
def x2h_block(h, gsrc, geo, ew, lbias, pool, expand, wts, n_heads, vmem_limit):
    Np, H = h.shape
    names = ('wkv_g', 'wkv_s', 'bkv1', 'lnkv_g', 'lnkv_b', 'wk2', 'wv2', 'bkv2',
             'wnode', 'bq1', 'lnq_g', 'lnq_b', 'wq2', 'bq2')
    weights = [wts[n] for n in names]
    L = weights[0].shape[0]
    consts = (h, gsrc, geo, ew, lbias, pool, expand)
    in_specs = ([_const_spec(a.shape) for a in consts]
                + [_layer_spec(w.shape) for w in weights])
    return pl.pallas_call(
        make_block_kernel(n_heads),
        out_shape=jax.ShapeDtypeStruct((Np, H), h.dtype),
        grid=(L,),
        in_specs=in_specs,
        out_specs=pl.BlockSpec((Np, H), lambda l: (0, 0)),
        scratch_shapes=[pltpu.VMEM((Np, H), jnp.float32)],
        compiler_params=pltpu.CompilerParams(
            dimension_semantics=("arbitrary",),
            vmem_limit_bytes=vmem_limit),
    )(*consts, *weights)


def eps_nets(h, ep, tn, vmem_limit):
    Ne, H = h.shape
    weights = [ep['w1'], ep['b1'], ep['w2'], ep['b2'], ep['w3p'], ep['b3p']]
    in_specs = [pl.BlockSpec((tn, H), lambda i: (i, 0))] + \
               [_const_spec(w.shape) for w in weights]
    return pl.pallas_call(
        eps_kernel,
        out_shape=jax.ShapeDtypeStruct((Ne, 128), h.dtype),
        grid=(Ne // tn,),
        in_specs=in_specs,
        out_specs=pl.BlockSpec((tn, 128), lambda i: (i, 0)),
        compiler_params=pltpu.CompilerParams(
            dimension_semantics=("parallel",),
            vmem_limit_bytes=vmem_limit),
    )(h, *weights)


# --------------------------------------------------------------------------
# Plain-JAX glue (graph construction, SO(3) helpers)
# --------------------------------------------------------------------------
def knn_graph(x, batch_idx, k):
    # knn_graph(flow='source_to_target'): nbr[i, m] = m-th nearest source of dst i.
    n = x.shape[0]
    d2 = jnp.sum((x[:, None, :] - x[None, :, :]) ** 2, axis=-1)
    valid_pair = (batch_idx[:, None] == batch_idx[None, :]) & ~jnp.eye(n, dtype=bool)
    d2 = jnp.where(valid_pair, d2, jnp.inf)
    neg, nbr = jax.lax.top_k(-d2, k)
    valid = jnp.isfinite(neg)            # False when the batch has fewer than k+1 members
    return nbr, valid


def gaussian_smearing(dist, num_g, r_max):
    offsets = jnp.linspace(0.0, r_max, num_g)
    delta = r_max / max(num_g - 1, 1)
    coeff = -0.5 / (delta * delta)
    return jnp.exp(coeff * (dist[..., None] - offsets) ** 2)


def quaternion_1ijk_to_rotation_matrix(q):
    b, c, d = q[..., 0], q[..., 1], q[..., 2]
    s = jnp.sqrt(1.0 + b * b + c * c + d * d)
    a, b, c, d = 1.0 / s, b / s, c / s, d / s
    R = jnp.stack([
        a * a + b * b - c * c - d * d, 2 * b * c - 2 * a * d, 2 * b * d + 2 * a * c,
        2 * b * c + 2 * a * d, a * a - b * b + c * c - d * d, 2 * c * d - 2 * a * b,
        2 * b * d - 2 * a * c, 2 * c * d + 2 * a * b, a * a - b * b - c * c + d * d,
    ], axis=-1).reshape(q.shape[:-1] + (3, 3))
    return R


def so3vec_to_rotation(w):
    theta = jnp.linalg.norm(w, axis=-1, keepdims=True)
    axis = w / jnp.maximum(theta, 1e-8)
    ax, ay, az = axis[..., 0], axis[..., 1], axis[..., 2]
    zero = jnp.zeros_like(ax)
    Km = jnp.stack([zero, -az, ay,
                    az, zero, -ax,
                    -ay, ax, zero], axis=-1).reshape(w.shape[:-1] + (3, 3))
    s = jnp.sin(theta)[..., None]
    c = jnp.cos(theta)[..., None]
    I = jnp.eye(3, dtype=w.dtype)
    return I + s * Km + (1.0 - c) * jnp.einsum('nij,njk->nik', Km, Km)


def rotation_to_so3vec(R):
    tr = R[..., 0, 0] + R[..., 1, 1] + R[..., 2, 2]
    cos_t = jnp.clip((tr - 1.0) / 2.0, -1.0 + 1e-6, 1.0 - 1e-6)
    theta = jnp.arccos(cos_t)
    vec = jnp.stack([R[..., 2, 1] - R[..., 1, 2],
                     R[..., 0, 2] - R[..., 2, 0],
                     R[..., 1, 0] - R[..., 0, 1]], axis=-1)
    axis = vec / (2.0 * jnp.sin(theta)[..., None] + 1e-8)
    return axis * theta[..., None]


# --------------------------------------------------------------------------
# Full forward
# --------------------------------------------------------------------------
def ipa_transformer_forward(params, cfg, x, o, h, batch_idx, lig_flag, gen_flag):
    N = x.shape[0]
    K = int(cfg['k'])
    G = cfg['num_r_gaussian']
    H = cfg['node_feat_dim']
    n_heads = cfg['n_heads']
    dh = H // n_heads
    vmem_limit = _vmem_limit_bytes()

    Np = _round_up(N, 8)
    NpK = Np * K

    # ---- graph construction: positions never change inside this module, so the knn
    #      graph and all edge features are identical for every block -> build once. ----
    nbr, valid = knn_graph(x, batch_idx, K)                   # [N, K]
    validf = valid.astype(jnp.float32)

    src_lig = lig_flag[nbr] == 1
    dst_lig = (lig_flag == 1)[:, None]
    et_idx = jnp.where(src_lig & dst_lig, 0,
             jnp.where(src_lig & ~dst_lig, 1,
             jnp.where(~src_lig & dst_lig, 2, 3)))
    edge_type = jax.nn.one_hot(et_idx, 4, dtype=jnp.float32)   # [N, K, 4]

    rel = x[:, None, :] - x[nbr]                               # x[dst] - x[src]
    dist = jnp.linalg.norm(rel, axis=-1)                       # [N, K]
    dist_feat = gaussian_smearing(dist, G, cfg['r_max'])       # [N, K, G]
    logits = dist_feat @ params['ew_w'] + params['ew_b']       # [N, K, 1]
    e_w = jax.nn.sigmoid(logits[..., 0]) * validf              # invalid edges contribute 0
    lbias = (validf - 1.0) * 1e9                               # 0 valid / -1e9 invalid

    r_feat = (edge_type[..., :, None] * dist_feat[..., None, :]).reshape(N, K, 4 * G)
    geo = jnp.concatenate([edge_type, r_feat], axis=-1)        # [N, K, 4 + 4G]
    G4 = geo.shape[-1]

    # Pre-flattened, padded edge operands (matmul operands in bf16).
    geo_p = jnp.zeros((NpK, G4), jnp.bfloat16).at[:N * K].set(
        geo.reshape(N * K, G4).astype(jnp.bfloat16))
    ew_p = jnp.zeros((NpK, 1), jnp.float32).at[:N * K].set(e_w.reshape(N * K, 1))
    lbias_p = jnp.zeros((Np, K), jnp.float32).at[:N].set(lbias)

    # One-hot src-gather operator (dst gather is a free per-node broadcast in-kernel).
    cols = jnp.arange(Np)
    src_oh = ((nbr.reshape(N * K)[:, None] == cols[None, :])
              & valid.reshape(N * K)[:, None])
    gsrc = jnp.zeros((NpK, Np), jnp.bfloat16).at[:N * K].set(src_oh.astype(jnp.bfloat16))

    # Head pooling / expansion matrices for the all-head attention path.
    head_oh = jax.nn.one_hot(jnp.arange(H) // dh, n_heads, dtype=jnp.float32)  # [H, nh]
    pool = (head_oh / jnp.sqrt(float(dh))).astype(jnp.bfloat16)                # [H, nh]
    expand = head_oh.T.astype(jnp.bfloat16)                                    # [nh, H]

    h_p = jnp.zeros((Np, H), h.dtype).at[:N].set(h)
    for _ in range(cfg['num_blocks']):
        # One pallas_call per block runs all num_layers * num_x2h sublayers.
        h_p = x2h_block(h_p, gsrc, geo_p, ew_p, lbias_p, pool, expand,
                        params['x2h'], n_heads, vmem_limit)
    h = h_p[:N]

    # ---- fused eps_rot / eps_crd heads (tiled over nodes, lane-dense output) ----
    tn = min(512, _round_up(N, 8))
    Ne = _round_up(N, tn)
    h_e = jnp.zeros((Ne, H), h.dtype).at[:N].set(h)
    rot_crd = eps_nets(h_e, params['eps'], tn, vmem_limit)[:N, :6]   # [N, 6]
    eps_rot, eps_crd = rot_crd[:, :3], rot_crd[:, 3:]

    U_update = quaternion_1ijk_to_rotation_matrix(eps_rot)
    R_o = so3vec_to_rotation(o)
    R_next = jnp.einsum('nij,njk->nik', R_o, U_update)
    o_next = rotation_to_so3vec(R_next)
    o_next = jnp.where(gen_flag[:, None], o_next, o)

    eps_pos = jnp.einsum('nij,nj->ni', R_o, eps_crd)
    eps_pos = jnp.where(gen_flag[:, None], eps_pos, jnp.zeros_like(eps_pos))
    return eps_pos, h, o_next, R_next                          # classifier is None


# --------------------------------------------------------------------------
# Deterministic synthetic parameters (fused / stacked layouts, bf16 matmul weights)
# --------------------------------------------------------------------------
def init_params(key, cfg):
    H = cfg['node_feat_dim']
    G = cfg['num_r_gaussian']
    G4 = 4 + 4 * G
    L = cfg['num_layers'] * cfg['num_x2h']
    keys = iter(jax.random.split(key, 40))

    def lin32(shape):
        return jax.random.normal(next(keys), shape, jnp.float32) / jnp.sqrt(shape[-2])

    def lin(shape):
        return lin32(shape).astype(jnp.bfloat16)

    def zeros(shape):
        return jnp.zeros(shape, jnp.float32)

    def ones(shape):
        return jnp.ones(shape, jnp.float32)

    def bdiag(a, b):
        m, n = a.shape
        p, q = b.shape
        z = jnp.zeros((m + p, n + q), jnp.float32)
        return z.at[:m, :n].set(a).at[m:, n:].set(b)

    x2h = dict(
        # k/v edge MLP: fused first linear (output cols [0:H)=k hidden, [H:2H)=v hidden),
        # per-half LayerNorm, then separate H-wide second linears wk2 / wv2.
        wkv_g=lin((L, G4, 2 * H)),
        wkv_s=lin((L, H, 2 * H)),
        bkv1=zeros((L, 1, 2 * H)),
        lnkv_g=ones((L, 1, 2 * H)), lnkv_b=zeros((L, 1, 2 * H)),
        wk2=lin((L, H, H)), wv2=lin((L, H, H)),
        bkv2=zeros((L, 1, 2 * H)),
        # Per-node fused projection: cols [0:H) = q hidden (wq1), [H:3H) = dst kv (wkv_d).
        wnode=lin((L, H, 3 * H)),
        bq1=zeros((L, 1, H)),
        lnq_g=ones((L, 1, H)), lnq_b=zeros((L, 1, H)),
        wq2=lin((L, H, H)), bq2=zeros((L, 1, H)),
    )

    w3 = bdiag(lin32((H, 3)), lin32((H, 3)))                         # [2H, 6]
    w3p = jnp.zeros((2 * H, 128), jnp.float32).at[:, :6].set(w3)
    eps = dict(
        w1=jnp.concatenate([lin32((H, 2 * H)), lin32((H, 2 * H))],
                           axis=1).astype(jnp.bfloat16),             # [H, 4H]
        b1=zeros((1, 4 * H)),
        w2=bdiag(lin32((2 * H, H)), lin32((2 * H, H))).astype(jnp.bfloat16),  # [4H, 2H]
        b2=zeros((1, 2 * H)),
        w3p=w3p.astype(jnp.bfloat16),                                # [2H, 128] lane-dense
        b3p=zeros((1, 128)),
    )
    return dict(x2h=x2h, eps=eps,
                ew_w=lin32((G, 1)), ew_b=jnp.zeros((1,), jnp.float32))


# --------------------------------------------------------------------------
# Main
# --------------------------------------------------------------------------
if __name__ == "__main__":
    cfg = dict(num_classes=None, num_blocks=1, num_layers=2,
               node_feat_dim=32, pair_feat_dim=32, n_heads=4, edge_feat_dim=4,
               act_fn='relu', norm=True, cutoff_mode='knn', k=4, r_max=10.0,
               ew_type='global', num_r_gaussian=8, num_x2h=1, num_h2x=1,
               num_init_x2h=1, num_init_h2x=0, x2h_out_fc=False)

    N = 16
    key = jax.random.PRNGKey(0)
    kx, ko, kh, kf = jax.random.split(key, 4)
    x = jax.random.normal(kx, (N, 3), jnp.float32) * 3.0
    o = jax.random.normal(ko, (N, 3), jnp.float32) * 0.5
    h = jax.random.normal(kh, (N, cfg['node_feat_dim']), jnp.float32)
    batch_idx = jnp.repeat(jnp.arange(2, dtype=jnp.int32), N // 2)
    lig_flag = (jax.random.uniform(kf, (N,)) > 0.5).astype(jnp.int32)
    gen_flag = (jnp.arange(N) % 2 == 0)

    params = init_params(jax.random.PRNGKey(42), cfg)

    fwd = jax.jit(functools.partial(ipa_transformer_forward, params, cfg))
    eps_pos, h_out, o_next, R_next = fwd(x, o, h, batch_idx, lig_flag, gen_flag)
    jax.block_until_ready((eps_pos, h_out, o_next, R_next))

    assert eps_pos.shape == (N, 3)
    assert h_out.shape == (N, cfg['node_feat_dim'])
    assert o_next.shape == (N, 3)
    assert R_next.shape == (N, 3, 3)
    assert bool(jnp.all(jnp.isfinite(eps_pos))) and bool(jnp.all(jnp.isfinite(h_out)))
    assert bool(jnp.all(jnp.isfinite(o_next))) and bool(jnp.all(jnp.isfinite(R_next)))
    print("KERNEL_OK")
</pallas_src>

<mosaic_0001>
module attributes {stable_mosaic.version = 11 : i64} {
  func.func @kernel(%arg0: i32, %arg1: memref<16x32xf32, #tpu.memory_space<vmem>>, %arg2: memref<64x16xbf16, #tpu.memory_space<vmem>>, %arg3: memref<64x36xbf16, #tpu.memory_space<vmem>>, %arg4: memref<64x1xf32, #tpu.memory_space<vmem>>, %arg5: memref<16x4xf32, #tpu.memory_space<vmem>>, %arg6: memref<32x4xbf16, #tpu.memory_space<vmem>>, %arg7: memref<4x32xbf16, #tpu.memory_space<vmem>>, %arg8: memref<1x36x64xbf16, #tpu.memory_space<vmem>>, %arg9: memref<1x32x64xbf16, #tpu.memory_space<vmem>>, %arg10: memref<1x1x64xf32, #tpu.memory_space<vmem>>, %arg11: memref<1x1x64xf32, #tpu.memory_space<vmem>>, %arg12: memref<1x1x64xf32, #tpu.memory_space<vmem>>, %arg13: memref<1x32x32xbf16, #tpu.memory_space<vmem>>, %arg14: memref<1x32x32xbf16, #tpu.memory_space<vmem>>, %arg15: memref<1x1x64xf32, #tpu.memory_space<vmem>>, %arg16: memref<1x32x96xbf16, #tpu.memory_space<vmem>>, %arg17: memref<1x1x32xf32, #tpu.memory_space<vmem>>, %arg18: memref<1x1x32xf32, #tpu.memory_space<vmem>>, %arg19: memref<1x1x32xf32, #tpu.memory_space<vmem>>, %arg20: memref<1x32x32xbf16, #tpu.memory_space<vmem>>, %arg21: memref<1x1x32xf32, #tpu.memory_space<vmem>>, %arg22: memref<16x32xf32, #tpu.memory_space<vmem>>, %arg23: memref<16x32xf32, #tpu.memory_space<vmem>>) attributes {dimension_semantics = [#tpu.dimension_semantics<arbitrary>], iteration_bounds = array<i64: 2>, scalar_prefetch = 0 : i64, scratch_operands = 1 : i64, tpu.core_type = #tpu.core_type<tc>, window_params = [{pipeline_mode = #tpu.pipeline_mode<synchronous>, transform_indices = @transform_0, window_bounds = array<i64: 16, 32>}, {pipeline_mode = #tpu.pipeline_mode<synchronous>, transform_indices = @transform_1, window_bounds = array<i64: 64, 16>}, {pipeline_mode = #tpu.pipeline_mode<synchronous>, transform_indices = @transform_2, window_bounds = array<i64: 64, 36>}, {pipeline_mode = #tpu.pipeline_mode<synchronous>, transform_indices = @transform_3, window_bounds = array<i64: 64, 1>}, {pipeline_mode = #tpu.pipeline_mode<synchronous>, transform_indices = @transform_4, window_bounds = array<i64: 16, 4>}, {pipeline_mode = #tpu.pipeline_mode<synchronous>, transform_indices = @transform_5, window_bounds = array<i64: 32, 4>}, {pipeline_mode = #tpu.pipeline_mode<synchronous>, transform_indices = @transform_6, window_bounds = array<i64: 4, 32>}, {transform_indices = @transform_7, window_bounds = array<i64: 1, 36, 64>}, {transform_indices = @transform_8, window_bounds = array<i64: 1, 32, 64>}, {transform_indices = @transform_9, window_bounds = array<i64: 1, 1, 64>}, {transform_indices = @transform_10, window_bounds = array<i64: 1, 1, 64>}, {transform_indices = @transform_11, window_bounds = array<i64: 1, 1, 64>}, {transform_indices = @transform_12, window_bounds = array<i64: 1, 32, 32>}, {transform_indices = @transform_13, window_bounds = array<i64: 1, 32, 32>}, {transform_indices = @transform_14, window_bounds = array<i64: 1, 1, 64>}, {transform_indices = @transform_15, window_bounds = array<i64: 1, 32, 96>}, {transform_indices = @transform_16, window_bounds = array<i64: 1, 1, 32>}, {transform_indices = @transform_17, window_bounds = array<i64: 1, 1, 32>}, {transform_indices = @transform_18, window_bounds = array<i64: 1, 1, 32>}, {transform_indices = @transform_19, window_bounds = array<i64: 1, 32, 32>}, {transform_indices = @transform_20, window_bounds = array<i64: 1, 1, 32>}, {pipeline_mode = #tpu.pipeline_mode<synchronous>, transform_indices = @transform_21, window_bounds = array<i64: 16, 32>}]} {
    %c0_i32 = arith.constant 0 : i32
    %0 = arith.cmpi eq, %arg0, %c0_i32 : i32
    %1 = arith.extui %0 : i1 to i32
    %c0_i32_0 = arith.constant 0 : i32
    %2 = arith.cmpi ne, %1, %c0_i32_0 : i32
    scf.if %2 {
      %c0_88 = arith.constant 0 : index
      %c0_89 = arith.constant 0 : index
      %182 = vector.load %arg1[%c0_88, %c0_89] : memref<16x32xf32, #tpu.memory_space<vmem>>, vector<16x32xf32>
      %c0_90 = arith.constant 0 : index
      %c0_91 = arith.constant 0 : index
      %183 = vector.load %arg23[%c0_90, %c0_91] : memref<16x32xf32, #tpu.memory_space<vmem>>, vector<16x32xf32>
      tpu.vector_store %arg23[%c0_90, %c0_91], %182 {strides = array<i32>} : memref<16x32xf32, #tpu.memory_space<vmem>>, vector<16x32xf32>,
    } else {
    }
    %c0 = arith.constant 0 : index
    %c0_1 = arith.constant 0 : index
    %3 = vector.load %arg23[%c0, %c0_1] : memref<16x32xf32, #tpu.memory_space<vmem>>, vector<16x32xf32>
    %4 = arith.truncf %3 : vector<16x32xf32> to vector<16x32xbf16>
    %c0_2 = arith.constant 0 : index
    %c0_3 = arith.constant 0 : index
    %c0_4 = arith.constant 0 : index
    %5 = vector.load %arg16[%c0_2, %c0_3, %c0_4] : memref<1x32x96xbf16, #tpu.memory_space<vmem>>, vector<1x32x96xbf16>
    %6 = vector.shape_cast %5 : vector<1x32x96xbf16> to vector<32x96xbf16>
    %cst = arith.constant dense<0.000000e+00> : vector<16x96xf32>
    %7 = tpu.matmul %4, %6, %cst {dimension_numbers = #tpu.dot_dimension_numbers<[1], [0], [0], [1], [0, 0, 1, 1], [], []>} : vector<16x32xbf16>, vector<32x96xbf16>, vector<16x96xf32> -> vector<16x96xf32>
    %8 = vector.extract_strided_slice %7 {offsets = [0, 32], sizes = [16, 64], strides = [1, 1]} : vector<16x96xf32> to vector<16x64xf32>
    %9 = vector.extract_strided_slice %7 {offsets = [0, 0], sizes = [16, 32], strides = [1, 1]} : vector<16x96xf32> to vector<16x32xf32>
    %c0_5 = arith.constant 0 : index
    %c0_6 = arith.constant 0 : index
    %c0_7 = arith.constant 0 : index
    %10 = vector.load %arg17[%c0_5, %c0_6, %c0_7] : memref<1x1x32xf32, #tpu.memory_space<vmem>>, vector<1x1x32xf32>
    %11 = vector.shape_cast %10 : vector<1x1x32xf32> to vector<1x32xf32>
    %12 = vector.broadcast %11 : vector<1x32xf32> to vector<16x32xf32>
    %13 = arith.addf %9, %12 : vector<16x32xf32>
    %c0_8 = arith.constant 0 : index
    %c0_9 = arith.constant 0 : index
    %c0_10 = arith.constant 0 : index
    %14 = vector.load %arg18[%c0_8, %c0_9, %c0_10] : memref<1x1x32xf32, #tpu.memory_space<vmem>>, vector<1x1x32xf32>
    %15 = vector.shape_cast %14 : vector<1x1x32xf32> to vector<1x32xf32>
    %c0_11 = arith.constant 0 : index
    %c0_12 = arith.constant 0 : index
    %c0_13 = arith.constant 0 : index
    %16 = vector.load %arg19[%c0_11, %c0_12, %c0_13] : memref<1x1x32xf32, #tpu.memory_space<vmem>>, vector<1x1x32xf32>
    %17 = vector.shape_cast %16 : vector<1x1x32xf32> to vector<1x32xf32>
    %cst_14 = arith.constant dense<0.000000e+00> : vector<16xf32>
    %18 = vector.multi_reduction <add>, %13, %cst_14 [1] : vector<16x32xf32> to vector<16xf32>
    %19 = vector.shape_cast %18 : vector<16xf32> to vector<16x1xf32>
    %cst_15 = arith.constant 3.200000e+01 : f32
    %20 = vector.broadcast %cst_15 : f32 to vector<16x1xf32>
    %21 = arith.divf %19, %20 : vector<16x1xf32>
    %22 = vector.broadcast %21 : vector<16x1xf32> to vector<16x32xf32>
    %23 = arith.subf %13, %22 : vector<16x32xf32>
    %24 = arith.mulf %23, %23 : vector<16x32xf32>
    %cst_16 = arith.constant dense<0.000000e+00> : vector<16xf32>
    %25 = vector.multi_reduction <add>, %24, %cst_16 [1] : vector<16x32xf32> to vector<16xf32>
    %26 = vector.shape_cast %25 : vector<16xf32> to vector<16x1xf32>
    %cst_17 = arith.constant 3.200000e+01 : f32
    %27 = vector.broadcast %cst_17 : f32 to vector<16x1xf32>
    %28 = arith.divf %26, %27 : vector<16x1xf32>
    %29 = vector.broadcast %21 : vector<16x1xf32> to vector<16x32xf32>
    %30 = arith.subf %13, %29 : vector<16x32xf32>
    %cst_18 = arith.constant 9.99999974E-6 : f32
    %31 = vector.broadcast %cst_18 : f32 to vector<16x1xf32>
    %32 = arith.addf %28, %31 : vector<16x1xf32>
    %33 = math.rsqrt %32 : vector<16x1xf32>
    %34 = vector.broadcast %33 : vector<16x1xf32> to vector<16x32xf32>
    %35 = arith.mulf %30, %34 : vector<16x32xf32>
    %36 = vector.broadcast %15 : vector<1x32xf32> to vector<16x32xf32>
    %37 = arith.mulf %35, %36 : vector<16x32xf32>
    %38 = vector.broadcast %17 : vector<1x32xf32> to vector<16x32xf32>
    %39 = arith.addf %37, %38 : vector<16x32xf32>
    %cst_19 = arith.constant 0.000000e+00 : f32
    %40 = vector.broadcast %cst_19 : f32 to vector<16x32xf32>
    %41 = arith.maximumf %39, %40 : vector<16x32xf32>
    %42 = arith.truncf %41 : vector<16x32xf32> to vector<16x32xbf16>
    %c0_20 = arith.constant 0 : index
    %c0_21 = arith.constant 0 : index
    %c0_22 = arith.constant 0 : index
    %43 = vector.load %arg20[%c0_20, %c0_21, %c0_22] : memref<1x32x32xbf16, #tpu.memory_space<vmem>>, vector<1x32x32xbf16>
    %44 = vector.shape_cast %43 : vector<1x32x32xbf16> to vector<32x32xbf16>
    %cst_23 = arith.constant dense<0.000000e+00> : vector<16x32xf32>
    %45 = tpu.matmul %42, %44, %cst_23 {dimension_numbers = #tpu.dot_dimension_numbers<[1], [0], [0], [1], [0, 0, 1, 1], [], []>} : vector<16x32xbf16>, vector<32x32xbf16>, vector<16x32xf32> -> vector<16x32xf32>
    %c0_24 = arith.constant 0 : index
    %c0_25 = arith.constant 0 : index
    %c0_26 = arith.constant 0 : index
    %46 = vector.load %arg21[%c0_24, %c0_25, %c0_26] : memref<1x1x32xf32, #tpu.memory_space<vmem>>, vector<1x1x32xf32>
    %47 = vector.shape_cast %46 : vector<1x1x32xf32> to vector<1x32xf32>
    %48 = vector.broadcast %47 : vector<1x32xf32> to vector<16x32xf32>
    %49 = arith.addf %45, %48 : vector<16x32xf32>
    %c0_27 = arith.constant 0 : index
    %c0_28 = arith.constant 0 : index
    %50 = vector.load %arg2[%c0_27, %c0_28] : memref<64x16xbf16, #tpu.memory_space<vmem>>, vector<64x16xbf16>
    %cst_29 = arith.constant dense<0.000000e+00> : vector<64x32xf32>
    %51 = tpu.matmul %50, %4, %cst_29 {dimension_numbers = #tpu.dot_dimension_numbers<[1], [0], [0], [1], [0, 0, 1, 1], [], []>} : vector<64x16xbf16>, vector<16x32xbf16>, vector<64x32xf32> -> vector<64x32xf32>
    %52 = arith.truncf %51 : vector<64x32xf32> to vector<64x32xbf16>
    %c0_30 = arith.constant 0 : index
    %c0_31 = arith.constant 0 : index
    %53 = vector.load %arg3[%c0_30, %c0_31] : memref<64x36xbf16, #tpu.memory_space<vmem>>, vector<64x36xbf16>
    %c0_32 = arith.constant 0 : index
    %c0_33 = arith.constant 0 : index
    %c0_34 = arith.constant 0 : index
    %54 = vector.load %arg8[%c0_32, %c0_33, %c0_34] : memref<1x36x64xbf16, #tpu.memory_space<vmem>>, vector<1x36x64xbf16>
    %55 = vector.shape_cast %54 : vector<1x36x64xbf16> to vector<36x64xbf16>
    %cst_35 = arith.constant dense<0.000000e+00> : vector<64x64xf32>
    %56 = tpu.matmul %53, %55, %cst_35 {dimension_numbers = #tpu.dot_dimension_numbers<[1], [0], [0], [1], [0, 0, 1, 1], [], []>} : vector<64x36xbf16>, vector<36x64xbf16>, vector<64x64xf32> -> vector<64x64xf32>
    %c0_36 = arith.constant 0 : index
    %c0_37 = arith.constant 0 : index
    %c0_38 = arith.constant 0 : index
    %57 = vector.load %arg9[%c0_36, %c0_37, %c0_38] : memref<1x32x64xbf16, #tpu.memory_space<vmem>>, vector<1x32x64xbf16>
    %58 = vector.shape_cast %57 : vector<1x32x64xbf16> to vector<32x64xbf16>
    %cst_39 = arith.constant dense<0.000000e+00> : vector<64x64xf32>
    %59 = tpu.matmul %52, %58, %cst_39 {dimension_numbers = #tpu.dot_dimension_numbers<[1], [0], [0], [1], [0, 0, 1, 1], [], []>} : vector<64x32xbf16>, vector<32x64xbf16>, vector<64x64xf32> -> vector<64x64xf32>
    %60 = arith.addf %56, %59 : vector<64x64xf32>
    %61 = vector.shape_cast %8 : vector<16x64xf32> to vector<16x1x64xf32>
    %62 = vector.shape_cast %61 : vector<16x1x64xf32> to vector<16x1x64xf32>
    %63 = vector.broadcast %62 : vector<16x1x64xf32> to vector<16x4x64xf32>
    %64 = vector.shape_cast %63 : vector<16x4x64xf32> to vector<64x64xf32>
    %65 = arith.addf %60, %64 : vector<64x64xf32>
    %c0_40 = arith.constant 0 : index
    %c0_41 = arith.constant 0 : index
    %c0_42 = arith.constant 0 : index
    %66 = vector.load %arg10[%c0_40, %c0_41, %c0_42] : memref<1x1x64xf32, #tpu.memory_space<vmem>>, vector<1x1x64xf32>
    %67 = vector.shape_cast %66 : vector<1x1x64xf32> to vector<1x64xf32>
    %68 = vector.broadcast %67 : vector<1x64xf32> to vector<64x64xf32>
    %69 = arith.addf %65, %68 : vector<64x64xf32>
    %c0_43 = arith.constant 0 : index
    %c0_44 = arith.constant 0 : index
    %c0_45 = arith.constant 0 : index
    %70 = vector.load %arg11[%c0_43, %c0_44, %c0_45] : memref<1x1x64xf32, #tpu.memory_space<vmem>>, vector<1x1x64xf32>
    %71 = vector.shape_cast %70 : vector<1x1x64xf32> to vector<1x64xf32>
    %c0_46 = arith.constant 0 : index
    %c0_47 = arith.constant 0 : index
    %c0_48 = arith.constant 0 : index
    %72 = vector.load %arg12[%c0_46, %c0_47, %c0_48] : memref<1x1x64xf32, #tpu.memory_space<vmem>>, vector<1x1x64xf32>
    %73 = vector.shape_cast %72 : vector<1x1x64xf32> to vector<1x64xf32>
    %c0_49 = arith.constant 0 : index
    %c0_50 = arith.constant 0 : index
    %c0_51 = arith.constant 0 : index
    %74 = vector.load %arg15[%c0_49, %c0_50, %c0_51] : memref<1x1x64xf32, #tpu.memory_space<vmem>>, vector<1x1x64xf32>
    %75 = vector.shape_cast %74 : vector<1x1x64xf32> to vector<1x64xf32>
    %76 = vector.extract_strided_slice %69 {offsets = [0, 0], sizes = [64, 32], strides = [1, 1]} : vector<64x64xf32> to vector<64x32xf32>
    %77 = vector.extract_strided_slice %71 {offsets = [0, 0], sizes = [1, 32], strides = [1, 1]} : vector<1x64xf32> to vector<1x32xf32>
    %78 = vector.extract_strided_slice %73 {offsets = [0, 0], sizes = [1, 32], strides = [1, 1]} : vector<1x64xf32> to vector<1x32xf32>
    %cst_52 = arith.constant dense<0.000000e+00> : vector<64xf32>
    %79 = vector.multi_reduction <add>, %76, %cst_52 [1] : vector<64x32xf32> to vector<64xf32>
    %80 = vector.shape_cast %79 : vector<64xf32> to vector<64x1xf32>
    %cst_53 = arith.constant 3.200000e+01 : f32
    %81 = vector.broadcast %cst_53 : f32 to vector<64x1xf32>
    %82 = arith.divf %80, %81 : vector<64x1xf32>
    %83 = vector.broadcast %82 : vector<64x1xf32> to vector<64x32xf32>
    %84 = arith.subf %76, %83 : vector<64x32xf32>
    %85 = arith.mulf %84, %84 : vector<64x32xf32>
    %cst_54 = arith.constant dense<0.000000e+00> : vector<64xf32>
    %86 = vector.multi_reduction <add>, %85, %cst_54 [1] : vector<64x32xf32> to vector<64xf32>
    %87 = vector.shape_cast %86 : vector<64xf32> to vector<64x1xf32>
    %cst_55 = arith.constant 3.200000e+01 : f32
    %88 = vector.broadcast %cst_55 : f32 to vector<64x1xf32>
    %89 = arith.divf %87, %88 : vector<64x1xf32>
    %90 = vector.broadcast %82 : vector<64x1xf32> to vector<64x32xf32>
    %91 = arith.subf %76, %90 : vector<64x32xf32>
    %cst_56 = arith.constant 9.99999974E-6 : f32
    %92 = vector.broadcast %cst_56 : f32 to vector<64x1xf32>
    %93 = arith.addf %89, %92 : vector<64x1xf32>
    %94 = math.rsqrt %93 : vector<64x1xf32>
    %95 = vector.broadcast %94 : vector<64x1xf32> to vector<64x32xf32>
    %96 = arith.mulf %91, %95 : vector<64x32xf32>
    %97 = vector.broadcast %77 : vector<1x32xf32> to vector<64x32xf32>
    %98 = arith.mulf %96, %97 : vector<64x32xf32>
    %99 = vector.broadcast %78 : vector<1x32xf32> to vector<64x32xf32>
    %100 = arith.addf %98, %99 : vector<64x32xf32>
    %cst_57 = arith.constant 0.000000e+00 : f32
    %101 = vector.broadcast %cst_57 : f32 to vector<64x32xf32>
    %102 = arith.maximumf %100, %101 : vector<64x32xf32>
    %103 = vector.extract_strided_slice %69 {offsets = [0, 32], sizes = [64, 32], strides = [1, 1]} : vector<64x64xf32> to vector<64x32xf32>
    %104 = vector.extract_strided_slice %71 {offsets = [0, 32], sizes = [1, 32], strides = [1, 1]} : vector<1x64xf32> to vector<1x32xf32>
    %105 = vector.extract_strided_slice %73 {offsets = [0, 32], sizes = [1, 32], strides = [1, 1]} : vector<1x64xf32> to vector<1x32xf32>
    %cst_58 = arith.constant dense<0.000000e+00> : vector<64xf32>
    %106 = vector.multi_reduction <add>, %103, %cst_58 [1] : vector<64x32xf32> to vector<64xf32>
    %107 = vector.shape_cast %106 : vector<64xf32> to vector<64x1xf32>
    %cst_59 = arith.constant 3.200000e+01 : f32
    %108 = vector.broadcast %cst_59 : f32 to vector<64x1xf32>
    %109 = arith.divf %107, %108 : vector<64x1xf32>
    %110 = vector.broadcast %109 : vector<64x1xf32> to vector<64x32xf32>
    %111 = arith.subf %103, %110 : vector<64x32xf32>
    %112 = arith.mulf %111, %111 : vector<64x32xf32>
    %cst_60 = arith.constant dense<0.000000e+00> : vector<64xf32>
    %113 = vector.multi_reduction <add>, %112, %cst_60 [1] : vector<64x32xf32> to vector<64xf32>
    %114 = vector.shape_cast %113 : vector<64xf32> to vector<64x1xf32>
    %cst_61 = arith.constant 3.200000e+01 : f32
    %115 = vector.broadcast %cst_61 : f32 to vector<64x1xf32>
    %116 = arith.divf %114, %115 : vector<64x1xf32>
    %117 = vector.broadcast %109 : vector<64x1xf32> to vector<64x32xf32>
    %118 = arith.subf %103, %117 : vector<64x32xf32>
    %cst_62 = arith.constant 9.99999974E-6 : f32
    %119 = vector.broadcast %cst_62 : f32 to vector<64x1xf32>
    %120 = arith.addf %116, %119 : vector<64x1xf32>
    %121 = math.rsqrt %120 : vector<64x1xf32>
    %122 = vector.broadcast %121 : vector<64x1xf32> to vector<64x32xf32>
    %123 = arith.mulf %118, %122 : vector<64x32xf32>
    %124 = vector.broadcast %104 : vector<1x32xf32> to vector<64x32xf32>
    %125 = arith.mulf %123, %124 : vector<64x32xf32>
    %126 = vector.broadcast %105 : vector<1x32xf32> to vector<64x32xf32>
    %127 = arith.addf %125, %126 : vector<64x32xf32>
    %cst_63 = arith.constant 0.000000e+00 : f32
    %128 = vector.broadcast %cst_63 : f32 to vector<64x32xf32>
    %129 = arith.maximumf %127, %128 : vector<64x32xf32>
    %130 = arith.truncf %102 : vector<64x32xf32> to vector<64x32xbf16>
    %c0_64 = arith.constant 0 : index
    %c0_65 = arith.constant 0 : index
    %c0_66 = arith.constant 0 : index
    %131 = vector.load %arg13[%c0_64, %c0_65, %c0_66] : memref<1x32x32xbf16, #tpu.memory_space<vmem>>, vector<1x32x32xbf16>
    %132 = vector.shape_cast %131 : vector<1x32x32xbf16> to vector<32x32xbf16>
    %cst_67 = arith.constant dense<0.000000e+00> : vector<64x32xf32>
    %133 = tpu.matmul %130, %132, %cst_67 {dimension_numbers = #tpu.dot_dimension_numbers<[1], [0], [0], [1], [0, 0, 1, 1], [], []>} : vector<64x32xbf16>, vector<32x32xbf16>, vector<64x32xf32> -> vector<64x32xf32>
    %134 = vector.extract_strided_slice %75 {offsets = [0, 0], sizes = [1, 32], strides = [1, 1]} : vector<1x64xf32> to vector<1x32xf32>
    %135 = vector.broadcast %134 : vector<1x32xf32> to vector<64x32xf32>
    %136 = arith.addf %133, %135 : vector<64x32xf32>
    %137 = arith.truncf %129 : vector<64x32xf32> to vector<64x32xbf16>
    %c0_68 = arith.constant 0 : index
    %c0_69 = arith.constant 0 : index
    %c0_70 = arith.constant 0 : index
    %138 = vector.load %arg14[%c0_68, %c0_69, %c0_70] : memref<1x32x32xbf16, #tpu.memory_space<vmem>>, vector<1x32x32xbf16>
    %139 = vector.shape_cast %138 : vector<1x32x32xbf16> to vector<32x32xbf16>
    %cst_71 = arith.constant dense<0.000000e+00> : vector<64x32xf32>
    %140 = tpu.matmul %137, %139, %cst_71 {dimension_numbers = #tpu.dot_dimension_numbers<[1], [0], [0], [1], [0, 0, 1, 1], [], []>} : vector<64x32xbf16>, vector<32x32xbf16>, vector<64x32xf32> -> vector<64x32xf32>
    %141 = vector.extract_strided_slice %75 {offsets = [0, 32], sizes = [1, 32], strides = [1, 1]} : vector<1x64xf32> to vector<1x32xf32>
    %142 = vector.broadcast %141 : vector<1x32xf32> to vector<64x32xf32>
    %143 = arith.addf %140, %142 : vector<64x32xf32>
    %c0_72 = arith.constant 0 : index
    %c0_73 = arith.constant 0 : index
    %144 = vector.load %arg4[%c0_72, %c0_73] : memref<64x1xf32, #tpu.memory_space<vmem>>, vector<64x1xf32>
    %145 = vector.broadcast %144 : vector<64x1xf32> to vector<64x32xf32>
    %146 = arith.mulf %143, %145 : vector<64x32xf32>
    %147 = vector.shape_cast %49 : vector<16x32xf32> to vector<16x1x32xf32>
    %148 = vector.shape_cast %147 : vector<16x1x32xf32> to vector<16x1x32xf32>
    %149 = vector.broadcast %148 : vector<16x1x32xf32> to vector<16x4x32xf32>
    %150 = vector.shape_cast %149 : vector<16x4x32xf32> to vector<64x32xf32>
    %151 = arith.mulf %150, %136 : vector<64x32xf32>
    %152 = arith.truncf %151 : vector<64x32xf32> to vector<64x32xbf16>
    %c0_74 = arith.constant 0 : index
    %c0_75 = arith.constant 0 : index
    %153 = vector.load %arg6[%c0_74, %c0_75] : memref<32x4xbf16, #tpu.memory_space<vmem>>, vector<32x4xbf16>
    %cst_76 = arith.constant dense<0.000000e+00> : vector<64x4xf32>
    %154 = tpu.matmul %152, %153, %cst_76 {dimension_numbers = #tpu.dot_dimension_numbers<[1], [0], [0], [1], [0, 0, 1, 1], [], []>} : vector<64x32xbf16>, vector<32x4xbf16>, vector<64x4xf32> -> vector<64x4xf32>
    %155 = vector.shape_cast %154 : vector<64x4xf32> to vector<16x4x4xf32>
    %c0_77 = arith.constant 0 : index
    %c0_78 = arith.constant 0 : index
    %156 = vector.load %arg5[%c0_77, %c0_78] : memref<16x4xf32, #tpu.memory_space<vmem>>, vector<16x4xf32>
    %157 = vector.shape_cast %156 : vector<16x4xf32> to vector<16x4x1xf32>
    %158 = vector.broadcast %157 : vector<16x4x1xf32> to vector<16x4x4xf32>
    %159 = arith.addf %155, %158 : vector<16x4x4xf32>
    %cst_79 = arith.constant dense<0xFF800000> : vector<16x4xf32>
    %160 = vector.multi_reduction <maximumf>, %159, %cst_79 [1] : vector<16x4x4xf32> to vector<16x4xf32>
    %161 = vector.shape_cast %160 : vector<16x4xf32> to vector<16x1x4xf32>
    %162 = vector.broadcast %161 : vector<16x1x4xf32> to vector<16x4x4xf32>
    %163 = arith.subf %159, %162 : vector<16x4x4xf32>
    %164 = math.exp %163 : vector<16x4x4xf32>
    %cst_80 = arith.constant dense<0.000000e+00> : vector<16x4xf32>
    %165 = vector.multi_reduction <add>, %164, %cst_80 [1] : vector<16x4x4xf32> to vector<16x4xf32>
    %166 = vector.shape_cast %165 : vector<16x4xf32> to vector<16x1x4xf32>
    %167 = tpu.reciprocal %166 {approx = true} : vector<16x1x4xf32> -> vector<16x1x4xf32>
    %168 = vector.broadcast %167 : vector<16x1x4xf32> to vector<16x4x4xf32>
    %169 = arith.mulf %164, %168 : vector<16x4x4xf32>
    %170 = vector.shape_cast %169 : vector<16x4x4xf32> to vector<64x4xf32>
    %171 = arith.truncf %170 : vector<64x4xf32> to vector<64x4xbf16>
    %c0_81 = arith.constant 0 : index
    %c0_82 = arith.constant 0 : index
    %172 = vector.load %arg7[%c0_81, %c0_82] : memref<4x32xbf16, #tpu.memory_space<vmem>>, vector<4x32xbf16>
    %cst_83 = arith.constant dense<0.000000e+00> : vector<64x32xf32>
    %173 = tpu.matmul %171, %172, %cst_83 {dimension_numbers = #tpu.dot_dimension_numbers<[1], [0], [0], [1], [0, 0, 1, 1], [], []>} : vector<64x4xbf16>, vector<4x32xbf16>, vector<64x32xf32> -> vector<64x32xf32>
    %174 = arith.mulf %173, %146 : vector<64x32xf32>
    %175 = vector.shape_cast %174 : vector<64x32xf32> to vector<16x4x32xf32>
    %cst_84 = arith.constant dense<0.000000e+00> : vector<16x32xf32>
    %176 = vector.multi_reduction <add>, %175, %cst_84 [1] : vector<16x4x32xf32> to vector<16x32xf32>
    %177 = arith.addf %3, %176 : vector<16x32xf32>
    %c0_85 = arith.constant 0 : index
    %c0_86 = arith.constant 0 : index
    %178 = vector.load %arg23[%c0_85, %c0_86] : memref<16x32xf32, #tpu.memory_space<vmem>>, vector<16x32xf32>
    tpu.vector_store %arg23[%c0_85, %c0_86], %177 {strides = array<i32>} : memref<16x32xf32, #tpu.memory_space<vmem>>, vector<16x32xf32>,
    %c1_i32 = arith.constant 1 : i32
    %179 = arith.cmpi eq, %arg0, %c1_i32 : i32
    %180 = arith.extui %179 : i1 to i32
    %c0_i32_87 = arith.constant 0 : i32
    %181 = arith.cmpi ne, %180, %c0_i32_87 : i32
    scf.if %181 {
      %c0_88 = arith.constant 0 : index
      %c0_89 = arith.constant 0 : index
      %182 = vector.load %arg23[%c0_88, %c0_89] : memref<16x32xf32, #tpu.memory_space<vmem>>, vector<16x32xf32>
      %c0_90 = arith.constant 0 : index
      %c0_91 = arith.constant 0 : index
      %183 = vector.load %arg22[%c0_90, %c0_91] : memref<16x32xf32, #tpu.memory_space<vmem>>, vector<16x32xf32>
      tpu.vector_store %arg22[%c0_90, %c0_91], %182 {strides = array<i32>} : memref<16x32xf32, #tpu.memory_space<vmem>>, vector<16x32xf32>,
    } else {
    }
    return
  }
  func.func @transform_0(%arg0: i32) -> (i32, i32) {
    %c0_i32 = arith.constant 0 : i32
    %c0_i32_0 = arith.constant 0 : i32
    %c0_i32_1 = arith.constant 0 : i32
    return %c0_i32, %c0_i32_0 : i32, i32
  }
  func.func @transform_1(%arg0: i32) -> (i32, i32) {
    %c0_i32 = arith.constant 0 : i32
    %c0_i32_0 = arith.constant 0 : i32
    %c0_i32_1 = arith.constant 0 : i32
    return %c0_i32, %c0_i32_0 : i32, i32
  }
  func.func @transform_2(%arg0: i32) -> (i32, i32) {
    %c0_i32 = arith.constant 0 : i32
    %c0_i32_0 = arith.constant 0 : i32
    %c0_i32_1 = arith.constant 0 : i32
    return %c0_i32, %c0_i32_0 : i32, i32
  }
  func.func @transform_3(%arg0: i32) -> (i32, i32) {
    %c0_i32 = arith.constant 0 : i32
    %c0_i32_0 = arith.constant 0 : i32
    %c0_i32_1 = arith.constant 0 : i32
    return %c0_i32, %c0_i32_0 : i32, i32
  }
  func.func @transform_4(%arg0: i32) -> (i32, i32) {
    %c0_i32 = arith.constant 0 : i32
    %c0_i32_0 = arith.constant 0 : i32
    %c0_i32_1 = arith.constant 0 : i32
    return %c0_i32, %c0_i32_0 : i32, i32
  }
  func.func @transform_5(%arg0: i32) -> (i32, i32) {
    %c0_i32 = arith.constant 0 : i32
    %c0_i32_0 = arith.constant 0 : i32
    %c0_i32_1 = arith.constant 0 : i32
    return %c0_i32, %c0_i32_0 : i32, i32
  }
  func.func @transform_6(%arg0: i32) -> (i32, i32) {
    %c0_i32 = arith.constant 0 : i32
    %c0_i32_0 = arith.constant 0 : i32
    %c0_i32_1 = arith.constant 0 : i32
    return %c0_i32, %c0_i32_0 : i32, i32
  }
  func.func @transform_7(%arg0: i32) -> (i32, i32, i32) {
    %c0_i32 = arith.constant 0 : i32
    %c0_i32_0 = arith.constant 0 : i32
    %c0_i32_1 = arith.constant 0 : i32
    return %arg0, %c0_i32, %c0_i32_0 : i32, i32, i32
  }
  func.func @transform_8(%arg0: i32) -> (i32, i32, i32) {
    %c0_i32 = arith.constant 0 : i32
    %c0_i32_0 = arith.constant 0 : i32
    %c0_i32_1 = arith.constant 0 : i32
    return %arg0, %c0_i32, %c0_i32_0 : i32, i32, i32
  }
  func.func @transform_9(%arg0: i32) -> (i32, i32, i32) {
    %c0_i32 = arith.constant 0 : i32
    %c0_i32_0 = arith.constant 0 : i32
    %c0_i32_1 = arith.constant 0 : i32
    return %arg0, %c0_i32, %c0_i32_0 : i32, i32, i32
  }
  func.func @transform_10(%arg0: i32) -> (i32, i32, i32) {
    %c0_i32 = arith.constant 0 : i32
    %c0_i32_0 = arith.constant 0 : i32
    %c0_i32_1 = arith.constant 0 : i32
    return %arg0, %c0_i32, %c0_i32_0 : i32, i32, i32
  }
  func.func @transform_11(%arg0: i32) -> (i32, i32, i32) {
    %c0_i32 = arith.constant 0 : i32
    %c0_i32_0 = arith.constant 0 : i32
    %c0_i32_1 = arith.constant 0 : i32
    return %arg0, %c0_i32, %c0_i32_0 : i32, i32, i32
  }
  func.func @transform_12(%arg0: i32) -> (i32, i32, i32) {
    %c0_i32 = arith.constant 0 : i32
    %c0_i32_0 = arith.constant 0 : i32
    %c0_i32_1 = arith.constant 0 : i32
    return %arg0, %c0_i32, %c0_i32_0 : i32, i32, i32
  }
  func.func @transform_13(%arg0: i32) -> (i32, i32, i32) {
    %c0_i32 = arith.constant 0 : i32
    %c0_i32_0 = arith.constant 0 : i32
    %c0_i32_1 = arith.constant 0 : i32
    return %arg0, %c0_i32, %c0_i32_0 : i32, i32, i32
  }
  func.func @transform_14(%arg0: i32) -> (i32, i32, i32) {
    %c0_i32 = arith.constant 0 : i32
    %c0_i32_0 = arith.constant 0 : i32
    %c0_i32_1 = arith.constant 0 : i32
    return %arg0, %c0_i32, %c0_i32_0 : i32, i32, i32
  }
  func.func @transform_15(%arg0: i32) -> (i32, i32, i32) {
    %c0_i32 = arith.constant 0 : i32
    %c0_i32_0 = arith.constant 0 : i32
    %c0_i32_1 = arith.constant 0 : i32
    return %arg0, %c0_i32, %c0_i32_0 : i32, i32, i32
  }
  func.func @transform_16(%arg0: i32) -> (i32, i32, i32) {
    %c0_i32 = arith.constant 0 : i32
    %c0_i32_0 = arith.constant 0 : i32
    %c0_i32_1 = arith.constant 0 : i32
    return %arg0, %c0_i32, %c0_i32_0 : i32, i32, i32
  }
  func.func @transform_17(%arg0: i32) -> (i32, i32, i32) {
    %c0_i32 = arith.constant 0 : i32
    %c0_i32_0 = arith.constant 0 : i32
    %c0_i32_1 = arith.constant 0 : i32
    return %arg0, %c0_i32, %c0_i32_0 : i32, i32, i32
  }
  func.func @transform_18(%arg0: i32) -> (i32, i32, i32) {
    %c0_i32 = arith.constant 0 : i32
    %c0_i32_0 = arith.constant 0 : i32
    %c0_i32_1 = arith.constant 0 : i32
    return %arg0, %c0_i32, %c0_i32_0 : i32, i32, i32
  }
  func.func @transform_19(%arg0: i32) -> (i32, i32, i32) {
    %c0_i32 = arith.constant 0 : i32
    %c0_i32_0 = arith.constant 0 : i32
    %c0_i32_1 = arith.constant 0 : i32
    return %arg0, %c0_i32, %c0_i32_0 : i32, i32, i32
  }
  func.func @transform_20(%arg0: i32) -> (i32, i32, i32) {
    %c0_i32 = arith.constant 0 : i32
    %c0_i32_0 = arith.constant 0 : i32
    %c0_i32_1 = arith.constant 0 : i32
    return %arg0, %c0_i32, %c0_i32_0 : i32, i32, i32
  }
  func.func @transform_21(%arg0: i32) -> (i32, i32) {
    %c0_i32 = arith.constant 0 : i32
    %c0_i32_0 = arith.constant 0 : i32
    %c0_i32_1 = arith.constant 0 : i32
    return %c0_i32, %c0_i32_0 : i32, i32
  }
}

module attributes {stable_mosaic.version = 11 : i64} {
  func.func @eps_kernel(%arg0: i32, %arg1: memref<16x32xf32, #tpu.memory_space<vmem>>, %arg2: memref<32x128xbf16, #tpu.memory_space<vmem>>, %arg3: memref<1x128xf32, #tpu.memory_space<vmem>>, %arg4: memref<128x64xbf16, #tpu.memory_space<vmem>>, %arg5: memref<1x64xf32, #tpu.memory_space<vmem>>, %arg6: memref<64x128xbf16, #tpu.memory_space<vmem>>, %arg7: memref<1x128xf32, #tpu.memory_space<vmem>>, %arg8: memref<16x128xf32, #tpu.memory_space<vmem>>) attributes {dimension_semantics = [#tpu.dimension_semantics<parallel>], iteration_bounds = array<i64: 1>, scalar_prefetch = 0 : i64, scratch_operands = 0 : i64, tpu.core_type = #tpu.core_type<tc>, window_params = [{transform_indices = @transform_0, window_bounds = array<i64: 16, 32>}, {pipeline_mode = #tpu.pipeline_mode<synchronous>, transform_indices = @transform_1, window_bounds = array<i64: 32, 128>}, {pipeline_mode = #tpu.pipeline_mode<synchronous>, transform_indices = @transform_2, window_bounds = array<i64: 1, 128>}, {pipeline_mode = #tpu.pipeline_mode<synchronous>, transform_indices = @transform_3, window_bounds = array<i64: 128, 64>}, {pipeline_mode = #tpu.pipeline_mode<synchronous>, transform_indices = @transform_4, window_bounds = array<i64: 1, 64>}, {pipeline_mode = #tpu.pipeline_mode<synchronous>, transform_indices = @transform_5, window_bounds = array<i64: 64, 128>}, {pipeline_mode = #tpu.pipeline_mode<synchronous>, transform_indices = @transform_6, window_bounds = array<i64: 1, 128>}, {transform_indices = @transform_7, window_bounds = array<i64: 16, 128>}]} {
    %c0 = arith.constant 0 : index
    %c0_0 = arith.constant 0 : index
    %0 = vector.load %arg1[%c0, %c0_0] : memref<16x32xf32, #tpu.memory_space<vmem>>, vector<16x32xf32>
    %1 = arith.truncf %0 : vector<16x32xf32> to vector<16x32xbf16>
    %c0_1 = arith.constant 0 : index
    %c0_2 = arith.constant 0 : index
    %2 = vector.load %arg2[%c0_1, %c0_2] : memref<32x128xbf16, #tpu.memory_space<vmem>>, vector<32x128xbf16>
    %cst = arith.constant dense<0.000000e+00> : vector<16x128xf32>
    %3 = tpu.matmul %1, %2, %cst {dimension_numbers = #tpu.dot_dimension_numbers<[1], [0], [0], [1], [0, 0, 1, 1], [], []>} : vector<16x32xbf16>, vector<32x128xbf16>, vector<16x128xf32> -> vector<16x128xf32>
    %c0_3 = arith.constant 0 : index
    %c0_4 = arith.constant 0 : index
    %4 = vector.load %arg3[%c0_3, %c0_4] : memref<1x128xf32, #tpu.memory_space<vmem>>, vector<1x128xf32>
    %5 = vector.broadcast %4 : vector<1x128xf32> to vector<16x128xf32>
    %6 = arith.addf %3, %5 : vector<16x128xf32>
    %cst_5 = arith.constant 0.000000e+00 : f32
    %7 = vector.broadcast %cst_5 : f32 to vector<16x128xf32>
    %8 = arith.maximumf %6, %7 : vector<16x128xf32>
    %9 = arith.truncf %8 : vector<16x128xf32> to vector<16x128xbf16>
    %c0_6 = arith.constant 0 : index
    %c0_7 = arith.constant 0 : index
    %10 = vector.load %arg4[%c0_6, %c0_7] : memref<128x64xbf16, #tpu.memory_space<vmem>>, vector<128x64xbf16>
    %cst_8 = arith.constant dense<0.000000e+00> : vector<16x64xf32>
    %11 = tpu.matmul %9, %10, %cst_8 {dimension_numbers = #tpu.dot_dimension_numbers<[1], [0], [0], [1], [0, 0, 1, 1], [], []>} : vector<16x128xbf16>, vector<128x64xbf16>, vector<16x64xf32> -> vector<16x64xf32>
    %c0_9 = arith.constant 0 : index
    %c0_10 = arith.constant 0 : index
    %12 = vector.load %arg5[%c0_9, %c0_10] : memref<1x64xf32, #tpu.memory_space<vmem>>, vector<1x64xf32>
    %13 = vector.broadcast %12 : vector<1x64xf32> to vector<16x64xf32>
    %14 = arith.addf %11, %13 : vector<16x64xf32>
    %cst_11 = arith.constant 0.000000e+00 : f32
    %15 = vector.broadcast %cst_11 : f32 to vector<16x64xf32>
    %16 = arith.maximumf %14, %15 : vector<16x64xf32>
    %17 = arith.truncf %16 : vector<16x64xf32> to vector<16x64xbf16>
    %c0_12 = arith.constant 0 : index
    %c0_13 = arith.constant 0 : index
    %18 = vector.load %arg6[%c0_12, %c0_13] : memref<64x128xbf16, #tpu.memory_space<vmem>>, vector<64x128xbf16>
    %cst_14 = arith.constant dense<0.000000e+00> : vector<16x128xf32>
    %19 = tpu.matmul %17, %18, %cst_14 {dimension_numbers = #tpu.dot_dimension_numbers<[1], [0], [0], [1], [0, 0, 1, 1], [], []>} : vector<16x64xbf16>, vector<64x128xbf16>, vector<16x128xf32> -> vector<16x128xf32>
    %c0_15 = arith.constant 0 : index
    %c0_16 = arith.constant 0 : index
    %20 = vector.load %arg7[%c0_15, %c0_16] : memref<1x128xf32, #tpu.memory_space<vmem>>, vector<1x128xf32>
    %21 = vector.broadcast %20 : vector<1x128xf32> to vector<16x128xf32>
    %22 = arith.addf %19, %21 : vector<16x128xf32>
    %c0_17 = arith.constant 0 : index
    %c0_18 = arith.constant 0 : index
    %23 = vector.load %arg8[%c0_17, %c0_18] : memref<16x128xf32, #tpu.memory_space<vmem>>, vector<16x128xf32>
    tpu.vector_store %arg8[%c0_17, %c0_18], %22 {strides = array<i32>} : memref<16x128xf32, #tpu.memory_space<vmem>>, vector<16x128xf32>,
    return
  }
  func.func @transform_0(%arg0: i32) -> (i32, i32) {
    %c0_i32 = arith.constant 0 : i32
    %c0_i32_0 = arith.constant 0 : i32
    return %arg0, %c0_i32 : i32, i32
  }
  func.func @transform_1(%arg0: i32) -> (i32, i32) {
    %c0_i32 = arith.constant 0 : i32
    %c0_i32_0 = arith.constant 0 : i32
    %c0_i32_1 = arith.constant 0 : i32
    return %c0_i32, %c0_i32_0 : i32, i32
  }
  func.func @transform_2(%arg0: i32) -> (i32, i32) {
    %c0_i32 = arith.constant 0 : i32
    %c0_i32_0 = arith.constant 0 : i32
    %c0_i32_1 = arith.constant 0 : i32
    return %c0_i32, %c0_i32_0 : i32, i32
  }
  func.func @transform_3(%arg0: i32) -> (i32, i32) {
    %c0_i32 = arith.constant 0 : i32
    %c0_i32_0 = arith.constant 0 : i32
    %c0_i32_1 = arith.constant 0 : i32
    return %c0_i32, %c0_i32_0 : i32, i32
  }
  func.func @transform_4(%arg0: i32) -> (i32, i32) {
    %c0_i32 = arith.constant 0 : i32
    %c0_i32_0 = arith.constant 0 : i32
    %c0_i32_1 = arith.constant 0 : i32
    return %c0_i32, %c0_i32_0 : i32, i32
  }
  func.func @transform_5(%arg0: i32) -> (i32, i32) {
    %c0_i32 = arith.constant 0 : i32
    %c0_i32_0 = arith.constant 0 : i32
    %c0_i32_1 = arith.constant 0 : i32
    return %c0_i32, %c0_i32_0 : i32, i32
  }
  func.func @transform_6(%arg0: i32) -> (i32, i32) {
    %c0_i32 = arith.constant 0 : i32
    %c0_i32_0 = arith.constant 0 : i32
    %c0_i32_1 = arith.constant 0 : i32
    return %c0_i32, %c0_i32_0 : i32, i32
  }
  func.func @transform_7(%arg0: i32) -> (i32, i32) {
    %c0_i32 = arith.constant 0 : i32
    %c0_i32_0 = arith.constant 0 : i32
    return %arg0, %c0_i32 : i32, i32
  }
}

</mosaic_0001>

<llo_original>
// kernel: ipa_transformer_forward.3
$region0: #{ipa_transformer_forward.3}
  #allocation0 [shape = 'u32[]', space=smem, size = 0x4, offset = 0x4, fixed_abs, tag = 'smem constant byte address 0x4 - core index']
  #allocation1 [shape = 'u32[144,128]{1,0:T(1,128)}', space=vmem, size = 0x12000, scoped, tag = 'internal scratch']
  %s0 = inlined_call_operand.vmem [shape: f32[16,32], index: 0, kind: input, shape index: {}]
  %s1 = inlined_call_operand.vmem [shape: bf16[32,128], index: 1, kind: input, shape index: {}]
  %s2 = inlined_call_operand.vmem [shape: f32[1,128], index: 2, kind: input, shape index: {}, may-alias: {2,6}]
  %s3 = inlined_call_operand.vmem [shape: bf16[128,64], index: 3, kind: input, shape index: {}]
  %s4 = inlined_call_operand.vmem [shape: f32[1,64], index: 4, kind: input, shape index: {}]
  %s5 = inlined_call_operand.vmem [shape: bf16[64,128], index: 5, kind: input, shape index: {}]
  %s6 = inlined_call_operand.vmem [shape: f32[1,128], index: 6, kind: input, shape index: {}, may-alias: {2,6}]
  %s7 = inlined_call_operand.vmem [shape: f32[16,128], index: 7, kind: output, shape index: {}]
  %s8 = sld [smem:[#allocation0]]
  $region38: #{ipa_transformer_forward.3} parent=0
    _
  %s10 = ssub.s32 1, %s8
  %s11 = scalar_select 0, %s10, %s8
  // Predicated region
  $region2: #{ipa_transformer_forward.3} parent=0 // pred_check
    _
  $region3: #{ipa_transformer_forward.3} parent=0 // pred_check_branch
    %13 = sbr.rel (0) target = $region5
  $region4: #{ipa_transformer_forward.3} parent=0 // pred_region
    _
  $region5: #{ipa_transformer_forward.3} parent=0 // pred_fallthru
    _
  // Predicated region
  $region6: #{ipa_transformer_forward.3} parent=0 // pred_check
    _
  $region7: #{ipa_transformer_forward.3} parent=0 // pred_check_branch
    %15 = sbr.rel (0) target = $region9
  $region8: #{ipa_transformer_forward.3} parent=0 // pred_region
    _
  $region9: #{ipa_transformer_forward.3} parent=0 // pred_fallthru
    _
  // Predicated region
  $region10: #{ipa_transformer_forward.3} parent=0 // pred_check
    _
  $region11: #{ipa_transformer_forward.3} parent=0 // pred_check_branch
    %17 = sbr.rel (0) target = $region13
  $region12: #{ipa_transformer_forward.3} parent=0 // pred_region
    _
  $region13: #{ipa_transformer_forward.3} parent=0 // pred_fallthru
    _
  // Predicated region
  $region14: #{ipa_transformer_forward.3} parent=0 // pred_check
    _
  $region15: #{ipa_transformer_forward.3} parent=0 // pred_check_branch
    %19 = sbr.rel (0) target = $region17
  $region16: #{ipa_transformer_forward.3} parent=0 // pred_region
    _
  $region17: #{ipa_transformer_forward.3} parent=0 // pred_fallthru
    _
  // Predicated region
  $region18: #{ipa_transformer_forward.3} parent=0 // pred_check
    _
  $region19: #{ipa_transformer_forward.3} parent=0 // pred_check_branch
    %21 = sbr.rel (0) target = $region21
  $region20: #{ipa_transformer_forward.3} parent=0 // pred_region
    _
  $region21: #{ipa_transformer_forward.3} parent=0 // pred_fallthru
    _
  // Predicated region
  $region22: #{ipa_transformer_forward.3} parent=0 // pred_check
    _
  $region23: #{ipa_transformer_forward.3} parent=0 // pred_check_branch
    %23 = sbr.rel (0) target = $region25
  $region24: #{ipa_transformer_forward.3} parent=0 // pred_region
    _
  $region25: #{ipa_transformer_forward.3} parent=0 // pred_fallthru
    _
  // Predicated region
  $region26: #{ipa_transformer_forward.3} parent=0 // pred_check
    _
  $region27: #{ipa_transformer_forward.3} parent=0 // pred_check_branch
    %25 = sbr.rel (0) target = $region29
  $region28: #{ipa_transformer_forward.3} parent=0 // pred_region
    _
  $region29: #{ipa_transformer_forward.3} parent=0 // pred_fallthru
    _
  %v27 = vld [vmem:[%s0] sm:$0xff]
  %v28 = vld [vmem:[%s0 + $0x8] sm:$0xff]
  %v29 = vpack.c.bf16 %v28, %v27
  %v30 = vld [vmem:[%s1] sm:$0xf]
  %v31 = vld [vmem:[%s1 + $0x4] sm:$0xf]
  %v32 = vld [vmem:[%s1 + $0x8] sm:$0xf]
  %v33 = vld [vmem:[%s1 + $0xc] sm:$0xf]
  %v34 = vld [vmem:[%s2] sm:$0x1]
  %v36 = vlaneseq
  %v37 = vshrl.u32 %v36, 7
  %v38 = vsub.s32 0, %v37
  %v39 = vrot.slane %v34, %v38
  %v45 = vunpack.c.l.b16 %v30
  %v46 = vunpack.c.l.b16 %v31
  %v47 = vunpack.c.l.b16 %v32
  %v48 = vunpack.c.l.b16 %v33
  %v49 = vpack.c.b16 %v46, %v45
  %v50 = vpack.c.b16 %v48, %v47
  %vm53 = vcmask 261120
  %v55 = vsel %vm53, %v29, 0
  %57 = vmatprep.subr.bf16.mxu0 0
  %58 = vmatpush1.bf16.msra.mxu0 %v49
  %59 = vmatprep.subr.bf16.mxu0 0
  %60 = vmatpush1.bf16.msra.mxu0 %v50
  %61 = vmatprep.subr.bf16.mxu0 0
  %62 = vmatpush1.bf16.msra.mxu0 0
  %63 = vmatprep.subr.bf16.mxu0 0
  %64 = vmatpush1.bf16.msra.mxu0 0
  %65 = vmatprep.subr.bf16.mxu0 0
  %66 = vmatpush1.bf16.msra.mxu0 0
  %67 = vmatprep.subr.bf16.mxu0 0
  %68 = vmatpush1.bf16.msra.mxu0 0
  %69 = vmatprep.subr.bf16.mxu0 0
  %70 = vmatpush1.bf16.msra.mxu0 0
  %71 = vmatprep.subr.bf16.mxu0 0
  %72 = vmatpush1.bf16.msra.mxu0 0
  %73 = vmatprep.subr.bf16.mxu0 0
  %74 = vmatpush1.bf16.msra.mxu0 0
  %75 = vmatprep.subr.bf16.mxu0 0
  %76 = vmatpush1.bf16.msra.mxu0 0
  %77 = vmatprep.subr.bf16.mxu0 0
  %78 = vmatpush1.bf16.msra.mxu0 0
  %79 = vmatprep.subr.bf16.mxu0 0
  %80 = vmatpush1.bf16.msra.mxu0 0
  %81 = vmatprep.subr.bf16.mxu0 0
  %82 = vmatpush1.bf16.msra.mxu0 0
  %83 = vmatprep.subr.bf16.mxu0 0
  %84 = vmatpush1.bf16.msra.mxu0 0
  %85 = vmatprep.subr.bf16.mxu0 0
  %86 = vmatpush1.bf16.msra.mxu0 0
  %87 = vmatprep.subr.bf16.mxu0 0
  %88 = vmatpush1.bf16.msra.mxu0 0
  %89 = vmatprep.mubr.bf16.mxu0 0
  %90 = vmatmul.mubr.bf16.gmra.mrb[0].mxu0 %v55
  %v91 = vpop.f32.mrb[0].mxu0
  %v92 = vadd.f32 %v39, %v91
  %v93 = vpop.f32.mrb[0].mxu0
  %v94 = vpop.f32.mrb[0].mxu0
  %v95 = vadd.f32 %v39, %v94
  %v96 = vpop.f32.mrb[0].mxu0
  %97 = vdwg.mxu0
  %v98 = vmax.f32 %v92, 0.0
  %v99 = vmax.f32 %v95, 0.0
  %v100 = vpack.c.bf16 %v99, %v98
  %v101 = vld [vmem:[%s3] sm:$0xf]
  %v102 = vld [vmem:[%s3 + $0x4] sm:$0xf]
  %v103 = vld [vmem:[%s3 + $0x8] sm:$0xf]
  %v104 = vld [vmem:[%s3 + $0xc] sm:$0xf]
  %v105 = vld [vmem:[%s3 + $0x10] sm:$0xf]
  %v106 = vld [vmem:[%s3 + $0x14] sm:$0xf]
  %v107 = vld [vmem:[%s3 + $0x18] sm:$0xf]
  %v108 = vld [vmem:[%s3 + $0x1c] sm:$0xf]
  %v109 = vld [vmem:[%s3 + $0x20] sm:$0xf]
  %v110 = vld [vmem:[%s3 + $0x24] sm:$0xf]
  %v111 = vld [vmem:[%s3 + $0x28] sm:$0xf]
  %v112 = vld [vmem:[%s3 + $0x2c] sm:$0xf]
  %v113 = vld [vmem:[%s3 + $0x30] sm:$0xf]
  %v114 = vld [vmem:[%s3 + $0x34] sm:$0xf]
  %v115 = vld [vmem:[%s3 + $0x38] sm:$0xf]
  %v116 = vld [vmem:[%s3 + $0x3c] sm:$0xf]
  %v117 = vld [vmem:[%s4] sm:$0x1]
  %v119 = vlaneseq
  %v120 = vshrl.u32 %v119, 7
  %v121 = vsub.s32 0, %v120
  %v122 = vrot.slane %v117, %v121
  %v140 = vunpack.c.l.b16 %v101
  %v141 = vunpack.c.l.b16 %v102
  %v142 = vunpack.c.l.b16 %v103
  %v143 = vunpack.c.l.b16 %v104
  %v144 = vunpack.c.l.b16 %v105
  %v145 = vunpack.c.l.b16 %v106
  %v146 = vunpack.c.l.b16 %v107
  %v147 = vunpack.c.l.b16 %v108
  %v148 = vunpack.c.l.b16 %v109
  %v149 = vunpack.c.l.b16 %v110
  %v150 = vunpack.c.l.b16 %v111
  %v151 = vunpack.c.l.b16 %v112
  %v152 = vunpack.c.l.b16 %v113
  %v153 = vunpack.c.l.b16 %v114
  %v154 = vunpack.c.l.b16 %v115
  %v155 = vunpack.c.l.b16 %v116
  %v156 = vpack.c.b16 %v141, %v140
  %v157 = vpack.c.b16 %v143, %v142
  %v158 = vpack.c.b16 %v145, %v144
  %v159 = vpack.c.b16 %v147, %v146
  %v160 = vpack.c.b16 %v149, %v148
  %v161 = vpack.c.b16 %v151, %v150
  %v162 = vpack.c.b16 %v153, %v152
  %v163 = vpack.c.b16 %v155, %v154
  %172 = vmatprep.subr.bf16.mxu0 0
  %173 = vmatpush1.bf16.msra.mxu0 %v156
  %174 = vmatprep.subr.bf16.mxu0 0
  %175 = vmatpush1.bf16.msra.mxu0 %v157
  %176 = vmatprep.subr.bf16.mxu0 0
  %177 = vmatpush1.bf16.msra.mxu0 %v158
  %178 = vmatprep.subr.bf16.mxu0 0
  %179 = vmatpush1.bf16.msra.mxu0 %v159
  %180 = vmatprep.subr.bf16.mxu0 0
  %181 = vmatpush1.bf16.msra.mxu0 %v160
  %182 = vmatprep.subr.bf16.mxu0 0
  %183 = vmatpush1.bf16.msra.mxu0 %v161
  %184 = vmatprep.subr.bf16.mxu0 0
  %185 = vmatpush1.bf16.msra.mxu0 %v162
  %186 = vmatprep.subr.bf16.mxu0 0
  %187 = vmatpush1.bf16.msra.mxu0 %v163
  %188 = vmatprep.subr.bf16.mxu0 0
  %189 = vmatpush1.bf16.msra.mxu0 0
  %190 = vmatprep.subr.bf16.mxu0 0
  %191 = vmatpush1.bf16.msra.mxu0 0
  %192 = vmatprep.subr.bf16.mxu0 0
  %193 = vmatpush1.bf16.msra.mxu0 0
  %194 = vmatprep.subr.bf16.mxu0 0
  %195 = vmatpush1.bf16.msra.mxu0 0
  %196 = vmatprep.subr.bf16.mxu0 0
  %197 = vmatpush1.bf16.msra.mxu0 0
  %198 = vmatprep.subr.bf16.mxu0 0
  %199 = vmatpush1.bf16.msra.mxu0 0
  %200 = vmatprep.subr.bf16.mxu0 0
  %201 = vmatpush1.bf16.msra.mxu0 0
  %202 = vmatprep.subr.bf16.mxu0 0
  %203 = vmatpush1.bf16.msra.mxu0 0
  %204 = vmatprep.mubr.bf16.mxu0 0
  %205 = vmatmul.mubr.bf16.gmra.mrb[0].mxu0 %v100
  %v206 = vpop.f32.mrb[0].mxu0
  %v207 = vadd.f32 %v122, %v206
  %v208 = vpop.f32.mrb[0].mxu0
  %v209 = vpop.f32.mrb[0].mxu0
  %v210 = vadd.f32 %v122, %v209
  %v211 = vpop.f32.mrb[0].mxu0
  %212 = vdwg.mxu0
  %v213 = vmax.f32 %v207, 0.0
  %v214 = vmax.f32 %v210, 0.0
  %v215 = vpack.c.bf16 %v214, %v213
  %v216 = vld [vmem:[%s5] sm:$0xf]
  %v217 = vld [vmem:[%s5 + $0x4] sm:$0xf]
  %v218 = vld [vmem:[%s5 + $0x8] sm:$0xf]
  %v219 = vld [vmem:[%s5 + $0xc] sm:$0xf]
  %v220 = vld [vmem:[%s5 + $0x10] sm:$0xf]
  %v221 = vld [vmem:[%s5 + $0x14] sm:$0xf]
  %v222 = vld [vmem:[%s5 + $0x18] sm:$0xf]
  %v223 = vld [vmem:[%s5 + $0x1c] sm:$0xf]
  %v224 = vld [vmem:[%s6] sm:$0x1]
  %v226 = vlaneseq
  %v227 = vshrl.u32 %v226, 7
  %v228 = vsub.s32 0, %v227
  %v229 = vrot.slane %v224, %v228
  %v239 = vunpack.c.l.b16 %v216
  %v240 = vunpack.c.l.b16 %v217
  %v241 = vunpack.c.l.b16 %v218
  %v242 = vunpack.c.l.b16 %v219
  %v243 = vunpack.c.l.b16 %v220
  %v244 = vunpack.c.l.b16 %v221
  %v245 = vunpack.c.l.b16 %v222
  %v246 = vunpack.c.l.b16 %v223
  %v247 = vpack.c.b16 %v240, %v239
  %v248 = vpack.c.b16 %v242, %v241
  %v249 = vpack.c.b16 %v244, %v243
  %v250 = vpack.c.b16 %v246, %v245
  %vm255 = vcmask 523264
  %v257 = vsel %vm255, %v215, 0
  %259 = vmatprep.subr.bf16.mxu0 0
  %260 = vmatpush1.bf16.msra.mxu0 %v247
  %261 = vmatprep.subr.bf16.mxu0 0
  %262 = vmatpush1.bf16.msra.mxu0 %v248
  %263 = vmatprep.subr.bf16.mxu0 0
  %264 = vmatpush1.bf16.msra.mxu0 %v249
  %265 = vmatprep.subr.bf16.mxu0 0
  %266 = vmatpush1.bf16.msra.mxu0 %v250
  %267 = vmatprep.subr.bf16.mxu0 0
  %268 = vmatpush1.bf16.msra.mxu0 0
  %269 = vmatprep.subr.bf16.mxu0 0
  %270 = vmatpush1.bf16.msra.mxu0 0
  %271 = vmatprep.subr.bf16.mxu0 0
  %272 = vmatpush1.bf16.msra.mxu0 0
  %273 = vmatprep.subr.bf16.mxu0 0
  %274 = vmatpush1.bf16.msra.mxu0 0
  %275 = vmatprep.subr.bf16.mxu0 0
  %276 = vmatpush1.bf16.msra.mxu0 0
  %277 = vmatprep.subr.bf16.mxu0 0
  %278 = vmatpush1.bf16.msra.mxu0 0
  %279 = vmatprep.subr.bf16.mxu0 0
  %280 = vmatpush1.bf16.msra.mxu0 0
  %281 = vmatprep.subr.bf16.mxu0 0
  %282 = vmatpush1.bf16.msra.mxu0 0
  %283 = vmatprep.subr.bf16.mxu0 0
  %284 = vmatpush1.bf16.msra.mxu0 0
  %285 = vmatprep.subr.bf16.mxu0 0
  %286 = vmatpush1.bf16.msra.mxu0 0
  %287 = vmatprep.subr.bf16.mxu0 0
  %288 = vmatpush1.bf16.msra.mxu0 0
  %289 = vmatprep.subr.bf16.mxu0 0
  %290 = vmatpush1.bf16.msra.mxu0 0
  %291 = vmatprep.mubr.bf16.mxu0 0
  %292 = vmatmul.mubr.bf16.gmra.mrb[0].mxu0 %v257
  %v293 = vpop.f32.mrb[0].mxu0
  %v294 = vadd.f32 %v229, %v293
  %v295 = vpop.f32.mrb[0].mxu0
  %v296 = vpop.f32.mrb[0].mxu0
  %v297 = vadd.f32 %v229, %v296
  %v298 = vpop.f32.mrb[0].mxu0
  %299 = vdwg.mxu0
  %300 = vst [vmem:[%s7] sm:$0xff] %v294
  %301 = vst [vmem:[%s7 + $0x8] sm:$0xff] %v297
  // Predicated region
  $region30: #{ipa_transformer_forward.3} parent=0 // pred_check
    _
  $region31: #{ipa_transformer_forward.3} parent=0 // pred_check_branch
    %303 = sbr.rel (0) target = $region33
  $region32: #{ipa_transformer_forward.3} parent=0 // pred_region
    _
  $region33: #{ipa_transformer_forward.3} parent=0 // pred_fallthru
    _
  // Predicated region
  $region34: #{ipa_transformer_forward.3} parent=0 // pred_check
    _
  $region35: #{ipa_transformer_forward.3} parent=0 // pred_check_branch
    %305 = sbr.rel (0) target = $region37
  $region36: #{ipa_transformer_forward.3} parent=0 // pred_region
    _
  $region37: #{ipa_transformer_forward.3} parent=0 // pred_fallthru
    _

// kernel: ipa_transformer_forward.2
$region0: #{ipa_transformer_forward.2}
  #allocation0 [shape = 'u32[]', space=smem, size = 0x4, offset = 0x4, fixed_abs, tag = 'smem constant byte address 0x4 - core index']
  #allocation1 [shape = 'u32[144,128]{1,0:T(1,128)}', space=vmem, size = 0x12000, scoped, tag = 'internal scratch']
  #allocation2 [shape = 'f32[16,32]{1,0:T(8,128)}', space=vmem, size = 0x2000, scoped, tag = 'scratch operand']
  %s0 = inlined_call_operand.vmem [shape: f32[16,32], index: 0, kind: input, shape index: {}]
  %s1 = inlined_call_operand.vmem [shape: bf16[64,16], index: 1, kind: input, shape index: {}]
  %s2 = inlined_call_operand.vmem [shape: bf16[64,36], index: 2, kind: input, shape index: {}]
  %s3 = inlined_call_operand.vmem [shape: f32[64,1], index: 3, kind: input, shape index: {}]
  %s4 = inlined_call_operand.vmem [shape: f32[16,4], index: 4, kind: input, shape index: {}]
  %s5 = inlined_call_operand.vmem [shape: bf16[32,4], index: 5, kind: input, shape index: {}]
  %s6 = inlined_call_operand.vmem [shape: bf16[4,32], index: 6, kind: input, shape index: {}]
  %s7 = inlined_call_operand.vmem [shape: bf16[2,36,64], index: 7, kind: input, shape index: {}]
  %s8 = inlined_call_operand.vmem [shape: bf16[2,32,64], index: 8, kind: input, shape index: {}]
  %s9 = inlined_call_operand.vmem [shape: f32[2,1,64], index: 9, kind: input, shape index: {}, may-alias: {9,11,14}]
  %s10 = inlined_call_operand.vmem [shape: f32[2,1,64], index: 10, kind: input, shape index: {}]
  %s11 = inlined_call_operand.vmem [shape: f32[2,1,64], index: 11, kind: input, shape index: {}, may-alias: {9,11,14}]
  %s12 = inlined_call_operand.vmem [shape: bf16[2,32,32], index: 12, kind: input, shape index: {}]
  %s13 = inlined_call_operand.vmem [shape: bf16[2,32,32], index: 13, kind: input, shape index: {}]
  %s14 = inlined_call_operand.vmem [shape: f32[2,1,64], index: 14, kind: input, shape index: {}, may-alias: {9,11,14}]
  %s15 = inlined_call_operand.vmem [shape: bf16[2,32,96], index: 15, kind: input, shape index: {}]
  %s16 = inlined_call_operand.vmem [shape: f32[2,1,32], index: 16, kind: input, shape index: {}, may-alias: {16,18,20}]
  %s17 = inlined_call_operand.vmem [shape: f32[2,1,32], index: 17, kind: input, shape index: {}]
  %s18 = inlined_call_operand.vmem [shape: f32[2,1,32], index: 18, kind: input, shape index: {}, may-alias: {16,18,20}]
  %s19 = inlined_call_operand.vmem [shape: bf16[2,32,32], index: 19, kind: input, shape index: {}]
  %s20 = inlined_call_operand.vmem [shape: f32[2,1,32], index: 20, kind: input, shape index: {}, may-alias: {16,18,20}]
  %s21 = inlined_call_operand.vmem [shape: f32[16,32], index: 21, kind: output, shape index: {}]
  %s22 = sld [smem:[#allocation0]]
  $region125: #{ipa_transformer_forward.2} parent=0
    _
  %s24 = ssub.s32 1, %s22
  %s25 = scalar_select 0, %s24, %s22
  loop: start=0, step=1, limit=4
  $region2: #{ipa_transformer_forward.2} parent=0 // loop_pre_header
    _
  $region3: #{ipa_transformer_forward.2} parent=0 // loop_header
    %s27 = sphi 0, %s31
    %p28 = scmp.ge.s32.totalorder %s27, 4
    %s35 = sphi 0, %s35
    %s37 = sphi 0, %s35
    %s38 = sphi 0, %s37
    %s52 = sphi 0, %s38
    %s56 = sphi 0, %s56
    %s58 = sphi 0, %s56
    %s59 = sphi 0, %s58
    %s73 = sphi 0, %s59
    %s77 = sphi 0, %s77
    %s79 = sphi 0, %s77
    %s80 = sphi 0, %s79
    %s94 = sphi 0, %s80
    %s98 = sphi 0, %s98
    %s100 = sphi 0, %s98
    %s101 = sphi 0, %s100
    %s115 = sphi 0, %s101
    %s119 = sphi 0, %s119
    %s121 = sphi 0, %s119
    %s122 = sphi 0, %s121
    %s136 = sphi 0, %s122
    %s140 = sphi 0, %s140
    %s142 = sphi 0, %s140
    %s143 = sphi 0, %s142
    %s157 = sphi 0, %s143
    %s161 = sphi 0, %s161
    %s163 = sphi 0, %s161
    %s164 = sphi 0, %s163
    %s178 = sphi 0, %s164
    %s184 = sphi 0, %s186
    %s187 = sphi 0, %s184
    %s188 = sphi 0, %s187
    %s204 = sphi 0, %s188
    %s210 = sphi 0, %s212
    %s213 = sphi 0, %s210
    %s214 = sphi 0, %s213
    %s230 = sphi 0, %s214
    %s236 = sphi 0, %s238
    %s239 = sphi 0, %s236
    %s240 = sphi 0, %s239
    %s256 = sphi 0, %s240
    %s262 = sphi 0, %s264
    %s265 = sphi 0, %s262
    %s266 = sphi 0, %s265
    %s282 = sphi 0, %s266
    %s288 = sphi 0, %s290
    %s291 = sphi 0, %s288
    %s292 = sphi 0, %s291
    %s308 = sphi 0, %s292
    %s314 = sphi 0, %s316
    %s317 = sphi 0, %s314
    %s318 = sphi 0, %s317
    %s334 = sphi 0, %s318
    %s340 = sphi 0, %s342
    %s343 = sphi 0, %s340
    %s344 = sphi 0, %s343
    %s360 = sphi 0, %s344
    %s366 = sphi 0, %s368
    %s369 = sphi 0, %s366
    %s370 = sphi 0, %s369
    %s386 = sphi 0, %s370
    %s392 = sphi 0, %s394
    %s395 = sphi 0, %s392
    %s396 = sphi 0, %s395
    %s412 = sphi 0, %s396
    %s418 = sphi 0, %s420
    %s421 = sphi 0, %s418
    %s422 = sphi 0, %s421
    %s438 = sphi 0, %s422
    %s444 = sphi 0, %s446
    %s447 = sphi 0, %s444
    %s448 = sphi 0, %s447
    %s464 = sphi 0, %s448
    %s470 = sphi 0, %s472
    %s473 = sphi 0, %s470
    %s474 = sphi 0, %s473
    %s490 = sphi 0, %s474
    %s496 = sphi 0, %s498
    %s499 = sphi 0, %s496
    %s500 = sphi 0, %s499
    %s516 = sphi 0, %s500
    %s522 = sphi 0, %s524
    %s525 = sphi 0, %s522
    %s526 = sphi 0, %s525
    %s542 = sphi 0, %s526
    %s546 = sphi 0, %s546
    %s548 = sphi 0, %s546
    %s549 = sphi 0, %s548
    %s563 = sphi 0, %s549
  $region4: #{ipa_transformer_forward.2} parent=0 // loop_header_branch
    %30 = sbr.rel (%p28) target = $region8
  $region5: #{ipa_transformer_forward.2} parent=0 // loop_body
    %s32 = ssub.s32 %s27, 1
    %s33 = ssub.s32 %s27, 2
    %s34 = sadd.s32 %s27, 1
    %s36 = sadd.s32 %s35, 1
    %p39 = scmp.eq.s32.totalorder %s27, 1
    %p40 = scmp.ne.s32.totalorder %s35, %s37
    %p41 = scmp.eq.s32.totalorder %s27, 0
    %p42 = por %p40, %p41
    %p43 = scmp.ne.s32.totalorder %s35, %s37
    %p44 = scmp.eq.s32.totalorder %s32, 1
    %p45 = por %p43, %p44
    %p46 = scmp.ne.s32.totalorder %s37, %s38
    %p47 = scmp.eq.s32.totalorder %s32, 0
    %p48 = por %p46, %p47
    %p49 = scmp.ne.s32.totalorder %s37, %s38
    %p50 = scmp.eq.s32.totalorder %s33, 1
    %p51 = por %p49, %p50
    %p53 = scmp.ne.s32.totalorder %s38, %s52
    %p54 = scmp.eq.s32.totalorder %s33, 0
    %p55 = por %p53, %p54
    %s57 = sadd.s32 %s56, 1
    %p60 = scmp.eq.s32.totalorder %s27, 1
    %p61 = scmp.ne.s32.totalorder %s56, %s58
    %p62 = scmp.eq.s32.totalorder %s27, 0
    %p63 = por %p61, %p62
    %p64 = scmp.ne.s32.totalorder %s56, %s58
    %p65 = scmp.eq.s32.totalorder %s32, 1
    %p66 = por %p64, %p65
    %p67 = scmp.ne.s32.totalorder %s58, %s59
    %p68 = scmp.eq.s32.totalorder %s32, 0
    %p69 = por %p67, %p68
    %p70 = scmp.ne.s32.totalorder %s58, %s59
    %p71 = scmp.eq.s32.totalorder %s33, 1
    %p72 = por %p70, %p71
    %p74 = scmp.ne.s32.totalorder %s59, %s73
    %p75 = scmp.eq.s32.totalorder %s33, 0
    %p76 = por %p74, %p75
    %s78 = sadd.s32 %s77, 1
    %p81 = scmp.eq.s32.totalorder %s27, 1
    %p82 = scmp.ne.s32.totalorder %s77, %s79
    %p83 = scmp.eq.s32.totalorder %s27, 0
    %p84 = por %p82, %p83
    %p85 = scmp.ne.s32.totalorder %s77, %s79
    %p86 = scmp.eq.s32.totalorder %s32, 1
    %p87 = por %p85, %p86
    %p88 = scmp.ne.s32.totalorder %s79, %s80
    %p89 = scmp.eq.s32.totalorder %s32, 0
    %p90 = por %p88, %p89
    %p91 = scmp.ne.s32.totalorder %s79, %s80
    %p92 = scmp.eq.s32.totalorder %s33, 1
    %p93 = por %p91, %p92
    %p95 = scmp.ne.s32.totalorder %s80, %s94
    %p96 = scmp.eq.s32.totalorder %s33, 0
    %p97 = por %p95, %p96
    %s99 = sadd.s32 %s98, 1
    %p102 = scmp.eq.s32.totalorder %s27, 1
    %p103 = scmp.ne.s32.totalorder %s98, %s100
    %p104 = scmp.eq.s32.totalorder %s27, 0
    %p105 = por %p103, %p104
    %p106 = scmp.ne.s32.totalorder %s98, %s100
    %p107 = scmp.eq.s32.totalorder %s32, 1
    %p108 = por %p106, %p107
    %p109 = scmp.ne.s32.totalorder %s100, %s101
    %p110 = scmp.eq.s32.totalorder %s32, 0
    %p111 = por %p109, %p110
    %p112 = scmp.ne.s32.totalorder %s100, %s101
    %p113 = scmp.eq.s32.totalorder %s33, 1
    %p114 = por %p112, %p113
    %p116 = scmp.ne.s32.totalorder %s101, %s115
    %p117 = scmp.eq.s32.totalorder %s33, 0
    %p118 = por %p116, %p117
    %s120 = sadd.s32 %s119, 1
    %p123 = scmp.eq.s32.totalorder %s27, 1
    %p124 = scmp.ne.s32.totalorder %s119, %s121
    %p125 = scmp.eq.s32.totalorder %s27, 0
    %p126 = por %p124, %p125
    %p127 = scmp.ne.s32.totalorder %s119, %s121
    %p128 = scmp.eq.s32.totalorder %s32, 1
    %p129 = por %p127, %p128
    %p130 = scmp.ne.s32.totalorder %s121, %s122
    %p131 = scmp.eq.s32.totalorder %s32, 0
    %p132 = por %p130, %p131
    %p133 = scmp.ne.s32.totalorder %s121, %s122
    %p134 = scmp.eq.s32.totalorder %s33, 1
    %p135 = por %p133, %p134
    %p137 = scmp.ne.s32.totalorder %s122, %s136
    %p138 = scmp.eq.s32.totalorder %s33, 0
    %p139 = por %p137, %p138
    %s141 = sadd.s32 %s140, 1
    %p144 = scmp.eq.s32.totalorder %s27, 1
    %p145 = scmp.ne.s32.totalorder %s140, %s142
    %p146 = scmp.eq.s32.totalorder %s27, 0
    %p147 = por %p145, %p146
    %p148 = scmp.ne.s32.totalorder %s140, %s142
    %p149 = scmp.eq.s32.totalorder %s32, 1
    %p150 = por %p148, %p149
    %p151 = scmp.ne.s32.totalorder %s142, %s143
    %p152 = scmp.eq.s32.totalorder %s32, 0
    %p153 = por %p151, %p152
    %p154 = scmp.ne.s32.totalorder %s142, %s143
    %p155 = scmp.eq.s32.totalorder %s33, 1
    %p156 = por %p154, %p155
    %p158 = scmp.ne.s32.totalorder %s143, %s157
    %p159 = scmp.eq.s32.totalorder %s33, 0
    %p160 = por %p158, %p159
    %s162 = sadd.s32 %s161, 1
    %p165 = scmp.eq.s32.totalorder %s27, 1
    %p166 = scmp.ne.s32.totalorder %s161, %s163
    %p167 = scmp.eq.s32.totalorder %s27, 0
    %p168 = por %p166, %p167
    %p169 = scmp.ne.s32.totalorder %s161, %s163
    %p170 = scmp.eq.s32.totalorder %s32, 1
    %p171 = por %p169, %p170
    %p172 = scmp.ne.s32.totalorder %s163, %s164
    %p173 = scmp.eq.s32.totalorder %s32, 0
    %p174 = por %p172, %p173
    %p175 = scmp.ne.s32.totalorder %s163, %s164
    %p176 = scmp.eq.s32.totalorder %s33, 1
    %p177 = por %p175, %p176
    %p179 = scmp.ne.s32.totalorder %s164, %s178
    %p180 = scmp.eq.s32.totalorder %s33, 0
    %p181 = por %p179, %p180
    %s182 = ssub.s32 %s27, %s34
    %p183 = scmp.eq.s32.totalorder %s182, 0
    %s185 = sadd.s32 %s184, 1
    %s186 = scalar_select %p183, %s184, %s185
    %p189 = pneg %p183
    %p190 = scmp.eq.s32.totalorder %s27, 1
    %p191 = por %p189, %p190
    %p192 = scmp.ne.s32.totalorder %s184, %s187
    %p193 = scmp.eq.s32.totalorder %s27, 0
    %p194 = por %p192, %p193
    %p195 = scmp.ne.s32.totalorder %s184, %s187
    %p196 = scmp.eq.s32.totalorder %s32, 1
    %p197 = por %p195, %p196
    %p198 = scmp.ne.s32.totalorder %s187, %s188
    %p199 = scmp.eq.s32.totalorder %s32, 0
    %p200 = por %p198, %p199
    %p201 = scmp.ne.s32.totalorder %s187, %s188
    %p202 = scmp.eq.s32.totalorder %s33, 1
    %p203 = por %p201, %p202
    %p205 = scmp.ne.s32.totalorder %s188, %s204
    %p206 = scmp.eq.s32.totalorder %s33, 0
    %p207 = por %p205, %p206
    %s208 = ssub.s32 %s27, %s34
    %p209 = scmp.eq.s32.totalorder %s208, 0
    %s211 = sadd.s32 %s210, 1
    %s212 = scalar_select %p209, %s210, %s211
    %p215 = pneg %p209
    %p216 = scmp.eq.s32.totalorder %s27, 1
    %p217 = por %p215, %p216
    %p218 = scmp.ne.s32.totalorder %s210, %s213
    %p219 = scmp.eq.s32.totalorder %s27, 0
    %p220 = por %p218, %p219
    %p221 = scmp.ne.s32.totalorder %s210, %s213
    %p222 = scmp.eq.s32.totalorder %s32, 1
    %p223 = por %p221, %p222
    %p224 = scmp.ne.s32.totalorder %s213, %s214
    %p225 = scmp.eq.s32.totalorder %s32, 0
    %p226 = por %p224, %p225
    %p227 = scmp.ne.s32.totalorder %s213, %s214
    %p228 = scmp.eq.s32.totalorder %s33, 1
    %p229 = por %p227, %p228
    %p231 = scmp.ne.s32.totalorder %s214, %s230
    %p232 = scmp.eq.s32.totalorder %s33, 0
    %p233 = por %p231, %p232
    %s234 = ssub.s32 %s27, %s34
    %p235 = scmp.eq.s32.totalorder %s234, 0
    %s237 = sadd.s32 %s236, 1
    %s238 = scalar_select %p235, %s236, %s237
    %p241 = pneg %p235
    %p242 = scmp.eq.s32.totalorder %s27, 1
    %p243 = por %p241, %p242
    %p244 = scmp.ne.s32.totalorder %s236, %s239
    %p245 = scmp.eq.s32.totalorder %s27, 0
    %p246 = por %p244, %p245
    %p247 = scmp.ne.s32.totalorder %s236, %s239
    %p248 = scmp.eq.s32.totalorder %s32, 1
    %p249 = por %p247, %p248
    %p250 = scmp.ne.s32.totalorder %s239, %s240
    %p251 = scmp.eq.s32.totalorder %s32, 0
    %p252 = por %p250, %p251
    %p253 = scmp.ne.s32.totalorder %s239, %s240
    %p254 = scmp.eq.s32.totalorder %s33, 1
    %p255 = por %p253, %p254
    %p257 = scmp.ne.s32.totalorder %s240, %s256
    %p258 = scmp.eq.s32.totalorder %s33, 0
    %p259 = por %p257, %p258
    %s260 = ssub.s32 %s27, %s34
    %p261 = scmp.eq.s32.totalorder %s260, 0
    %s263 = sadd.s32 %s262, 1
    %s264 = scalar_select %p261, %s262, %s263
    %p267 = pneg %p261
    %p268 = scmp.eq.s32.totalorder %s27, 1
    %p269 = por %p267, %p268
    %p270 = scmp.ne.s32.totalorder %s262, %s265
    %p271 = scmp.eq.s32.totalorder %s27, 0
    %p272 = por %p270, %p271
    %p273 = scmp.ne.s32.totalorder %s262, %s265
    %p274 = scmp.eq.s32.totalorder %s32, 1
    %p275 = por %p273, %p274
    %p276 = scmp.ne.s32.totalorder %s265, %s266
    %p277 = scmp.eq.s32.totalorder %s32, 0
    %p278 = por %p276, %p277
    %p279 = scmp.ne.s32.totalorder %s265, %s266
    %p280 = scmp.eq.s32.totalorder %s33, 1
    %p281 = por %p279, %p280
    %p283 = scmp.ne.s32.totalorder %s266, %s282
    %p284 = scmp.eq.s32.totalorder %s33, 0
    %p285 = por %p283, %p284
    %s286 = ssub.s32 %s27, %s34
    %p287 = scmp.eq.s32.totalorder %s286, 0
    %s289 = sadd.s32 %s288, 1
    %s290 = scalar_select %p287, %s288, %s289
    %p293 = pneg %p287
    %p294 = scmp.eq.s32.totalorder %s27, 1
    %p295 = por %p293, %p294
    %p296 = scmp.ne.s32.totalorder %s288, %s291
    %p297 = scmp.eq.s32.totalorder %s27, 0
    %p298 = por %p296, %p297
    %p299 = scmp.ne.s32.totalorder %s288, %s291
    %p300 = scmp.eq.s32.totalorder %s32, 1
    %p301 = por %p299, %p300
    %p302 = scmp.ne.s32.totalorder %s291, %s292
    %p303 = scmp.eq.s32.totalorder %s32, 0
    %p304 = por %p302, %p303
    %p305 = scmp.ne.s32.totalorder %s291, %s292
    %p306 = scmp.eq.s32.totalorder %s33, 1
    %p307 = por %p305, %p306
    %p309 = scmp.ne.s32.totalorder %s292, %s308
    %p310 = scmp.eq.s32.totalorder %s33, 0
    %p311 = por %p309, %p310
    %s312 = ssub.s32 %s27, %s34
    %p313 = scmp.eq.s32.totalorder %s312, 0
    %s315 = sadd.s32 %s314, 1
    %s316 = scalar_select %p313, %s314, %s315
    %p319 = pneg %p313
    %p320 = scmp.eq.s32.totalorder %s27, 1
    %p321 = por %p319, %p320
    %p322 = scmp.ne.s32.totalorder %s314, %s317
    %p323 = scmp.eq.s32.totalorder %s27, 0
    %p324 = por %p322, %p323
    %p325 = scmp.ne.s32.totalorder %s314, %s317
    %p326 = scmp.eq.s32.totalorder %s32, 1
    %p327 = por %p325, %p326
    %p328 = scmp.ne.s32.totalorder %s317, %s318
    %p329 = scmp.eq.s32.totalorder %s32, 0
    %p330 = por %p328, %p329
    %p331 = scmp.ne.s32.totalorder %s317, %s318
    %p332 = scmp.eq.s32.totalorder %s33, 1
    %p333 = por %p331, %p332
    %p335 = scmp.ne.s32.totalorder %s318, %s334
    %p336 = scmp.eq.s32.totalorder %s33, 0
    %p337 = por %p335, %p336
    %s338 = ssub.s32 %s27, %s34
    %p339 = scmp.eq.s32.totalorder %s338, 0
    %s341 = sadd.s32 %s340, 1
    %s342 = scalar_select %p339, %s340, %s341
    %p345 = pneg %p339
    %p346 = scmp.eq.s32.totalorder %s27, 1
    %p347 = por %p345, %p346
    %p348 = scmp.ne.s32.totalorder %s340, %s343
    %p349 = scmp.eq.s32.totalorder %s27, 0
    %p350 = por %p348, %p349
    %p351 = scmp.ne.s32.totalorder %s340, %s343
    %p352 = scmp.eq.s32.totalorder %s32, 1
    %p353 = por %p351, %p352
    %p354 = scmp.ne.s32.totalorder %s343, %s344
    %p355 = scmp.eq.s32.totalorder %s32, 0
    %p356 = por %p354, %p355
    %p357 = scmp.ne.s32.totalorder %s343, %s344
    %p358 = scmp.eq.s32.totalorder %s33, 1
    %p359 = por %p357, %p358
    %p361 = scmp.ne.s32.totalorder %s344, %s360
    %p362 = scmp.eq.s32.totalorder %s33, 0
    %p363 = por %p361, %p362
    %s364 = ssub.s32 %s27, %s34
    %p365 = scmp.eq.s32.totalorder %s364, 0
    %s367 = sadd.s32 %s366, 1
    %s368 = scalar_select %p365, %s366, %s367
    %p371 = pneg %p365
    %p372 = scmp.eq.s32.totalorder %s27, 1
    %p373 = por %p371, %p372
    %p374 = scmp.ne.s32.totalorder %s366, %s369
    %p375 = scmp.eq.s32.totalorder %s27, 0
    %p376 = por %p374, %p375
    %p377 = scmp.ne.s32.totalorder %s366, %s369
    %p378 = scmp.eq.s32.totalorder %s32, 1
    %p379 = por %p377, %p378
    %p380 = scmp.ne.s32.totalorder %s369, %s370
    %p381 = scmp.eq.s32.totalorder %s32, 0
    %p382 = por %p380, %p381
    %p383 = scmp.ne.s32.totalorder %s369, %s370
    %p384 = scmp.eq.s32.totalorder %s33, 1
    %p385 = por %p383, %p384
    %p387 = scmp.ne.s32.totalorder %s370, %s386
    %p388 = scmp.eq.s32.totalorder %s33, 0
    %p389 = por %p387, %p388
    %s390 = ssub.s32 %s27, %s34
    %p391 = scmp.eq.s32.totalorder %s390, 0
    %s393 = sadd.s32 %s392, 1
    %s394 = scalar_select %p391, %s392, %s393
    %p397 = pneg %p391
    %p398 = scmp.eq.s32.totalorder %s27, 1
    %p399 = por %p397, %p398
    %p400 = scmp.ne.s32.totalorder %s392, %s395
    %p401 = scmp.eq.s32.totalorder %s27, 0
    %p402 = por %p400, %p401
    %p403 = scmp.ne.s32.totalorder %s392, %s395
    %p404 = scmp.eq.s32.totalorder %s32, 1
    %p405 = por %p403, %p404
    %p406 = scmp.ne.s32.totalorder %s395, %s396
    %p407 = scmp.eq.s32.totalorder %s32, 0
    %p408 = por %p406, %p407
    %p409 = scmp.ne.s32.totalorder %s395, %s396
    %p410 = scmp.eq.s32.totalorder %s33, 1
    %p411 = por %p409, %p410
    %p413 = scmp.ne.s32.totalorder %s396, %s412
    %p414 = scmp.eq.s32.totalorder %s33, 0
    %p415 = por %p413, %p414
    %s416 = ssub.s32 %s27, %s34
    %p417 = scmp.eq.s32.totalorder %s416, 0
    %s419 = sadd.s32 %s418, 1
    %s420 = scalar_select %p417, %s418, %s419
    %p423 = pneg %p417
    %p424 = scmp.eq.s32.totalorder %s27, 1
    %p425 = por %p423, %p424
    %p426 = scmp.ne.s32.totalorder %s418, %s421
    %p427 = scmp.eq.s32.totalorder %s27, 0
    %p428 = por %p426, %p427
    %p429 = scmp.ne.s32.totalorder %s418, %s421
    %p430 = scmp.eq.s32.totalorder %s32, 1
    %p431 = por %p429, %p430
    %p432 = scmp.ne.s32.totalorder %s421, %s422
    %p433 = scmp.eq.s32.totalorder %s32, 0
    %p434 = por %p432, %p433
    %p435 = scmp.ne.s32.totalorder %s421, %s422
    %p436 = scmp.eq.s32.totalorder %s33, 1
    %p437 = por %p435, %p436
    %p439 = scmp.ne.s32.totalorder %s422, %s438
    %p440 = scmp.eq.s32.totalorder %s33, 0
    %p441 = por %p439, %p440
    %s442 = ssub.s32 %s27, %s34
    %p443 = scmp.eq.s32.totalorder %s442, 0
    %s445 = sadd.s32 %s444, 1
    %s446 = scalar_select %p443, %s444, %s445
    %p449 = pneg %p443
    %p450 = scmp.eq.s32.totalorder %s27, 1
    %p451 = por %p449, %p450
    %p452 = scmp.ne.s32.totalorder %s444, %s447
    %p453 = scmp.eq.s32.totalorder %s27, 0
    %p454 = por %p452, %p453
    %p455 = scmp.ne.s32.totalorder %s444, %s447
    %p456 = scmp.eq.s32.totalorder %s32, 1
    %p457 = por %p455, %p456
    %p458 = scmp.ne.s32.totalorder %s447, %s448
    %p459 = scmp.eq.s32.totalorder %s32, 0
    %p460 = por %p458, %p459
    %p461 = scmp.ne.s32.totalorder %s447, %s448
    %p462 = scmp.eq.s32.totalorder %s33, 1
    %p463 = por %p461, %p462
    %p465 = scmp.ne.s32.totalorder %s448, %s464
    %p466 = scmp.eq.s32.totalorder %s33, 0
    %p467 = por %p465, %p466
    %s468 = ssub.s32 %s27, %s34
    %p469 = scmp.eq.s32.totalorder %s468, 0
    %s471 = sadd.s32 %s470, 1
    %s472 = scalar_select %p469, %s470, %s471
    %p475 = pneg %p469
    %p476 = scmp.eq.s32.totalorder %s27, 1
    %p477 = por %p475, %p476
    %p478 = scmp.ne.s32.totalorder %s470, %s473
    %p479 = scmp.eq.s32.totalorder %s27, 0
    %p480 = por %p478, %p479
    %p481 = scmp.ne.s32.totalorder %s470, %s473
    %p482 = scmp.eq.s32.totalorder %s32, 1
    %p483 = por %p481, %p482
    %p484 = scmp.ne.s32.totalorder %s473, %s474
    %p485 = scmp.eq.s32.totalorder %s32, 0
    %p486 = por %p484, %p485
    %p487 = scmp.ne.s32.totalorder %s473, %s474
    %p488 = scmp.eq.s32.totalorder %s33, 1
    %p489 = por %p487, %p488
    %p491 = scmp.ne.s32.totalorder %s474, %s490
    %p492 = scmp.eq.s32.totalorder %s33, 0
    %p493 = por %p491, %p492
    %s494 = ssub.s32 %s27, %s34
    %p495 = scmp.eq.s32.totalorder %s494, 0
    %s497 = sadd.s32 %s496, 1
    %s498 = scalar_select %p495, %s496, %s497
    %p501 = pneg %p495
    %p502 = scmp.eq.s32.totalorder %s27, 1
    %p503 = por %p501, %p502
    %p504 = scmp.ne.s32.totalorder %s496, %s499
    %p505 = scmp.eq.s32.totalorder %s27, 0
    %p506 = por %p504, %p505
    %p507 = scmp.ne.s32.totalorder %s496, %s499
    %p508 = scmp.eq.s32.totalorder %s32, 1
    %p509 = por %p507, %p508
    %p510 = scmp.ne.s32.totalorder %s499, %s500
    %p511 = scmp.eq.s32.totalorder %s32, 0
    %p512 = por %p510, %p511
    %p513 = scmp.ne.s32.totalorder %s499, %s500
    %p514 = scmp.eq.s32.totalorder %s33, 1
    %p515 = por %p513, %p514
    %p517 = scmp.ne.s32.totalorder %s500, %s516
    %p518 = scmp.eq.s32.totalorder %s33, 0
    %p519 = por %p517, %p518
    %s520 = ssub.s32 %s27, %s34
    %p521 = scmp.eq.s32.totalorder %s520, 0
    %s523 = sadd.s32 %s522, 1
    %s524 = scalar_select %p521, %s522, %s523
    %p527 = pneg %p521
    %p528 = scmp.eq.s32.totalorder %s27, 1
    %p529 = por %p527, %p528
    %p530 = scmp.ne.s32.totalorder %s522, %s525
    %p531 = scmp.eq.s32.totalorder %s27, 0
    %p532 = por %p530, %p531
    %p533 = scmp.ne.s32.totalorder %s522, %s525
    %p534 = scmp.eq.s32.totalorder %s32, 1
    %p535 = por %p533, %p534
    %p536 = scmp.ne.s32.totalorder %s525, %s526
    %p537 = scmp.eq.s32.totalorder %s32, 0
    %p538 = por %p536, %p537
    %p539 = scmp.ne.s32.totalorder %s525, %s526
    %p540 = scmp.eq.s32.totalorder %s33, 1
    %p541 = por %p539, %p540
    %p543 = scmp.ne.s32.totalorder %s526, %s542
    %p544 = scmp.eq.s32.totalorder %s33, 0
    %p545 = por %p543, %p544
    %s547 = sadd.s32 %s546, 1
    %p550 = scmp.eq.s32.totalorder %s27, 1
    %p551 = scmp.ne.s32.totalorder %s546, %s548
    %p552 = scmp.eq.s32.totalorder %s27, 0
    %p553 = por %p551, %p552
    %p554 = scmp.ne.s32.totalorder %s546, %s548
    %p555 = scmp.eq.s32.totalorder %s32, 1
    %p556 = por %p554, %p555
    %p557 = scmp.ne.s32.totalorder %s548, %s549
    %p558 = scmp.eq.s32.totalorder %s32, 0
    %p559 = por %p557, %p558
    %p560 = scmp.ne.s32.totalorder %s548, %s549
    %p561 = scmp.eq.s32.totalorder %s33, 1
    %p562 = por %p560, %p561
    %p564 = scmp.ne.s32.totalorder %s549, %s563
    %p565 = scmp.eq.s32.totalorder %s33, 0
    %p566 = por %p564, %p565
    %p567 = scmp.le.s32.totalorder 1, %s27
    %p568 = scmp.lt.s32.totalorder %s27, 3
    %p569 = pnand %p567, %p568
    %p570 = pneg %p569
    // Predicated region
    $region9: #{ipa_transformer_forward.2} parent=5 // pred_check
      _
    $region10: #{ipa_transformer_forward.2} parent=5 // pred_check_branch
      %572 = sbr.rel (%p569) target = $region12
    $region11: #{ipa_transformer_forward.2} parent=5 // pred_region
      %s573 = ssub.s32 %s27, 1
      // Predicated region
      $region13: #{ipa_transformer_forward.2} parent=11 // pred_check
        %p574 = pneg %p48
      $region14: #{ipa_transformer_forward.2} parent=11 // pred_check_branch
        %576 = sbr.rel (%p574) target = $region16
      $region15: #{ipa_transformer_forward.2} parent=11 // pred_region
        _
      $region16: #{ipa_transformer_forward.2} parent=11 // pred_fallthru
        _
      // Predicated region
      $region17: #{ipa_transformer_forward.2} parent=11 // pred_check
        %p577 = pneg %p69
      $region18: #{ipa_transformer_forward.2} parent=11 // pred_check_branch
        %579 = sbr.rel (%p577) target = $region20
      $region19: #{ipa_transformer_forward.2} parent=11 // pred_region
        _
      $region20: #{ipa_transformer_forward.2} parent=11 // pred_fallthru
        _
      // Predicated region
      $region21: #{ipa_transformer_forward.2} parent=11 // pred_check
        %p580 = pneg %p90
      $region22: #{ipa_transformer_forward.2} parent=11 // pred_check_branch
        %582 = sbr.rel (%p580) target = $region24
      $region23: #{ipa_transformer_forward.2} parent=11 // pred_region
        _
      $region24: #{ipa_transformer_forward.2} parent=11 // pred_fallthru
        _
      // Predicated region
      $region25: #{ipa_transformer_forward.2} parent=11 // pred_check
        %p583 = pneg %p111
      $region26: #{ipa_transformer_forward.2} parent=11 // pred_check_branch
        %585 = sbr.rel (%p583) target = $region28
      $region27: #{ipa_transformer_forward.2} parent=11 // pred_region
        _
      $region28: #{ipa_transformer_forward.2} parent=11 // pred_fallthru
        _
      // Predicated region
      $region29: #{ipa_transformer_forward.2} parent=11 // pred_check
        %p586 = pneg %p132
      $region30: #{ipa_transformer_forward.2} parent=11 // pred_check_branch
        %588 = sbr.rel (%p586) target = $region32
      $region31: #{ipa_transformer_forward.2} parent=11 // pred_region
        _
      $region32: #{ipa_transformer_forward.2} parent=11 // pred_fallthru
        _
      // Predicated region
      $region33: #{ipa_transformer_forward.2} parent=11 // pred_check
        %p589 = pneg %p153
      $region34: #{ipa_transformer_forward.2} parent=11 // pred_check_branch
        %591 = sbr.rel (%p589) target = $region36
      $region35: #{ipa_transformer_forward.2} parent=11 // pred_region
        _
      $region36: #{ipa_transformer_forward.2} parent=11 // pred_fallthru
        _
      // Predicated region
      $region37: #{ipa_transformer_forward.2} parent=11 // pred_check
        %p592 = pneg %p174
      $region38: #{ipa_transformer_forward.2} parent=11 // pred_check_branch
        %594 = sbr.rel (%p592) target = $region40
      $region39: #{ipa_transformer_forward.2} parent=11 // pred_region
        _
      $region40: #{ipa_transformer_forward.2} parent=11 // pred_fallthru
        _
    $region12: #{ipa_transformer_forward.2} parent=5 // pred_fallthru
      _
    %p595 = scmp.lt.s32.totalorder %s27, 2
    // Predicated region
    $region41: #{ipa_transformer_forward.2} parent=5 // pred_check
      %p596 = pneg %p595
    $region42: #{ipa_transformer_forward.2} parent=5 // pred_check_branch
      %598 = sbr.rel (%p596) target = $region44
    $region43: #{ipa_transformer_forward.2} parent=5 // pred_region
      // Predicated region
      $region45: #{ipa_transformer_forward.2} parent=43 // pred_check
        %p599 = pneg %p194
      $region46: #{ipa_transformer_forward.2} parent=43 // pred_check_branch
        %601 = sbr.rel (%p599) target = $region48
      $region47: #{ipa_transformer_forward.2} parent=43 // pred_region
        %p602 = scmp.lt.s32.totalorder %s27, 1
        %s603 = scalar_select %p602, %s27, 1
        %s604 = smul.addr %s603, 5
        %s605 = smul.addr %s604, 4
        %s606 = scalar_lea.vmem %s7, %s605
      $region48: #{ipa_transformer_forward.2} parent=43 // pred_fallthru
        _
      // Predicated region
      $region49: #{ipa_transformer_forward.2} parent=43 // pred_check
        %p607 = pneg %p220
      $region50: #{ipa_transformer_forward.2} parent=43 // pred_check_branch
        %609 = sbr.rel (%p607) target = $region52
      $region51: #{ipa_transformer_forward.2} parent=43 // pred_region
        %p610 = scmp.lt.s32.totalorder %s27, 1
        %s611 = scalar_select %p610, %s27, 1
        %s612 = smul.addr %s611, 4
        %s613 = smul.addr %s612, 4
        %s614 = scalar_lea.vmem %s8, %s613
      $region52: #{ipa_transformer_forward.2} parent=43 // pred_fallthru
        _
      // Predicated region
      $region53: #{ipa_transformer_forward.2} parent=43 // pred_check
        %p615 = pneg %p246
      $region54: #{ipa_transformer_forward.2} parent=43 // pred_check_branch
        %617 = sbr.rel (%p615) target = $region56
      $region55: #{ipa_transformer_forward.2} parent=43 // pred_region
        %p618 = scmp.lt.s32.totalorder %s27, 1
        %s619 = scalar_select %p618, %s27, 1
        %s620 = scalar_lea.vmem %s9, %s619
      $region56: #{ipa_transformer_forward.2} parent=43 // pred_fallthru
        _
      // Predicated region
      $region57: #{ipa_transformer_forward.2} parent=43 // pred_check
        %p621 = pneg %p272
      $region58: #{ipa_transformer_forward.2} parent=43 // pred_check_branch
        %623 = sbr.rel (%p621) target = $region60
      $region59: #{ipa_transformer_forward.2} parent=43 // pred_region
        %p624 = scmp.lt.s32.totalorder %s27, 1
        %s625 = scalar_select %p624, %s27, 1
        %s626 = scalar_lea.vmem %s10, %s625
      $region60: #{ipa_transformer_forward.2} parent=43 // pred_fallthru
        _
      // Predicated region
      $region61: #{ipa_transformer_forward.2} parent=43 // pred_check
        %p627 = pneg %p298
      $region62: #{ipa_transformer_forward.2} parent=43 // pred_check_branch
        %629 = sbr.rel (%p627) target = $region64
      $region63: #{ipa_transformer_forward.2} parent=43 // pred_region
        %p630 = scmp.lt.s32.totalorder %s27, 1
        %s631 = scalar_select %p630, %s27, 1
        %s632 = scalar_lea.vmem %s11, %s631
      $region64: #{ipa_transformer_forward.2} parent=43 // pred_fallthru
        _
      // Predicated region
      $region65: #{ipa_transformer_forward.2} parent=43 // pred_check
        %p633 = pneg %p324
      $region66: #{ipa_transformer_forward.2} parent=43 // pred_check_branch
        %635 = sbr.rel (%p633) target = $region68
      $region67: #{ipa_transformer_forward.2} parent=43 // pred_region
        %p636 = scmp.lt.s32.totalorder %s27, 1
        %s637 = scalar_select %p636, %s27, 1
        %s638 = smul.addr %s637, 4
        %s639 = smul.addr %s638, 4
        %s640 = scalar_lea.vmem %s12, %s639
      $region68: #{ipa_transformer_forward.2} parent=43 // pred_fallthru
        _
      // Predicated region
      $region69: #{ipa_transformer_forward.2} parent=43 // pred_check
        %p641 = pneg %p350
      $region70: #{ipa_transformer_forward.2} parent=43 // pred_check_branch
        %643 = sbr.rel (%p641) target = $region72
      $region71: #{ipa_transformer_forward.2} parent=43 // pred_region
        %p644 = scmp.lt.s32.totalorder %s27, 1
        %s645 = scalar_select %p644, %s27, 1
        %s646 = smul.addr %s645, 4
        %s647 = smul.addr %s646, 4
        %s648 = scalar_lea.vmem %s13, %s647
      $region72: #{ipa_transformer_forward.2} parent=43 // pred_fallthru
        _
      // Predicated region
      $region73: #{ipa_transformer_forward.2} parent=43 // pred_check
        %p649 = pneg %p376
      $region74: #{ipa_transformer_forward.2} parent=43 // pred_check_branch
        %651 = sbr.rel (%p649) target = $region76
      $region75: #{ipa_transformer_forward.2} parent=43 // pred_region
        %p652 = scmp.lt.s32.totalorder %s27, 1
        %s653 = scalar_select %p652, %s27, 1
        %s654 = scalar_lea.vmem %s14, %s653
      $region76: #{ipa_transformer_forward.2} parent=43 // pred_fallthru
        _
      // Predicated region
      $region77: #{ipa_transformer_forward.2} parent=43 // pred_check
        %p655 = pneg %p402
      $region78: #{ipa_transformer_forward.2} parent=43 // pred_check_branch
        %657 = sbr.rel (%p655) target = $region80
      $region79: #{ipa_transformer_forward.2} parent=43 // pred_region
        %p658 = scmp.lt.s32.totalorder %s27, 1
        %s659 = scalar_select %p658, %s27, 1
        %s660 = smul.addr %s659, 4
        %s661 = smul.addr %s660, 4
        %s662 = scalar_lea.vmem %s15, %s661
      $region80: #{ipa_transformer_forward.2} parent=43 // pred_fallthru
        _
      // Predicated region
      $region81: #{ipa_transformer_forward.2} parent=43 // pred_check
        %p663 = pneg %p428
      $region82: #{ipa_transformer_forward.2} parent=43 // pred_check_branch
        %665 = sbr.rel (%p663) target = $region84
      $region83: #{ipa_transformer_forward.2} parent=43 // pred_region
        %p666 = scmp.lt.s32.totalorder %s27, 1
        %s667 = scalar_select %p666, %s27, 1
        %s668 = scalar_lea.vmem %s16, %s667
      $region84: #{ipa_transformer_forward.2} parent=43 // pred_fallthru
        _
      // Predicated region
      $region85: #{ipa_transformer_forward.2} parent=43 // pred_check
        %p669 = pneg %p454
      $region86: #{ipa_transformer_forward.2} parent=43 // pred_check_branch
        %671 = sbr.rel (%p669) target = $region88
      $region87: #{ipa_transformer_forward.2} parent=43 // pred_region
        %p672 = scmp.lt.s32.totalorder %s27, 1
        %s673 = scalar_select %p672, %s27, 1
        %s674 = scalar_lea.vmem %s17, %s673
      $region88: #{ipa_transformer_forward.2} parent=43 // pred_fallthru
        _
      // Predicated region
      $region89: #{ipa_transformer_forward.2} parent=43 // pred_check
        %p675 = pneg %p480
      $region90: #{ipa_transformer_forward.2} parent=43 // pred_check_branch
        %677 = sbr.rel (%p675) target = $region92
      $region91: #{ipa_transformer_forward.2} parent=43 // pred_region
        %p678 = scmp.lt.s32.totalorder %s27, 1
        %s679 = scalar_select %p678, %s27, 1
        %s680 = scalar_lea.vmem %s18, %s679
      $region92: #{ipa_transformer_forward.2} parent=43 // pred_fallthru
        _
      // Predicated region
      $region93: #{ipa_transformer_forward.2} parent=43 // pred_check
        %p681 = pneg %p506
      $region94: #{ipa_transformer_forward.2} parent=43 // pred_check_branch
        %683 = sbr.rel (%p681) target = $region96
      $region95: #{ipa_transformer_forward.2} parent=43 // pred_region
        %p684 = scmp.lt.s32.totalorder %s27, 1
        %s685 = scalar_select %p684, %s27, 1
        %s686 = smul.addr %s685, 4
        %s687 = smul.addr %s686, 4
        %s688 = scalar_lea.vmem %s19, %s687
      $region96: #{ipa_transformer_forward.2} parent=43 // pred_fallthru
        _
      // Predicated region
      $region97: #{ipa_transformer_forward.2} parent=43 // pred_check
        %p689 = pneg %p532
      $region98: #{ipa_transformer_forward.2} parent=43 // pred_check_branch
        %691 = sbr.rel (%p689) target = $region100
      $region99: #{ipa_transformer_forward.2} parent=43 // pred_region
        %p692 = scmp.lt.s32.totalorder %s27, 1
        %s693 = scalar_select %p692, %s27, 1
        %s694 = scalar_lea.vmem %s20, %s693
      $region100: #{ipa_transformer_forward.2} parent=43 // pred_fallthru
        _
    $region44: #{ipa_transformer_forward.2} parent=5 // pred_fallthru
      _
    %p695 = scmp.le.s32.totalorder 1, %s27
    %p696 = scmp.lt.s32.totalorder %s27, 3
    %p697 = pnand %p695, %p696
    %p698 = pneg %p697
    // Predicated region
    $region101: #{ipa_transformer_forward.2} parent=5 // pred_check
      _
    $region102: #{ipa_transformer_forward.2} parent=5 // pred_check_branch
      %700 = sbr.rel (%p697) target = $region104
    $region103: #{ipa_transformer_forward.2} parent=5 // pred_region
      %s701 = ssub.s32 %s27, 1
      %p702 = pneg %p48
      %p703 = pneg %p45
      %p704 = pneg %p69
      %p705 = pneg %p66
      %p706 = pneg %p90
      %p707 = pneg %p87
      %p708 = pneg %p111
      %p709 = pneg %p108
      %p710 = pneg %p132
      %p711 = pneg %p129
      %p712 = pneg %p153
      %p713 = pneg %p150
      %p714 = pneg %p174
      %p715 = pneg %p171
      %p716 = scmp.lt.s32.totalorder %s32, 1
      %s717 = scalar_select %p716, %s32, 1
      %s718 = smul.addr %s717, 5
      %s719 = smul.addr %s718, 4
      %s720 = scalar_lea.vmem %s7, %s719
      %p721 = pneg %p200
      %p722 = pneg %p197
      %p723 = scmp.lt.s32.totalorder %s32, 1
      %s724 = scalar_select %p723, %s32, 1
      %s725 = smul.addr %s724, 4
      %s726 = smul.addr %s725, 4
      %s727 = scalar_lea.vmem %s8, %s726
      %p728 = pneg %p226
      %p729 = pneg %p223
      %p730 = scmp.lt.s32.totalorder %s32, 1
      %s731 = scalar_select %p730, %s32, 1
      %s732 = scalar_lea.vmem %s9, %s731
      %p733 = pneg %p252
      %p734 = pneg %p249
      %p735 = scmp.lt.s32.totalorder %s32, 1
      %s736 = scalar_select %p735, %s32, 1
      %s737 = scalar_lea.vmem %s10, %s736
      %p738 = pneg %p278
      %p739 = pneg %p275
      %p740 = scmp.lt.s32.totalorder %s32, 1
      %s741 = scalar_select %p740, %s32, 1
      %s742 = scalar_lea.vmem %s11, %s741
      %p743 = pneg %p304
      %p744 = pneg %p301
      %p745 = scmp.lt.s32.totalorder %s32, 1
      %s746 = scalar_select %p745, %s32, 1
      %s747 = smul.addr %s746, 4
      %s748 = smul.addr %s747, 4
      %s749 = scalar_lea.vmem %s12, %s748
      %p750 = pneg %p330
      %p751 = pneg %p327
      %p752 = scmp.lt.s32.totalorder %s32, 1
      %s753 = scalar_select %p752, %s32, 1
      %s754 = smul.addr %s753, 4
      %s755 = smul.addr %s754, 4
      %s756 = scalar_lea.vmem %s13, %s755
      %p757 = pneg %p356
      %p758 = pneg %p353
      %p759 = scmp.lt.s32.totalorder %s32, 1
      %s760 = scalar_select %p759, %s32, 1
      %s761 = scalar_lea.vmem %s14, %s760
      %p762 = pneg %p382
      %p763 = pneg %p379
      %p764 = scmp.lt.s32.totalorder %s32, 1
      %s765 = scalar_select %p764, %s32, 1
      %s766 = smul.addr %s765, 4
      %s767 = smul.addr %s766, 4
      %s768 = scalar_lea.vmem %s15, %s767
      %p769 = pneg %p408
      %p770 = pneg %p405
      %p771 = scmp.lt.s32.totalorder %s32, 1
      %s772 = scalar_select %p771, %s32, 1
      %s773 = scalar_lea.vmem %s16, %s772
      %p774 = pneg %p434
      %p775 = pneg %p431
      %p776 = scmp.lt.s32.totalorder %s32, 1
      %s777 = scalar_select %p776, %s32, 1
      %s778 = scalar_lea.vmem %s17, %s777
      %p779 = pneg %p460
      %p780 = pneg %p457
      %p781 = scmp.lt.s32.totalorder %s32, 1
      %s782 = scalar_select %p781, %s32, 1
      %s783 = scalar_lea.vmem %s18, %s782
      %p784 = pneg %p486
      %p785 = pneg %p483
      %p786 = scmp.lt.s32.totalorder %s32, 1
      %s787 = scalar_select %p786, %s32, 1
      %s788 = smul.addr %s787, 4
      %s789 = smul.addr %s788, 4
      %s790 = scalar_lea.vmem %s19, %s789
      %p791 = pneg %p512
      %p792 = pneg %p509
      %p793 = scmp.lt.s32.totalorder %s32, 1
      %s794 = scalar_select %p793, %s32, 1
      %s795 = scalar_lea.vmem %s20, %s794
      %p796 = pneg %p538
      %p797 = pneg %p535
      %p798 = pneg %p559
      %p799 = pneg %p556
      %p800 = scmp.lt.s32.totalorder %s32, 1
      %s801 = scalar_select %p800, %s32, 1
      %s802 = smul.addr %s801, 5
      %s803 = smul.addr %s802, 4
      %s804 = scalar_lea.vmem %s7, %s803
      %p805 = scmp.lt.s32.totalorder %s32, 1
      %s806 = scalar_select %p805, %s32, 1
      %s807 = smul.addr %s806, 4
      %s808 = smul.addr %s807, 4
      %s809 = scalar_lea.vmem %s8, %s808
      %p810 = scmp.lt.s32.totalorder %s32, 1
      %s811 = scalar_select %p810, %s32, 1
      %s812 = scalar_lea.vmem %s9, %s811
      %p813 = scmp.lt.s32.totalorder %s32, 1
      %s814 = scalar_select %p813, %s32, 1
      %s815 = scalar_lea.vmem %s10, %s814
      %p816 = scmp.lt.s32.totalorder %s32, 1
      %s817 = scalar_select %p816, %s32, 1
      %s818 = scalar_lea.vmem %s11, %s817
      %p819 = scmp.lt.s32.totalorder %s32, 1
      %s820 = scalar_select %p819, %s32, 1
      %s821 = smul.addr %s820, 4
      %s822 = smul.addr %s821, 4
      %s823 = scalar_lea.vmem %s12, %s822
      %p824 = scmp.lt.s32.totalorder %s32, 1
      %s825 = scalar_select %p824, %s32, 1
      %s826 = smul.addr %s825, 4
      %s827 = smul.addr %s826, 4
      %s828 = scalar_lea.vmem %s13, %s827
      %p829 = scmp.lt.s32.totalorder %s32, 1
      %s830 = scalar_select %p829, %s32, 1
      %s831 = scalar_lea.vmem %s14, %s830
      %p832 = scmp.lt.s32.totalorder %s32, 1
      %s833 = scalar_select %p832, %s32, 1
      %s834 = smul.addr %s833, 4
      %s835 = smul.addr %s834, 4
      %s836 = scalar_lea.vmem %s15, %s835
      %p837 = scmp.lt.s32.totalorder %s32, 1
      %s838 = scalar_select %p837, %s32, 1
      %s839 = scalar_lea.vmem %s16, %s838
      %p840 = scmp.lt.s32.totalorder %s32, 1
      %s841 = scalar_select %p840, %s32, 1
      %s842 = scalar_lea.vmem %s17, %s841
      %p843 = scmp.lt.s32.totalorder %s32, 1
      %s844 = scalar_select %p843, %s32, 1
      %s845 = scalar_lea.vmem %s18, %s844
      %p846 = scmp.lt.s32.totalorder %s32, 1
      %s847 = scalar_select %p846, %s32, 1
      %s848 = smul.addr %s847, 4
      %s849 = smul.addr %s848, 4
      %s850 = scalar_lea.vmem %s19, %s849
      %p851 = scmp.lt.s32.totalorder %s32, 1
      %s852 = scalar_select %p851, %s32, 1
      %s853 = scalar_lea.vmem %s20, %s852
      %p855 = scmp.eq.s32.totalorder %s32, 0
      // Predicated region
      $region105: #{ipa_transformer_forward.2} parent=103 // pred_check
        %p856 = pneg %p855
      $region106: #{ipa_transformer_forward.2} parent=103 // pred_check_branch
        %858 = sbr.rel (%p856) target = $region108
      $region107: #{ipa_transformer_forward.2} parent=103 // pred_region
        %v859 = vld [vmem:[%s0] sm:$0xff]
        %v860 = vld [vmem:[%s0 + $0x8] sm:$0xff]
        %vm861 = vcmask 261120
        %862 = vst.msk [vmem:[#allocation2] sm:$0xff] %vm861, %v859
        %863 = vst.msk [vmem:[#allocation2 + $0x8] sm:$0xff] %vm861, %v860
      $region108: #{ipa_transformer_forward.2} parent=103 // pred_fallthru
        _
      %v864 = vld [vmem:[#allocation2] sm:$0xff]
      %v865 = vld [vmem:[#allocation2 + $0x8] sm:$0xff]
      %v866 = vpack.c.bf16 %v865, %v864
      %v867 = vld [vmem:[%s836] sm:$0xf]
      %v868 = vld [vmem:[%s836 + $0x4] sm:$0xf]
      %v869 = vld [vmem:[%s836 + $0x8] sm:$0xf]
      %v870 = vld [vmem:[%s836 + $0xc] sm:$0xf]
      %v875 = vunpack.c.l.b16 %v867
      %v876 = vunpack.c.l.b16 %v868
      %v877 = vunpack.c.l.b16 %v869
      %v878 = vunpack.c.l.b16 %v870
      %v879 = vpack.c.b16 %v876, %v875
      %v880 = vpack.c.b16 %v878, %v877
      %vm883 = vcmask 261120
      %v885 = vsel %vm883, %v866, 0
      %887 = vmatprep.subr.bf16.mxu0 0
      %888 = vmatpush1.bf16.msra.mxu0 %v879
      %889 = vmatprep.subr.bf16.mxu0 0
      %890 = vmatpush1.bf16.msra.mxu0 %v880
      %891 = vmatprep.subr.bf16.mxu0 0
      %892 = vmatpush1.bf16.msra.mxu0 0
      %893 = vmatprep.subr.bf16.mxu0 0
      %894 = vmatpush1.bf16.msra.mxu0 0
      %895 = vmatprep.subr.bf16.mxu0 0
      %896 = vmatpush1.bf16.msra.mxu0 0
      %897 = vmatprep.subr.bf16.mxu0 0
      %898 = vmatpush1.bf16.msra.mxu0 0
      %899 = vmatprep.subr.bf16.mxu0 0
      %900 = vmatpush1.bf16.msra.mxu0 0
      %901 = vmatprep.subr.bf16.mxu0 0
      %902 = vmatpush1.bf16.msra.mxu0 0
      %903 = vmatprep.subr.bf16.mxu0 0
      %904 = vmatpush1.bf16.msra.mxu0 0
      %905 = vmatprep.subr.bf16.mxu0 0
      %906 = vmatpush1.bf16.msra.mxu0 0
      %907 = vmatprep.subr.bf16.mxu0 0
      %908 = vmatpush1.bf16.msra.mxu0 0
      %909 = vmatprep.subr.bf16.mxu0 0
      %910 = vmatpush1.bf16.msra.mxu0 0
      %911 = vmatprep.subr.bf16.mxu0 0
      %912 = vmatpush1.bf16.msra.mxu0 0
      %913 = vmatprep.subr.bf16.mxu0 0
      %914 = vmatpush1.bf16.msra.mxu0 0
      %915 = vmatprep.subr.bf16.mxu0 0
      %916 = vmatpush1.bf16.msra.mxu0 0
      %917 = vmatprep.subr.bf16.mxu0 0
      %918 = vmatpush1.bf16.msra.mxu0 0
      %919 = vmatprep.mubr.bf16.mxu0 0
      %920 = vmatmul.mubr.bf16.gmra.mrb[0].mxu0 %v885
      %v921 = vpop.f32.mrb[0].mxu0
      %v922 = vadd.f32 0.0, %v921
      %v923 = vpop.f32.mrb[0].mxu0
      %v924 = vpop.f32.mrb[0].mxu0
      %v925 = vadd.f32 0.0, %v924
      %v926 = vpop.f32.mrb[0].mxu0
      %927 = vdwg.mxu0
      %v928 = vld [vmem:[%s839] sm:$0x1]
      %v930 = vlaneseq
      %v931 = vshrl.u32 %v930, 7
      %v932 = vsub.s32 0, %v931
      %v933 = vrot.slane %v928, %v932
      %v935 = vadd.f32 %v922, %v933
      %v936 = vadd.f32 %v925, %v933
      %v937 = vld [vmem:[%s842] sm:$0x1]
      %v938 = vld [vmem:[%s845] sm:$0x1]
      %v939 = vsel %vm883, %v935, 0.0
      %940 = vadd.xlane.f32.xlu0 %v939
      %v941 = vpop.xlane.xlu0 %940
      %v942 = vsel %vm883, %v936, 0.0
      %943 = vadd.xlane.f32.xlu0 %v942
      %v944 = vpop.xlane.xlu0 %943
      %v945 = vrcp.pop 32.0
      %v946 = vmul.f32 %v941, %v945
      %v947 = vmul.f32 %v944, %v945
      %v948 = vsub.f32 %v935, %v946
      %v949 = vsub.f32 %v936, %v947
      %v950 = vmul.f32 %v948, %v948
      %v951 = vmul.f32 %v949, %v949
      %v952 = vsel %vm883, %v950, 0.0
      %953 = vadd.xlane.f32.xlu0 %v952
      %v954 = vpop.xlane.xlu0 %953
      %v955 = vsel %vm883, %v951, 0.0
      %956 = vadd.xlane.f32.xlu0 %v955
      %v957 = vpop.xlane.xlu0 %956
      %v958 = vmul.f32 %v954, %v945
      %v959 = vmul.f32 %v957, %v945
      %v960 = vadd.f32 %v958, 1e-05
      %v961 = vadd.f32 %v959, 1e-05
      %v962 = vrsqrt.pop %v960
      %v963 = vrsqrt.pop %v961
      %v964 = vmul.f32 %v948, %v962
      %v965 = vmul.f32 %v949, %v963
      %v967 = vlaneseq
      %v968 = vshrl.u32 %v967, 7
      %v969 = vsub.s32 0, %v968
      %v970 = vrot.slane %v937, %v969
      %v972 = vmul.f32 %v964, %v970
      %v973 = vmul.f32 %v965, %v970
      %v975 = vlaneseq
      %v976 = vshrl.u32 %v975, 7
      %v977 = vsub.s32 0, %v976
      %v978 = vrot.slane %v938, %v977
      %v980 = vadd.f32 %v972, %v978
      %v981 = vadd.f32 %v973, %v978
      %v982 = vmax.f32 %v980, 0.0
      %v983 = vmax.f32 %v981, 0.0
      %v984 = vpack.c.bf16 %v983, %v982
      %v985 = vld [vmem:[%s850] sm:$0xf]
      %v986 = vld [vmem:[%s850 + $0x4] sm:$0xf]
      %v987 = vld [vmem:[%s850 + $0x8] sm:$0xf]
      %v988 = vld [vmem:[%s850 + $0xc] sm:$0xf]
      %v989 = vld [vmem:[%s853] sm:$0x1]
      %v991 = vlaneseq
      %v992 = vshrl.u32 %v991, 7
      %v993 = vsub.s32 0, %v992
      %v994 = vrot.slane %v989, %v993
      %v1000 = vunpack.c.l.b16 %v985
      %v1001 = vunpack.c.l.b16 %v986
      %v1002 = vunpack.c.l.b16 %v987
      %v1003 = vunpack.c.l.b16 %v988
      %v1004 = vpack.c.b16 %v1001, %v1000
      %v1005 = vpack.c.b16 %v1003, %v1002
      %v1009 = vsel %vm883, %v984, 0
      %1011 = vmatprep.subr.bf16.mxu0 0
      %1012 = vmatpush1.bf16.msra.mxu0 %v1004
      %1013 = vmatprep.subr.bf16.mxu0 0
      %1014 = vmatpush1.bf16.msra.mxu0 %v1005
      %1015 = vmatprep.subr.bf16.mxu0 0
      %1016 = vmatpush1.bf16.msra.mxu0 0
      %1017 = vmatprep.subr.bf16.mxu0 0
      %1018 = vmatpush1.bf16.msra.mxu0 0
      %1019 = vmatprep.subr.bf16.mxu0 0
      %1020 = vmatpush1.bf16.msra.mxu0 0
      %1021 = vmatprep.subr.bf16.mxu0 0
      %1022 = vmatpush1.bf16.msra.mxu0 0
      %1023 = vmatprep.subr.bf16.mxu0 0
      %1024 = vmatpush1.bf16.msra.mxu0 0
      %1025 = vmatprep.subr.bf16.mxu0 0
      %1026 = vmatpush1.bf16.msra.mxu0 0
      %1027 = vmatprep.subr.bf16.mxu0 0
      %1028 = vmatpush1.bf16.msra.mxu0 0
      %1029 = vmatprep.subr.bf16.mxu0 0
      %1030 = vmatpush1.bf16.msra.mxu0 0
      %1031 = vmatprep.subr.bf16.mxu0 0
      %1032 = vmatpush1.bf16.msra.mxu0 0
      %1033 = vmatprep.subr.bf16.mxu0 0
      %1034 = vmatpush1.bf16.msra.mxu0 0
      %1035 = vmatprep.subr.bf16.mxu0 0
      %1036 = vmatpush1.bf16.msra.mxu0 0
      %1037 = vmatprep.subr.bf16.mxu0 0
      %1038 = vmatpush1.bf16.msra.mxu0 0
      %1039 = vmatprep.subr.bf16.mxu0 0
      %1040 = vmatpush1.bf16.msra.mxu0 0
      %1041 = vmatprep.subr.bf16.mxu0 0
      %1042 = vmatpush1.bf16.msra.mxu0 0
      %1043 = vmatprep.mubr.bf16.mxu0 0
      %1044 = vmatmul.mubr.bf16.gmra.mrb[0].mxu0 %v1009
      %v1045 = vpop.f32.mrb[0].mxu0
      %v1046 = vadd.f32 %v994, %v1045
      %v1047 = vpop.f32.mrb[0].mxu0
      %v1048 = vpop.f32.mrb[0].mxu0
      %v1049 = vadd.f32 %v994, %v1048
      %v1050 = vpop.f32.mrb[0].mxu0
      %1051 = vdwg.mxu0
      %v1052 = vld [vmem:[%s1] sm:$0xf]
      %v1053 = vld [vmem:[%s1 + $0x4] sm:$0xf]
      %v1054 = vld [vmem:[%s1 + $0x8] sm:$0xf]
      %v1055 = vld [vmem:[%s1 + $0xc] sm:$0xf]
      %v1056 = vld [vmem:[%s1 + $0x10] sm:$0xf]
      %v1057 = vld [vmem:[%s1 + $0x14] sm:$0xf]
      %v1058 = vld [vmem:[%s1 + $0x18] sm:$0xf]
      %v1059 = vld [vmem:[%s1 + $0x1c] sm:$0xf]
      %v1068 = vunpack.c.l.b16 %v1052
      %v1069 = vunpack.c.l.b16 %v1053
      %v1070 = vunpack.c.l.b16 %v1054
      %v1071 = vunpack.c.l.b16 %v1055
      %v1072 = vunpack.c.l.b16 %v1056
      %v1073 = vunpack.c.l.b16 %v1057
      %v1074 = vunpack.c.l.b16 %v1058
      %v1075 = vunpack.c.l.b16 %v1059
      %v1076 = vpack.c.b16 %v1069, %v1068
      %v1077 = vpack.c.b16 %v1071, %v1070
      %v1078 = vpack.c.b16 %v1073, %v1072
      %v1079 = vpack.c.b16 %v1075, %v1074
      %vm1080 = vcmask 130048
      %v1082 = vsel %vm1080, %v1076, 0
      %v1085 = vsel %vm1080, %v1077, 0
      %v1088 = vsel %vm1080, %v1078, 0
      %v1091 = vsel %vm1080, %v1079, 0
      %1093 = vmatprep.subr.bf16.mxu0 0
      %1094 = vmatpush1.bf16.msra.mxu0 %v866
      %1095 = vmatprep.subr.bf16.mxu0 0
      %1096 = vmatpush1.bf16.msra.mxu0 0
      %1097 = vmatprep.subr.bf16.mxu0 0
      %1098 = vmatpush1.bf16.msra.mxu0 0
      %1099 = vmatprep.subr.bf16.mxu0 0
      %1100 = vmatpush1.bf16.msra.mxu0 0
      %1101 = vmatprep.subr.bf16.mxu0 0
      %1102 = vmatpush1.bf16.msra.mxu0 0
      %1103 = vmatprep.subr.bf16.mxu0 0
      %1104 = vmatpush1.bf16.msra.mxu0 0
      %1105 = vmatprep.subr.bf16.mxu0 0
      %1106 = vmatpush1.bf16.msra.mxu0 0
      %1107 = vmatprep.subr.bf16.mxu0 0
      %1108 = vmatpush1.bf16.msra.mxu0 0
      %1109 = vmatprep.subr.bf16.mxu0 0
      %1110 = vmatpush1.bf16.msra.mxu0 0
      %1111 = vmatprep.subr.bf16.mxu0 0
      %1112 = vmatpush1.bf16.msra.mxu0 0
      %1113 = vmatprep.subr.bf16.mxu0 0
      %1114 = vmatpush1.bf16.msra.mxu0 0
      %1115 = vmatprep.subr.bf16.mxu0 0
      %1116 = vmatpush1.bf16.msra.mxu0 0
      %1117 = vmatprep.subr.bf16.mxu0 0
      %1118 = vmatpush1.bf16.msra.mxu0 0
      %1119 = vmatprep.subr.bf16.mxu0 0
      %1120 = vmatpush1.bf16.msra.mxu0 0
      %1121 = vmatprep.subr.bf16.mxu0 0
      %1122 = vmatpush1.bf16.msra.mxu0 0
      %1123 = vmatprep.subr.bf16.mxu0 0
      %1124 = vmatpush1.bf16.msra.mxu0 0
      %1125 = vmatprep.mubr.bf16.mxu0 0
      %1126 = vmatmul.mubr.bf16.gmra.mrb[0].mxu0 %v1082
      %v1127 = vpop.f32.mrb[0].mxu0
      %v1128 = vadd.f32 0.0, %v1127
      %v1129 = vpop.f32.mrb[0].mxu0
      %v1130 = vpop.f32.mrb[0].mxu0
      %v1131 = vadd.f32 0.0, %v1130
      %v1132 = vpop.f32.mrb[0].mxu0
      %1133 = vmatprep.mubr.bf16.mxu0 0
      %1134 = vmatmul.mubr.bf16.gmra.mrb[0].mxu0 %v1085
      %v1135 = vpop.f32.mrb[0].mxu0
      %v1136 = vadd.f32 0.0, %v1135
      %v1137 = vpop.f32.mrb[0].mxu0
      %v1138 = vpop.f32.mrb[0].mxu0
      %v1139 = vadd.f32 0.0, %v1138
      %v1140 = vpop.f32.mrb[0].mxu0
      %1141 = vmatprep.mubr.bf16.mxu0 0
      %1142 = vmatmul.mubr.bf16.gmra.mrb[0].mxu0 %v1088
      %v1143 = vpop.f32.mrb[0].mxu0
      %v1144 = vadd.f32 0.0, %v1143
      %v1145 = vpop.f32.mrb[0].mxu0
      %v1146 = vpop.f32.mrb[0].mxu0
      %v1147 = vadd.f32 0.0, %v1146
      %v1148 = vpop.f32.mrb[0].mxu0
      %1149 = vmatprep.mubr.bf16.mxu0 0
      %1150 = vmatmul.mubr.bf16.gmra.mrb[0].mxu0 %v1091
      %v1151 = vpop.f32.mrb[0].mxu0
      %v1152 = vadd.f32 0.0, %v1151
      %v1153 = vpop.f32.mrb[0].mxu0
      %v1154 = vpop.f32.mrb[0].mxu0
      %v1155 = vadd.f32 0.0, %v1154
      %v1156 = vpop.f32.mrb[0].mxu0
      %1157 = vdwg.mxu0
      %v1158 = vpack.c.bf16 %v1131, %v1128
      %v1159 = vpack.c.bf16 %v1139, %v1136
      %v1160 = vpack.c.bf16 %v1147, %v1144
      %v1161 = vpack.c.bf16 %v1155, %v1152
      %v1162 = vld [vmem:[%s2] sm:$0xf]
      %v1163 = vld [vmem:[%s2 + $0x4] sm:$0xf]
      %v1164 = vld [vmem:[%s2 + $0x8] sm:$0xf]
      %v1165 = vld [vmem:[%s2 + $0xc] sm:$0xf]
      %v1166 = vld [vmem:[%s2 + $0x10] sm:$0xf]
      %v1167 = vld [vmem:[%s2 + $0x14] sm:$0xf]
      %v1168 = vld [vmem:[%s2 + $0x18] sm:$0xf]
      %v1169 = vld [vmem:[%s2 + $0x1c] sm:$0xf]
      %v1170 = vld [vmem:[%s804] sm:$0xf]
      %v1171 = vld [vmem:[%s804 + $0x4] sm:$0xf]
      %v1172 = vld [vmem:[%s804 + $0x8] sm:$0xf]
      %v1173 = vld [vmem:[%s804 + $0xc] sm:$0xf]
      %v1174 = vld [vmem:[%s804 + $0x10] sm:$0x3]
      %v1175 = vld [vmem:[%s809] sm:$0xf]
      %v1176 = vld [vmem:[%s809 + $0x4] sm:$0xf]
      %v1177 = vld [vmem:[%s809 + $0x8] sm:$0xf]
      %v1178 = vld [vmem:[%s809 + $0xc] sm:$0xf]
      %v1183 = vunpack.c.l.b16 %v1175
      %v1184 = vunpack.c.l.b16 %v1176
      %v1185 = vunpack.c.l.b16 %v1177
      %v1186 = vunpack.c.l.b16 %v1178
      %v1187 = vpack.c.b16 %v1184, %v1183
      %v1188 = vpack.c.b16 %v1186, %v1185
      %v1192 = vsel %vm883, %v1158, 0
      %v1195 = vsel %vm883, %v1159, 0
      %v1198 = vsel %vm883, %v1160, 0
      %v1201 = vsel %vm883, %v1161, 0
      %1203 = vmatprep.subr.bf16.mxu0 0
      %1204 = vmatpush1.bf16.msra.mxu0 %v1187
      %1205 = vmatprep.subr.bf16.mxu0 0
      %1206 = vmatpush1.bf16.msra.mxu0 %v1188
      %1207 = vmatprep.subr.bf16.mxu0 0
      %1208 = vmatpush1.bf16.msra.mxu0 0
      %1209 = vmatprep.subr.bf16.mxu0 0
      %1210 = vmatpush1.bf16.msra.mxu0 0
      %1211 = vmatprep.subr.bf16.mxu0 0
      %1212 = vmatpush1.bf16.msra.mxu0 0
      %1213 = vmatprep.subr.bf16.mxu0 0
      %1214 = vmatpush1.bf16.msra.mxu0 0
      %1215 = vmatprep.subr.bf16.mxu0 0
      %1216 = vmatpush1.bf16.msra.mxu0 0
      %1217 = vmatprep.subr.bf16.mxu0 0
      %1218 = vmatpush1.bf16.msra.mxu0 0
      %1219 = vmatprep.subr.bf16.mxu0 0
      %1220 = vmatpush1.bf16.msra.mxu0 0
      %1221 = vmatprep.subr.bf16.mxu0 0
      %1222 = vmatpush1.bf16.msra.mxu0 0
      %1223 = vmatprep.subr.bf16.mxu0 0
      %1224 = vmatpush1.bf16.msra.mxu0 0
      %1225 = vmatprep.subr.bf16.mxu0 0
      %1226 = vmatpush1.bf16.msra.mxu0 0
      %1227 = vmatprep.subr.bf16.mxu0 0
      %1228 = vmatpush1.bf16.msra.mxu0 0
      %1229 = vmatprep.subr.bf16.mxu0 0
      %1230 = vmatpush1.bf16.msra.mxu0 0
      %1231 = vmatprep.subr.bf16.mxu0 0
      %1232 = vmatpush1.bf16.msra.mxu0 0
      %1233 = vmatprep.subr.bf16.mxu0 0
      %1234 = vmatpush1.bf16.msra.mxu0 0
      %1235 = vmatprep.mubr.bf16.mxu0 0
      %1236 = vmatmul.mubr.bf16.gmra.mrb[0].mxu0 %v1192
      %v1237 = vpop.f32.mrb[0].mxu0
      %v1238 = vadd.f32 0.0, %v1237
      %v1239 = vpop.f32.mrb[0].mxu0
      %v1240 = vpop.f32.mrb[0].mxu0
      %v1241 = vadd.f32 0.0, %v1240
      %v1242 = vpop.f32.mrb[0].mxu0
      %1243 = vmatprep.mubr.bf16.mxu0 0
      %1244 = vmatmul.mubr.bf16.gmra.mrb[0].mxu0 %v1195
      %v1245 = vpop.f32.mrb[0].mxu0
      %v1246 = vadd.f32 0.0, %v1245
      %v1247 = vpop.f32.mrb[0].mxu0
      %v1248 = vpop.f32.mrb[0].mxu0
      %v1249 = vadd.f32 0.0, %v1248
      %v1250 = vpop.f32.mrb[0].mxu0
      %1251 = vmatprep.mubr.bf16.mxu0 0
      %1252 = vmatmul.mubr.bf16.gmra.mrb[0].mxu0 %v1198
      %v1253 = vpop.f32.mrb[0].mxu0
      %v1254 = vadd.f32 0.0, %v1253
      %v1255 = vpop.f32.mrb[0].mxu0
      %v1256 = vpop.f32.mrb[0].mxu0
      %v1257 = vadd.f32 0.0, %v1256
      %v1258 = vpop.f32.mrb[0].mxu0
      %1259 = vmatprep.mubr.bf16.mxu0 0
      %1260 = vmatmul.mubr.bf16.gmra.mrb[0].mxu0 %v1201
      %v1261 = vpop.f32.mrb[0].mxu0
      %v1262 = vadd.f32 0.0, %v1261
      %v1263 = vpop.f32.mrb[0].mxu0
      %v1264 = vpop.f32.mrb[0].mxu0
      %v1265 = vadd.f32 0.0, %v1264
      %v1266 = vpop.f32.mrb[0].mxu0
      %1267 = vdwg.mxu0
      %v1276 = vunpack.c.l.b16 %v1162
      %v1277 = vunpack.c.l.b16 %v1163
      %v1278 = vunpack.c.l.b16 %v1164
      %v1279 = vunpack.c.l.b16 %v1165
      %v1280 = vunpack.c.l.b16 %v1166
      %v1281 = vunpack.c.l.b16 %v1167
      %v1282 = vunpack.c.l.b16 %v1168
      %v1283 = vunpack.c.l.b16 %v1169
      %v1284 = vpack.c.b16 %v1277, %v1276
      %v1285 = vpack.c.b16 %v1279, %v1278
      %v1286 = vpack.c.b16 %v1281, %v1280
      %v1287 = vpack.c.b16 %v1283, %v1282
      %v1293 = vunpack.c.l.b16 %v1170
      %v1294 = vunpack.c.l.b16 %v1171
      %v1295 = vunpack.c.l.b16 %v1172
      %v1296 = vunpack.c.l.b16 %v1173
      %v1297 = vunpack.c.l.b16 %v1174
      %v1298 = vpack.c.b16 %v1294, %v1293
      %v1299 = vpack.c.b16 %v1296, %v1295
      %v1300 = vpack.c.b16 %v1297, %v1297
      %vm1303 = vcmask 293888
      %v1305 = vsel %vm1303, %v1284, 0
      %v1308 = vsel %vm1303, %v1285, 0
      %v1311 = vsel %vm1303, %v1286, 0
      %v1314 = vsel %vm1303, %v1287, 0
      %vm1316 = vcmask 1041408
      %v1318 = vsel %vm1316, %v1300, 0
      %1320 = vmatprep.subr.bf16.mxu0 0
      %1321 = vmatpush1.bf16.msra.mxu0 %v1298
      %1322 = vmatprep.subr.bf16.mxu0 0
      %1323 = vmatpush1.bf16.msra.mxu0 %v1299
      %1324 = vmatprep.subr.bf16.mxu0 0
      %1325 = vmatpush1.bf16.msra.mxu0 %v1318
      %1326 = vmatprep.subr.bf16.mxu0 0
      %1327 = vmatpush1.bf16.msra.mxu0 0
      %1328 = vmatprep.subr.bf16.mxu0 0
      %1329 = vmatpush1.bf16.msra.mxu0 0
      %1330 = vmatprep.subr.bf16.mxu0 0
      %1331 = vmatpush1.bf16.msra.mxu0 0
      %1332 = vmatprep.subr.bf16.mxu0 0
      %1333 = vmatpush1.bf16.msra.mxu0 0
      %1334 = vmatprep.subr.bf16.mxu0 0
      %1335 = vmatpush1.bf16.msra.mxu0 0
      %1336 = vmatprep.subr.bf16.mxu0 0
      %1337 = vmatpush1.bf16.msra.mxu0 0
      %1338 = vmatprep.subr.bf16.mxu0 0
      %1339 = vmatpush1.bf16.msra.mxu0 0
      %1340 = vmatprep.subr.bf16.mxu0 0
      %1341 = vmatpush1.bf16.msra.mxu0 0
      %1342 = vmatprep.subr.bf16.mxu0 0
      %1343 = vmatpush1.bf16.msra.mxu0 0
      %1344 = vmatprep.subr.bf16.mxu0 0
      %1345 = vmatpush1.bf16.msra.mxu0 0
      %1346 = vmatprep.subr.bf16.mxu0 0
      %1347 = vmatpush1.bf16.msra.mxu0 0
      %1348 = vmatprep.subr.bf16.mxu0 0
      %1349 = vmatpush1.bf16.msra.mxu0 0
      %1350 = vmatprep.subr.bf16.mxu0 0
      %1351 = vmatpush1.bf16.msra.mxu0 0
      %1352 = vmatprep.mubr.bf16.mxu0 0
      %1353 = vmatmul.mubr.bf16.gmra.mrb[0].mxu0 %v1305
      %v1354 = vpop.f32.mrb[0].mxu0
      %v1355 = vadd.f32 %v1238, %v1354
      %v1356 = vpop.f32.mrb[0].mxu0
      %v1357 = vpop.f32.mrb[0].mxu0
      %v1358 = vadd.f32 %v1241, %v1357
      %v1359 = vpop.f32.mrb[0].mxu0
      %1360 = vmatprep.mubr.bf16.mxu0 0
      %1361 = vmatmul.mubr.bf16.gmra.mrb[0].mxu0 %v1308
      %v1362 = vpop.f32.mrb[0].mxu0
      %v1363 = vadd.f32 %v1246, %v1362
      %v1364 = vpop.f32.mrb[0].mxu0
      %v1365 = vpop.f32.mrb[0].mxu0
      %v1366 = vadd.f32 %v1249, %v1365
      %v1367 = vpop.f32.mrb[0].mxu0
      %1368 = vmatprep.mubr.bf16.mxu0 0
      %1369 = vmatmul.mubr.bf16.gmra.mrb[0].mxu0 %v1311
      %v1370 = vpop.f32.mrb[0].mxu0
      %v1371 = vadd.f32 %v1254, %v1370
      %v1372 = vpop.f32.mrb[0].mxu0
      %v1373 = vpop.f32.mrb[0].mxu0
      %v1374 = vadd.f32 %v1257, %v1373
      %v1375 = vpop.f32.mrb[0].mxu0
      %1376 = vmatprep.mubr.bf16.mxu0 0
      %1377 = vmatmul.mubr.bf16.gmra.mrb[0].mxu0 %v1314
      %v1378 = vpop.f32.mrb[0].mxu0
      %v1379 = vadd.f32 %v1262, %v1378
      %v1380 = vpop.f32.mrb[0].mxu0
      %v1381 = vpop.f32.mrb[0].mxu0
      %v1382 = vadd.f32 %v1265, %v1381
      %v1383 = vpop.f32.mrb[0].mxu0
      %1384 = vdwg.mxu0
      %v1387 = vcombine.high %v922, %v922
      %v1389 = vunpack.c.l.s4 1966171168
      %v1390 = vunpack.c.0.s8 %v1389
      %v1391 = vlaneseq
      %v1392 = vshrl.u32 %v1391, 7
      %v1393 = vsub.s32 %v1390, %v1392
      %v1394 = vrot.slane %v922, %v1393
      %v1396 = vunpack.c.l.s4 1966171168
      %v1397 = vunpack.c.0.s8 %v1396
      %v1398 = vlaneseq
      %v1399 = vshrl.u32 %v1398, 7
      %v1400 = vsub.s32 %v1397, %v1399
      %v1401 = vrot.slane %v1387, %v1400
      %v1402 = vcombine.high %v1394, %v1394
      %v1403 = vcombine.high %v1401, %v1401
      %v1405 = vunpack.c.l.s4 1966171168
      %v1406 = vunpack.c.0.s8 %v1405
      %v1407 = vlaneseq
      %v1408 = vshrl.u32 %v1407, 7
      %v1409 = vsub.s32 %v1406, %v1408
      %v1410 = vrot.slane %v1394, %v1409
      %v1412 = vunpack.c.l.s4 1966171168
      %v1413 = vunpack.c.0.s8 %v1412
      %v1414 = vlaneseq
      %v1415 = vshrl.u32 %v1414, 7
      %v1416 = vsub.s32 %v1413, %v1415
      %v1417 = vrot.slane %v1401, %v1416
      %v1419 = vunpack.c.l.s4 1966171168
      %v1420 = vunpack.c.0.s8 %v1419
      %v1421 = vlaneseq
      %v1422 = vshrl.u32 %v1421, 7
      %v1423 = vsub.s32 %v1420, %v1422
      %v1424 = vrot.slane %v1402, %v1423
      %v1426 = vunpack.c.l.s4 1966171168
      %v1427 = vunpack.c.0.s8 %v1426
      %v1428 = vlaneseq
      %v1429 = vshrl.u32 %v1428, 7
      %v1430 = vsub.s32 %v1427, %v1429
      %v1431 = vrot.slane %v1403, %v1430
      %v1432 = vcombine.high %v1410, %v1410
      %v1433 = vcombine.high %v1417, %v1417
      %v1434 = vcombine.high %v1424, %v1424
      %v1435 = vcombine.high %v1431, %v1431
      %v1436 = vcombine.high %v925, %v925
      %v1438 = vunpack.c.l.s4 1966171168
      %v1439 = vunpack.c.0.s8 %v1438
      %v1440 = vlaneseq
      %v1441 = vshrl.u32 %v1440, 7
      %v1442 = vsub.s32 %v1439, %v1441
      %v1443 = vrot.slane %v925, %v1442
      %v1445 = vunpack.c.l.s4 1966171168
      %v1446 = vunpack.c.0.s8 %v1445
      %v1447 = vlaneseq
      %v1448 = vshrl.u32 %v1447, 7
      %v1449 = vsub.s32 %v1446, %v1448
      %v1450 = vrot.slane %v1436, %v1449
      %v1451 = vcombine.high %v1443, %v1443
      %v1452 = vcombine.high %v1450, %v1450
      %v1454 = vunpack.c.l.s4 1966171168
      %v1455 = vunpack.c.0.s8 %v1454
      %v1456 = vlaneseq
      %v1457 = vshrl.u32 %v1456, 7
      %v1458 = vsub.s32 %v1455, %v1457
      %v1459 = vrot.slane %v1443, %v1458
      %v1461 = vunpack.c.l.s4 1966171168
      %v1462 = vunpack.c.0.s8 %v1461
      %v1463 = vlaneseq
      %v1464 = vshrl.u32 %v1463, 7
      %v1465 = vsub.s32 %v1462, %v1464
      %v1466 = vrot.slane %v1450, %v1465
      %v1468 = vunpack.c.l.s4 1966171168
      %v1469 = vunpack.c.0.s8 %v1468
      %v1470 = vlaneseq
      %v1471 = vshrl.u32 %v1470, 7
      %v1472 = vsub.s32 %v1469, %v1471
      %v1473 = vrot.slane %v1451, %v1472
      %v1475 = vunpack.c.l.s4 1966171168
      %v1476 = vunpack.c.0.s8 %v1475
      %v1477 = vlaneseq
      %v1478 = vshrl.u32 %v1477, 7
      %v1479 = vsub.s32 %v1476, %v1478
      %v1480 = vrot.slane %v1452, %v1479
      %v1481 = vcombine.high %v1459, %v1459
      %v1482 = vcombine.high %v1466, %v1466
      %v1483 = vcombine.high %v1473, %v1473
      %v1484 = vcombine.high %v1480, %v1480
      %v1485 = vlaneseq
      %v1486 = vshrl.u32 %v1485, 7
      %v1487 = vsub.s32 0, %v1486
      %v1488 = vrot.slane %v1410, %v1487
      %v1489 = vlaneseq
      %v1490 = vshrl.u32 %v1489, 7
      %v1491 = vsub.s32 0, %v1490
      %v1492 = vrot.slane %v1424, %v1491
      %v1493 = vlaneseq
      %v1494 = vshrl.u32 %v1493, 7
      %v1495 = vsub.s32 0, %v1494
      %v1496 = vrot.slane %v1432, %v1495
      %v1497 = vlaneseq
      %v1498 = vshrl.u32 %v1497, 7
      %v1499 = vsub.s32 0, %v1498
      %v1500 = vrot.slane %v1434, %v1499
      %v1501 = vlaneseq
      %v1502 = vshrl.u32 %v1501, 7
      %v1503 = vsub.s32 0, %v1502
      %v1504 = vrot.slane %v1417, %v1503
      %v1505 = vlaneseq
      %v1506 = vshrl.u32 %v1505, 7
      %v1507 = vsub.s32 0, %v1506
      %v1508 = vrot.slane %v1431, %v1507
      %v1509 = vlaneseq
      %v1510 = vshrl.u32 %v1509, 7
      %v1511 = vsub.s32 0, %v1510
      %v1512 = vrot.slane %v1433, %v1511
      %v1513 = vlaneseq
      %v1514 = vshrl.u32 %v1513, 7
      %v1515 = vsub.s32 0, %v1514
      %v1516 = vrot.slane %v1435, %v1515
      %v1517 = vlaneseq
      %v1518 = vshrl.u32 %v1517, 7
      %v1519 = vsub.s32 0, %v1518
      %v1520 = vrot.slane %v1459, %v1519
      %v1521 = vlaneseq
      %v1522 = vshrl.u32 %v1521, 7
      %v1523 = vsub.s32 0, %v1522
      %v1524 = vrot.slane %v1473, %v1523
      %v1525 = vlaneseq
      %v1526 = vshrl.u32 %v1525, 7
      %v1527 = vsub.s32 0, %v1526
      %v1528 = vrot.slane %v1481, %v1527
      %v1529 = vlaneseq
      %v1530 = vshrl.u32 %v1529, 7
      %v1531 = vsub.s32 0, %v1530
      %v1532 = vrot.slane %v1483, %v1531
      %v1533 = vlaneseq
      %v1534 = vshrl.u32 %v1533, 7
      %v1535 = vsub.s32 0, %v1534
      %v1536 = vrot.slane %v1466, %v1535
      %v1537 = vlaneseq
      %v1538 = vshrl.u32 %v1537, 7
      %v1539 = vsub.s32 0, %v1538
      %v1540 = vrot.slane %v1480, %v1539
      %v1541 = vlaneseq
      %v1542 = vshrl.u32 %v1541, 7
      %v1543 = vsub.s32 0, %v1542
      %v1544 = vrot.slane %v1482, %v1543
      %v1545 = vlaneseq
      %v1546 = vshrl.u32 %v1545, 7
      %v1547 = vsub.s32 0, %v1546
      %v1548 = vrot.slane %v1484, %v1547
      %v1549 = vcombine.low %v1488, %v1492
      %v1550 = vcombine.low %v1496, %v1500
      %v1551 = vcombine.low %v1504, %v1508
      %v1552 = vcombine.low %v1512, %v1516
      %v1553 = vcombine.low %v1520, %v1524
      %v1554 = vcombine.low %v1528, %v1532
      %v1555 = vcombine.low %v1536, %v1540
      %v1556 = vcombine.low %v1544, %v1548
      %1557 = vrot.lane.b32.xlu0 %v1549, 96
      %v1558 = vpop.permute.xlu0 %1557
      %1559 = vrot.lane.b32.xlu0 %v1550, 96
      %v1560 = vpop.permute.xlu0 %1559
      %1561 = vrot.lane.b32.xlu0 %v1551, 96
      %v1562 = vpop.permute.xlu0 %1561
      %1563 = vrot.lane.b32.xlu0 %v1552, 96
      %v1564 = vpop.permute.xlu0 %1563
      %1565 = vrot.lane.b32.xlu0 %v1553, 96
      %v1566 = vpop.permute.xlu0 %1565
      %1567 = vrot.lane.b32.xlu0 %v1554, 96
      %v1568 = vpop.permute.xlu0 %1567
      %1569 = vrot.lane.b32.xlu0 %v1555, 96
      %v1570 = vpop.permute.xlu0 %1569
      %1571 = vrot.lane.b32.xlu0 %v1556, 96
      %v1572 = vpop.permute.xlu0 %1571
      %v1581 = vadd.f32 %v1355, %v1558
      %v1582 = vadd.f32 %v1358, %v1560
      %v1583 = vadd.f32 %v1363, %v1562
      %v1584 = vadd.f32 %v1366, %v1564
      %v1585 = vadd.f32 %v1371, %v1566
      %v1586 = vadd.f32 %v1374, %v1568
      %v1587 = vadd.f32 %v1379, %v1570
      %v1588 = vadd.f32 %v1382, %v1572
      %v1589 = vld [vmem:[%s812] sm:$0x1]
      %v1591 = vlaneseq
      %v1592 = vshrl.u32 %v1591, 7
      %v1593 = vsub.s32 0, %v1592
      %v1594 = vrot.slane %v1589, %v1593
      %v1596 = vadd.f32 %v1581, %v1594
      %v1597 = vadd.f32 %v1582, %v1594
      %v1598 = vadd.f32 %v1583, %v1594
      %v1599 = vadd.f32 %v1584, %v1594
      %v1600 = vadd.f32 %v1585, %v1594
      %v1601 = vadd.f32 %v1586, %v1594
      %v1602 = vadd.f32 %v1587, %v1594
      %v1603 = vadd.f32 %v1588, %v1594
      %v1604 = vld [vmem:[%s815] sm:$0x1]
      %v1605 = vld [vmem:[%s818] sm:$0x1]
      %v1606 = vld [vmem:[%s831] sm:$0x1]
      %v1607 = vsel %vm883, %v1596, 0.0
      %1608 = vadd.xlane.f32.xlu0 %v1607
      %v1609 = vpop.xlane.xlu0 %1608
      %v1610 = vsel %vm883, %v1597, 0.0
      %1611 = vadd.xlane.f32.xlu0 %v1610
      %v1612 = vpop.xlane.xlu0 %1611
      %v1613 = vsel %vm883, %v1598, 0.0
      %1614 = vadd.xlane.f32.xlu0 %v1613
      %v1615 = vpop.xlane.xlu0 %1614
      %v1616 = vsel %vm883, %v1599, 0.0
      %1617 = vadd.xlane.f32.xlu0 %v1616
      %v1618 = vpop.xlane.xlu0 %1617
      %v1619 = vsel %vm883, %v1600, 0.0
      %1620 = vadd.xlane.f32.xlu0 %v1619
      %v1621 = vpop.xlane.xlu0 %1620
      %v1622 = vsel %vm883, %v1601, 0.0
      %1623 = vadd.xlane.f32.xlu0 %v1622
      %v1624 = vpop.xlane.xlu0 %1623
      %v1625 = vsel %vm883, %v1602, 0.0
      %1626 = vadd.xlane.f32.xlu0 %v1625
      %v1627 = vpop.xlane.xlu0 %1626
      %v1628 = vsel %vm883, %v1603, 0.0
      %1629 = vadd.xlane.f32.xlu0 %v1628
      %v1630 = vpop.xlane.xlu0 %1629
      %v1631 = vmul.f32 %v1609, %v945
      %v1632 = vmul.f32 %v1612, %v945
      %v1633 = vmul.f32 %v1615, %v945
      %v1634 = vmul.f32 %v1618, %v945
      %v1635 = vmul.f32 %v1621, %v945
      %v1636 = vmul.f32 %v1624, %v945
      %v1637 = vmul.f32 %v1627, %v945
      %v1638 = vmul.f32 %v1630, %v945
      %v1639 = vsub.f32 %v1596, %v1631
      %v1640 = vsub.f32 %v1597, %v1632
      %v1641 = vsub.f32 %v1598, %v1633
      %v1642 = vsub.f32 %v1599, %v1634
      %v1643 = vsub.f32 %v1600, %v1635
      %v1644 = vsub.f32 %v1601, %v1636
      %v1645 = vsub.f32 %v1602, %v1637
      %v1646 = vsub.f32 %v1603, %v1638
      %v1647 = vmul.f32 %v1639, %v1639
      %v1648 = vmul.f32 %v1640, %v1640
      %v1649 = vmul.f32 %v1641, %v1641
      %v1650 = vmul.f32 %v1642, %v1642
      %v1651 = vmul.f32 %v1643, %v1643
      %v1652 = vmul.f32 %v1644, %v1644
      %v1653 = vmul.f32 %v1645, %v1645
      %v1654 = vmul.f32 %v1646, %v1646
      %v1655 = vsel %vm883, %v1647, 0.0
      %1656 = vadd.xlane.f32.xlu0 %v1655
      %v1657 = vpop.xlane.xlu0 %1656
      %v1658 = vsel %vm883, %v1648, 0.0
      %1659 = vadd.xlane.f32.xlu0 %v1658
      %v1660 = vpop.xlane.xlu0 %1659
      %v1661 = vsel %vm883, %v1649, 0.0
      %1662 = vadd.xlane.f32.xlu0 %v1661
      %v1663 = vpop.xlane.xlu0 %1662
      %v1664 = vsel %vm883, %v1650, 0.0
      %1665 = vadd.xlane.f32.xlu0 %v1664
      %v1666 = vpop.xlane.xlu0 %1665
      %v1667 = vsel %vm883, %v1651, 0.0
      %1668 = vadd.xlane.f32.xlu0 %v1667
      %v1669 = vpop.xlane.xlu0 %1668
      %v1670 = vsel %vm883, %v1652, 0.0
      %1671 = vadd.xlane.f32.xlu0 %v1670
      %v1672 = vpop.xlane.xlu0 %1671
      %v1673 = vsel %vm883, %v1653, 0.0
      %1674 = vadd.xlane.f32.xlu0 %v1673
      %v1675 = vpop.xlane.xlu0 %1674
      %v1676 = vsel %vm883, %v1654, 0.0
      %1677 = vadd.xlane.f32.xlu0 %v1676
      %v1678 = vpop.xlane.xlu0 %1677
      %v1679 = vmul.f32 %v1657, %v945
      %v1680 = vmul.f32 %v1660, %v945
      %v1681 = vmul.f32 %v1663, %v945
      %v1682 = vmul.f32 %v1666, %v945
      %v1683 = vmul.f32 %v1669, %v945
      %v1684 = vmul.f32 %v1672, %v945
      %v1685 = vmul.f32 %v1675, %v945
      %v1686 = vmul.f32 %v1678, %v945
      %v1687 = vadd.f32 %v1679, 1e-05
      %v1688 = vadd.f32 %v1680, 1e-05
      %v1689 = vadd.f32 %v1681, 1e-05
      %v1690 = vadd.f32 %v1682, 1e-05
      %v1691 = vadd.f32 %v1683, 1e-05
      %v1692 = vadd.f32 %v1684, 1e-05
      %v1693 = vadd.f32 %v1685, 1e-05
      %v1694 = vadd.f32 %v1686, 1e-05
      %v1695 = vrsqrt.pop %v1687
      %v1696 = vrsqrt.pop %v1688
      %v1697 = vrsqrt.pop %v1689
      %v1698 = vrsqrt.pop %v1690
      %v1699 = vrsqrt.pop %v1691
      %v1700 = vrsqrt.pop %v1692
      %v1701 = vrsqrt.pop %v1693
      %v1702 = vrsqrt.pop %v1694
      %v1703 = vmul.f32 %v1639, %v1695
      %v1704 = vmul.f32 %v1640, %v1696
      %v1705 = vmul.f32 %v1641, %v1697
      %v1706 = vmul.f32 %v1642, %v1698
      %v1707 = vmul.f32 %v1643, %v1699
      %v1708 = vmul.f32 %v1644, %v1700
      %v1709 = vmul.f32 %v1645, %v1701
      %v1710 = vmul.f32 %v1646, %v1702
      %v1712 = vlaneseq
      %v1713 = vshrl.u32 %v1712, 7
      %v1714 = vsub.s32 0, %v1713
      %v1715 = vrot.slane %v1604, %v1714
      %v1717 = vmul.f32 %v1703, %v1715
      %v1718 = vmul.f32 %v1704, %v1715
      %v1719 = vmul.f32 %v1705, %v1715
      %v1720 = vmul.f32 %v1706, %v1715
      %v1721 = vmul.f32 %v1707, %v1715
      %v1722 = vmul.f32 %v1708, %v1715
      %v1723 = vmul.f32 %v1709, %v1715
      %v1724 = vmul.f32 %v1710, %v1715
      %v1726 = vlaneseq
      %v1727 = vshrl.u32 %v1726, 7
      %v1728 = vsub.s32 0, %v1727
      %v1729 = vrot.slane %v1605, %v1728
      %v1731 = vadd.f32 %v1717, %v1729
      %v1732 = vadd.f32 %v1718, %v1729
      %v1733 = vadd.f32 %v1719, %v1729
      %v1734 = vadd.f32 %v1720, %v1729
      %v1735 = vadd.f32 %v1721, %v1729
      %v1736 = vadd.f32 %v1722, %v1729
      %v1737 = vadd.f32 %v1723, %v1729
      %v1738 = vadd.f32 %v1724, %v1729
      %v1739 = vmax.f32 %v1731, 0.0
      %v1740 = vmax.f32 %v1732, 0.0
      %v1741 = vmax.f32 %v1733, 0.0
      %v1742 = vmax.f32 %v1734, 0.0
      %v1743 = vmax.f32 %v1735, 0.0
      %v1744 = vmax.f32 %v1736, 0.0
      %v1745 = vmax.f32 %v1737, 0.0
      %v1746 = vmax.f32 %v1738, 0.0
      %1755 = vrot.lane.b32.xlu0 %v1596, 96
      %v1756 = vpop.permute.xlu0 %1755
      %1757 = vrot.lane.b32.xlu0 %v1597, 96
      %v1758 = vpop.permute.xlu0 %1757
      %1759 = vrot.lane.b32.xlu0 %v1598, 96
      %v1760 = vpop.permute.xlu0 %1759
      %1761 = vrot.lane.b32.xlu0 %v1599, 96
      %v1762 = vpop.permute.xlu0 %1761
      %1763 = vrot.lane.b32.xlu0 %v1600, 96
      %v1764 = vpop.permute.xlu0 %1763
      %1765 = vrot.lane.b32.xlu0 %v1601, 96
      %v1766 = vpop.permute.xlu0 %1765
      %1767 = vrot.lane.b32.xlu0 %v1602, 96
      %v1768 = vpop.permute.xlu0 %1767
      %1769 = vrot.lane.b32.xlu0 %v1603, 96
      %v1770 = vpop.permute.xlu0 %1769
      %v1779 = vsel %vm883, %v1756, 0.0
      %1780 = vadd.xlane.f32.xlu0 %v1779
      %v1781 = vpop.xlane.xlu0 %1780
      %v1782 = vsel %vm883, %v1758, 0.0
      %1783 = vadd.xlane.f32.xlu0 %v1782
      %v1784 = vpop.xlane.xlu0 %1783
      %v1785 = vsel %vm883, %v1760, 0.0
      %1786 = vadd.xlane.f32.xlu0 %v1785
      %v1787 = vpop.xlane.xlu0 %1786
      %v1788 = vsel %vm883, %v1762, 0.0
      %1789 = vadd.xlane.f32.xlu0 %v1788
      %v1790 = vpop.xlane.xlu0 %1789
      %v1791 = vsel %vm883, %v1764, 0.0
      %1792 = vadd.xlane.f32.xlu0 %v1791
      %v1793 = vpop.xlane.xlu0 %1792
      %v1794 = vsel %vm883, %v1766, 0.0
      %1795 = vadd.xlane.f32.xlu0 %v1794
      %v1796 = vpop.xlane.xlu0 %1795
      %v1797 = vsel %vm883, %v1768, 0.0
      %1798 = vadd.xlane.f32.xlu0 %v1797
      %v1799 = vpop.xlane.xlu0 %1798
      %v1800 = vsel %vm883, %v1770, 0.0
      %1801 = vadd.xlane.f32.xlu0 %v1800
      %v1802 = vpop.xlane.xlu0 %1801
      %v1803 = vmul.f32 %v1781, %v945
      %v1804 = vmul.f32 %v1784, %v945
      %v1805 = vmul.f32 %v1787, %v945
      %v1806 = vmul.f32 %v1790, %v945
      %v1807 = vmul.f32 %v1793, %v945
      %v1808 = vmul.f32 %v1796, %v945
      %v1809 = vmul.f32 %v1799, %v945
      %v1810 = vmul.f32 %v1802, %v945
      %v1811 = vsub.f32 %v1596, %v1803
      %v1812 = vsub.f32 %v1597, %v1804
      %v1813 = vsub.f32 %v1598, %v1805
      %v1814 = vsub.f32 %v1599, %v1806
      %v1815 = vsub.f32 %v1600, %v1807
      %v1816 = vsub.f32 %v1601, %v1808
      %v1817 = vsub.f32 %v1602, %v1809
      %v1818 = vsub.f32 %v1603, %v1810
      %v1819 = vmul.f32 %v1811, %v1811
      %v1820 = vmul.f32 %v1812, %v1812
      %v1821 = vmul.f32 %v1813, %v1813
      %v1822 = vmul.f32 %v1814, %v1814
      %v1823 = vmul.f32 %v1815, %v1815
      %v1824 = vmul.f32 %v1816, %v1816
      %v1825 = vmul.f32 %v1817, %v1817
      %v1826 = vmul.f32 %v1818, %v1818
      %1835 = vrot.lane.b32.xlu0 %v1819, 96
      %v1836 = vpop.permute.xlu0 %1835
      %1837 = vrot.lane.b32.xlu0 %v1820, 96
      %v1838 = vpop.permute.xlu0 %1837
      %1839 = vrot.lane.b32.xlu0 %v1821, 96
      %v1840 = vpop.permute.xlu0 %1839
      %1841 = vrot.lane.b32.xlu0 %v1822, 96
      %v1842 = vpop.permute.xlu0 %1841
      %1843 = vrot.lane.b32.xlu0 %v1823, 96
      %v1844 = vpop.permute.xlu0 %1843
      %1845 = vrot.lane.b32.xlu0 %v1824, 96
      %v1846 = vpop.permute.xlu0 %1845
      %1847 = vrot.lane.b32.xlu0 %v1825, 96
      %v1848 = vpop.permute.xlu0 %1847
      %1849 = vrot.lane.b32.xlu0 %v1826, 96
      %v1850 = vpop.permute.xlu0 %1849
      %v1859 = vsel %vm883, %v1836, 0.0
      %1860 = vadd.xlane.f32.xlu0 %v1859
      %v1861 = vpop.xlane.xlu0 %1860
      %v1862 = vsel %vm883, %v1838, 0.0
      %1863 = vadd.xlane.f32.xlu0 %v1862
      %v1864 = vpop.xlane.xlu0 %1863
      %v1865 = vsel %vm883, %v1840, 0.0
      %1866 = vadd.xlane.f32.xlu0 %v1865
      %v1867 = vpop.xlane.xlu0 %1866
      %v1868 = vsel %vm883, %v1842, 0.0
      %1869 = vadd.xlane.f32.xlu0 %v1868
      %v1870 = vpop.xlane.xlu0 %1869
      %v1871 = vsel %vm883, %v1844, 0.0
      %1872 = vadd.xlane.f32.xlu0 %v1871
      %v1873 = vpop.xlane.xlu0 %1872
      %v1874 = vsel %vm883, %v1846, 0.0
      %1875 = vadd.xlane.f32.xlu0 %v1874
      %v1876 = vpop.xlane.xlu0 %1875
      %v1877 = vsel %vm883, %v1848, 0.0
      %1878 = vadd.xlane.f32.xlu0 %v1877
      %v1879 = vpop.xlane.xlu0 %1878
      %v1880 = vsel %vm883, %v1850, 0.0
      %1881 = vadd.xlane.f32.xlu0 %v1880
      %v1882 = vpop.xlane.xlu0 %1881
      %v1883 = vmul.f32 %v1861, %v945
      %v1884 = vmul.f32 %v1864, %v945
      %v1885 = vmul.f32 %v1867, %v945
      %v1886 = vmul.f32 %v1870, %v945
      %v1887 = vmul.f32 %v1873, %v945
      %v1888 = vmul.f32 %v1876, %v945
      %v1889 = vmul.f32 %v1879, %v945
      %v1890 = vmul.f32 %v1882, %v945
      %v1891 = vadd.f32 %v1883, 1e-05
      %v1892 = vadd.f32 %v1884, 1e-05
      %v1893 = vadd.f32 %v1885, 1e-05
      %v1894 = vadd.f32 %v1886, 1e-05
      %v1895 = vadd.f32 %v1887, 1e-05
      %v1896 = vadd.f32 %v1888, 1e-05
      %v1897 = vadd.f32 %v1889, 1e-05
      %v1898 = vadd.f32 %v1890, 1e-05
      %v1899 = vrsqrt.pop %v1891
      %v1900 = vrsqrt.pop %v1892
      %v1901 = vrsqrt.pop %v1893
      %v1902 = vrsqrt.pop %v1894
      %v1903 = vrsqrt.pop %v1895
      %v1904 = vrsqrt.pop %v1896
      %v1905 = vrsqrt.pop %v1897
      %v1906 = vrsqrt.pop %v1898
      %v1907 = vmul.f32 %v1811, %v1899
      %v1908 = vmul.f32 %v1812, %v1900
      %v1909 = vmul.f32 %v1813, %v1901
      %v1910 = vmul.f32 %v1814, %v1902
      %v1911 = vmul.f32 %v1815, %v1903
      %v1912 = vmul.f32 %v1816, %v1904
      %v1913 = vmul.f32 %v1817, %v1905
      %v1914 = vmul.f32 %v1818, %v1906
      %v1915 = vmul.f32 %v1907, %v1715
      %v1916 = vmul.f32 %v1908, %v1715
      %v1917 = vmul.f32 %v1909, %v1715
      %v1918 = vmul.f32 %v1910, %v1715
      %v1919 = vmul.f32 %v1911, %v1715
      %v1920 = vmul.f32 %v1912, %v1715
      %v1921 = vmul.f32 %v1913, %v1715
      %v1922 = vmul.f32 %v1914, %v1715
      %v1923 = vadd.f32 %v1915, %v1729
      %v1924 = vadd.f32 %v1916, %v1729
      %v1925 = vadd.f32 %v1917, %v1729
      %v1926 = vadd.f32 %v1918, %v1729
      %v1927 = vadd.f32 %v1919, %v1729
      %v1928 = vadd.f32 %v1920, %v1729
      %v1929 = vadd.f32 %v1921, %v1729
      %v1930 = vadd.f32 %v1922, %v1729
      %v1931 = vmax.f32 %v1923, 0.0
      %v1932 = vmax.f32 %v1924, 0.0
      %v1933 = vmax.f32 %v1925, 0.0
      %v1934 = vmax.f32 %v1926, 0.0
      %v1935 = vmax.f32 %v1927, 0.0
      %v1936 = vmax.f32 %v1928, 0.0
      %v1937 = vmax.f32 %v1929, 0.0
      %v1938 = vmax.f32 %v1930, 0.0
      %v1939 = vpack.c.bf16 %v1740, %v1739
      %v1940 = vpack.c.bf16 %v1742, %v1741
      %v1941 = vpack.c.bf16 %v1744, %v1743
      %v1942 = vpack.c.bf16 %v1746, %v1745
      %v1943 = vld [vmem:[%s823] sm:$0xf]
      %v1944 = vld [vmem:[%s823 + $0x4] sm:$0xf]
      %v1945 = vld [vmem:[%s823 + $0x8] sm:$0xf]
      %v1946 = vld [vmem:[%s823 + $0xc] sm:$0xf]
      %v1948 = vlaneseq
      %v1949 = vshrl.u32 %v1948, 7
      %v1950 = vsub.s32 0, %v1949
      %v1951 = vrot.slane %v1606, %v1950
      %v1957 = vunpack.c.l.b16 %v1943
      %v1958 = vunpack.c.l.b16 %v1944
      %v1959 = vunpack.c.l.b16 %v1945
      %v1960 = vunpack.c.l.b16 %v1946
      %v1961 = vpack.c.b16 %v1958, %v1957
      %v1962 = vpack.c.b16 %v1960, %v1959
      %v1966 = vsel %vm883, %v1939, 0
      %v1969 = vsel %vm883, %v1940, 0
      %v1972 = vsel %vm883, %v1941, 0
      %v1975 = vsel %vm883, %v1942, 0
      %1977 = vmatprep.subr.bf16.mxu0 0
      %1978 = vmatpush1.bf16.msra.mxu0 %v1961
      %1979 = vmatprep.subr.bf16.mxu0 0
      %1980 = vmatpush1.bf16.msra.mxu0 %v1962
      %1981 = vmatprep.subr.bf16.mxu0 0
      %1982 = vmatpush1.bf16.msra.mxu0 0
      %1983 = vmatprep.subr.bf16.mxu0 0
      %1984 = vmatpush1.bf16.msra.mxu0 0
      %1985 = vmatprep.subr.bf16.mxu0 0
      %1986 = vmatpush1.bf16.msra.mxu0 0
      %1987 = vmatprep.subr.bf16.mxu0 0
      %1988 = vmatpush1.bf16.msra.mxu0 0
      %1989 = vmatprep.subr.bf16.mxu0 0
      %1990 = vmatpush1.bf16.msra.mxu0 0
      %1991 = vmatprep.subr.bf16.mxu0 0
      %1992 = vmatpush1.bf16.msra.mxu0 0
      %1993 = vmatprep.subr.bf16.mxu0 0
      %1994 = vmatpush1.bf16.msra.mxu0 0
      %1995 = vmatprep.subr.bf16.mxu0 0
      %1996 = vmatpush1.bf16.msra.mxu0 0
      %1997 = vmatprep.subr.bf16.mxu0 0
      %1998 = vmatpush1.bf16.msra.mxu0 0
      %1999 = vmatprep.subr.bf16.mxu0 0
      %2000 = vmatpush1.bf16.msra.mxu0 0
      %2001 = vmatprep.subr.bf16.mxu0 0
      %2002 = vmatpush1.bf16.msra.mxu0 0
      %2003 = vmatprep.subr.bf16.mxu0 0
      %2004 = vmatpush1.bf16.msra.mxu0 0
      %2005 = vmatprep.subr.bf16.mxu0 0
      %2006 = vmatpush1.bf16.msra.mxu0 0
      %2007 = vmatprep.subr.bf16.mxu0 0
      %2008 = vmatpush1.bf16.msra.mxu0 0
      %2009 = vmatprep.mubr.bf16.mxu0 0
      %2010 = vmatmul.mubr.bf16.gmra.mrb[0].mxu0 %v1966
      %v2011 = vpop.f32.mrb[0].mxu0
      %v2012 = vadd.f32 %v1951, %v2011
      %v2013 = vpop.f32.mrb[0].mxu0
      %v2014 = vpop.f32.mrb[0].mxu0
      %v2015 = vadd.f32 %v1951, %v2014
      %v2016 = vpop.f32.mrb[0].mxu0
      %2017 = vmatprep.mubr.bf16.mxu0 0
      %2018 = vmatmul.mubr.bf16.gmra.mrb[0].mxu0 %v1969
      %v2019 = vpop.f32.mrb[0].mxu0
      %v2020 = vadd.f32 %v1951, %v2019
      %v2021 = vpop.f32.mrb[0].mxu0
      %v2022 = vpop.f32.mrb[0].mxu0
      %v2023 = vadd.f32 %v1951, %v2022
      %v2024 = vpop.f32.mrb[0].mxu0
      %2025 = vmatprep.mubr.bf16.mxu0 0
      %2026 = vmatmul.mubr.bf16.gmra.mrb[0].mxu0 %v1972
      %v2027 = vpop.f32.mrb[0].mxu0
      %v2028 = vadd.f32 %v1951, %v2027
      %v2029 = vpop.f32.mrb[0].mxu0
      %v2030 = vpop.f32.mrb[0].mxu0
      %v2031 = vadd.f32 %v1951, %v2030
      %v2032 = vpop.f32.mrb[0].mxu0
      %2033 = vmatprep.mubr.bf16.mxu0 0
      %2034 = vmatmul.mubr.bf16.gmra.mrb[0].mxu0 %v1975
      %v2035 = vpop.f32.mrb[0].mxu0
      %v2036 = vadd.f32 %v1951, %v2035
      %v2037 = vpop.f32.mrb[0].mxu0
      %v2038 = vpop.f32.mrb[0].mxu0
      %v2039 = vadd.f32 %v1951, %v2038
      %v2040 = vpop.f32.mrb[0].mxu0
      %2041 = vdwg.mxu0
      %v2042 = vpack.c.bf16 %v1932, %v1931
      %v2043 = vpack.c.bf16 %v1934, %v1933
      %v2044 = vpack.c.bf16 %v1936, %v1935
      %v2045 = vpack.c.bf16 %v1938, %v1937
      %v2046 = vld [vmem:[%s828] sm:$0xf]
      %v2047 = vld [vmem:[%s828 + $0x4] sm:$0xf]
      %v2048 = vld [vmem:[%s828 + $0x8] sm:$0xf]
      %v2049 = vld [vmem:[%s828 + $0xc] sm:$0xf]
      %2054 = vrot.lane.b32.xlu0 %v2042, 96
      %v2055 = vpop.permute.xlu0 %2054
      %2056 = vrot.lane.b32.xlu0 %v2043, 96
      %v2057 = vpop.permute.xlu0 %2056
      %2058 = vrot.lane.b32.xlu0 %v2044, 96
      %v2059 = vpop.permute.xlu0 %2058
      %2060 = vrot.lane.b32.xlu0 %v2045, 96
      %v2061 = vpop.permute.xlu0 %2060
      %v2066 = vunpack.c.l.b16 %v2046
      %v2067 = vunpack.c.l.b16 %v2047
      %v2068 = vunpack.c.l.b16 %v2048
      %v2069 = vunpack.c.l.b16 %v2049
      %v2070 = vpack.c.b16 %v2067, %v2066
      %v2071 = vpack.c.b16 %v2069, %v2068
      %2074 = vrot.lane.b32.xlu0 %v1951, 96
      %v2075 = vpop.permute.xlu0 %2074
      %v2078 = vsel %vm883, %v2055, 0
      %v2081 = vsel %vm883, %v2057, 0
      %v2084 = vsel %vm883, %v2059, 0
      %v2087 = vsel %vm883, %v2061, 0
      %2089 = vmatprep.subr.bf16.mxu0 0
      %2090 = vmatpush1.bf16.msra.mxu0 %v2070
      %2091 = vmatprep.subr.bf16.mxu0 0
      %2092 = vmatpush1.bf16.msra.mxu0 %v2071
      %2093 = vmatprep.subr.bf16.mxu0 0
      %2094 = vmatpush1.bf16.msra.mxu0 0
      %2095 = vmatprep.subr.bf16.mxu0 0
      %2096 = vmatpush1.bf16.msra.mxu0 0
      %2097 = vmatprep.subr.bf16.mxu0 0
      %2098 = vmatpush1.bf16.msra.mxu0 0
      %2099 = vmatprep.subr.bf16.mxu0 0
      %2100 = vmatpush1.bf16.msra.mxu0 0
      %2101 = vmatprep.subr.bf16.mxu0 0
      %2102 = vmatpush1.bf16.msra.mxu0 0
      %2103 = vmatprep.subr.bf16.mxu0 0
      %2104 = vmatpush1.bf16.msra.mxu0 0
      %2105 = vmatprep.subr.bf16.mxu0 0
      %2106 = vmatpush1.bf16.msra.mxu0 0
      %2107 = vmatprep.subr.bf16.mxu0 0
      %2108 = vmatpush1.bf16.msra.mxu0 0
      %2109 = vmatprep.subr.bf16.mxu0 0
      %2110 = vmatpush1.bf16.msra.mxu0 0
      %2111 = vmatprep.subr.bf16.mxu0 0
      %2112 = vmatpush1.bf16.msra.mxu0 0
      %2113 = vmatprep.subr.bf16.mxu0 0
      %2114 = vmatpush1.bf16.msra.mxu0 0
      %2115 = vmatprep.subr.bf16.mxu0 0
      %2116 = vmatpush1.bf16.msra.mxu0 0
      %2117 = vmatprep.subr.bf16.mxu0 0
      %2118 = vmatpush1.bf16.msra.mxu0 0
      %2119 = vmatprep.subr.bf16.mxu0 0
      %2120 = vmatpush1.bf16.msra.mxu0 0
      %2121 = vmatprep.mubr.bf16.mxu0 0
      %2122 = vmatmul.mubr.bf16.gmra.mrb[0].mxu0 %v2078
      %v2123 = vpop.f32.mrb[0].mxu0
      %v2124 = vadd.f32 %v2075, %v2123
      %v2125 = vpop.f32.mrb[0].mxu0
      %v2126 = vpop.f32.mrb[0].mxu0
      %v2127 = vadd.f32 %v2075, %v2126
      %v2128 = vpop.f32.mrb[0].mxu0
      %2129 = vmatprep.mubr.bf16.mxu0 0
      %2130 = vmatmul.mubr.bf16.gmra.mrb[0].mxu0 %v2081
      %v2131 = vpop.f32.mrb[0].mxu0
      %v2132 = vadd.f32 %v2075, %v2131
      %v2133 = vpop.f32.mrb[0].mxu0
      %v2134 = vpop.f32.mrb[0].mxu0
      %v2135 = vadd.f32 %v2075, %v2134
      %v2136 = vpop.f32.mrb[0].mxu0
      %2137 = vmatprep.mubr.bf16.mxu0 0
      %2138 = vmatmul.mubr.bf16.gmra.mrb[0].mxu0 %v2084
      %v2139 = vpop.f32.mrb[0].mxu0
      %v2140 = vadd.f32 %v2075, %v2139
      %v2141 = vpop.f32.mrb[0].mxu0
      %v2142 = vpop.f32.mrb[0].mxu0
      %v2143 = vadd.f32 %v2075, %v2142
      %v2144 = vpop.f32.mrb[0].mxu0
      %2145 = vmatprep.mubr.bf16.mxu0 0
      %2146 = vmatmul.mubr.bf16.gmra.mrb[0].mxu0 %v2087
      %v2147 = vpop.f32.mrb[0].mxu0
      %v2148 = vadd.f32 %v2075, %v2147
      %v2149 = vpop.f32.mrb[0].mxu0
      %v2150 = vpop.f32.mrb[0].mxu0
      %v2151 = vadd.f32 %v2075, %v2150
      %v2152 = vpop.f32.mrb[0].mxu0
      %2153 = vdwg.mxu0
      %v2154 = vld [vmem:[%s3] sm:$0xff]
      %v2155 = vld [vmem:[%s3 + $0x8] sm:$0xff]
      %v2156 = vld [vmem:[%s3 + $0x10] sm:$0xff]
      %v2157 = vld [vmem:[%s3 + $0x18] sm:$0xff]
      %v2158 = vld [vmem:[%s3 + $0x20] sm:$0xff]
      %v2159 = vld [vmem:[%s3 + $0x28] sm:$0xff]
      %v2160 = vld [vmem:[%s3 + $0x30] sm:$0xff]
      %v2161 = vld [vmem:[%s3 + $0x38] sm:$0xff]
      %2163 = vset.pattern.permute.xlu0 0
      %2164 = vperm.xlu0 %2163, %v2154
      %v2165 = vpop.permute.xlu0 %2164
      %2168 = vset.pattern.permute.xlu0 0
      %2169 = vperm.xlu0 %2168, %v2155
      %v2170 = vpop.permute.xlu0 %2169
      %2173 = vset.pattern.permute.xlu0 0
      %2174 = vperm.xlu0 %2173, %v2156
      %v2175 = vpop.permute.xlu0 %2174
      %2178 = vset.pattern.permute.xlu0 0
      %2179 = vperm.xlu0 %2178, %v2157
      %v2180 = vpop.permute.xlu0 %2179
      %2183 = vset.pattern.permute.xlu0 0
      %2184 = vperm.xlu0 %2183, %v2158
      %v2185 = vpop.permute.xlu0 %2184
      %2188 = vset.pattern.permute.xlu0 0
      %2189 = vperm.xlu0 %2188, %v2159
      %v2190 = vpop.permute.xlu0 %2189
      %2193 = vset.pattern.permute.xlu0 0
      %2194 = vperm.xlu0 %2193, %v2160
      %v2195 = vpop.permute.xlu0 %2194
      %2198 = vset.pattern.permute.xlu0 0
      %2199 = vperm.xlu0 %2198, %v2161
      %v2200 = vpop.permute.xlu0 %2199
      %v2202 = vmul.f32 %v2124, %v2165
      %v2203 = vmul.f32 %v2127, %v2170
      %v2204 = vmul.f32 %v2132, %v2175
      %v2205 = vmul.f32 %v2135, %v2180
      %v2206 = vmul.f32 %v2140, %v2185
      %v2207 = vmul.f32 %v2143, %v2190
      %v2208 = vmul.f32 %v2148, %v2195
      %v2209 = vmul.f32 %v2151, %v2200
      %v2212 = vcombine.high %v1046, %v1046
      %v2214 = vunpack.c.l.s4 1966171168
      %v2215 = vunpack.c.0.s8 %v2214
      %v2216 = vlaneseq
      %v2217 = vshrl.u32 %v2216, 7
      %v2218 = vsub.s32 %v2215, %v2217
      %v2219 = vrot.slane %v1046, %v2218
      %v2221 = vunpack.c.l.s4 1966171168
      %v2222 = vunpack.c.0.s8 %v2221
      %v2223 = vlaneseq
      %v2224 = vshrl.u32 %v2223, 7
      %v2225 = vsub.s32 %v2222, %v2224
      %v2226 = vrot.slane %v2212, %v2225
      %v2227 = vcombine.high %v2219, %v2219
      %v2228 = vcombine.high %v2226, %v2226
      %v2230 = vunpack.c.l.s4 1966171168
      %v2231 = vunpack.c.0.s8 %v2230
      %v2232 = vlaneseq
      %v2233 = vshrl.u32 %v2232, 7
      %v2234 = vsub.s32 %v2231, %v2233
      %v2235 = vrot.slane %v2219, %v2234
      %v2237 = vunpack.c.l.s4 1966171168
      %v2238 = vunpack.c.0.s8 %v2237
      %v2239 = vlaneseq
      %v2240 = vshrl.u32 %v2239, 7
      %v2241 = vsub.s32 %v2238, %v2240
      %v2242 = vrot.slane %v2226, %v2241
      %v2244 = vunpack.c.l.s4 1966171168
      %v2245 = vunpack.c.0.s8 %v2244
      %v2246 = vlaneseq
      %v2247 = vshrl.u32 %v2246, 7
      %v2248 = vsub.s32 %v2245, %v2247
      %v2249 = vrot.slane %v2227, %v2248
      %v2251 = vunpack.c.l.s4 1966171168
      %v2252 = vunpack.c.0.s8 %v2251
      %v2253 = vlaneseq
      %v2254 = vshrl.u32 %v2253, 7
      %v2255 = vsub.s32 %v2252, %v2254
      %v2256 = vrot.slane %v2228, %v2255
      %v2257 = vcombine.high %v2235, %v2235
      %v2258 = vcombine.high %v2242, %v2242
      %v2259 = vcombine.high %v2249, %v2249
      %v2260 = vcombine.high %v2256, %v2256
      %v2261 = vcombine.high %v1049, %v1049
      %v2263 = vunpack.c.l.s4 1966171168
      %v2264 = vunpack.c.0.s8 %v2263
      %v2265 = vlaneseq
      %v2266 = vshrl.u32 %v2265, 7
      %v2267 = vsub.s32 %v2264, %v2266
      %v2268 = vrot.slane %v1049, %v2267
      %v2270 = vunpack.c.l.s4 1966171168
      %v2271 = vunpack.c.0.s8 %v2270
      %v2272 = vlaneseq
      %v2273 = vshrl.u32 %v2272, 7
      %v2274 = vsub.s32 %v2271, %v2273
      %v2275 = vrot.slane %v2261, %v2274
      %v2276 = vcombine.high %v2268, %v2268
      %v2277 = vcombine.high %v2275, %v2275
      %v2279 = vunpack.c.l.s4 1966171168
      %v2280 = vunpack.c.0.s8 %v2279
      %v2281 = vlaneseq
      %v2282 = vshrl.u32 %v2281, 7
      %v2283 = vsub.s32 %v2280, %v2282
      %v2284 = vrot.slane %v2268, %v2283
      %v2286 = vunpack.c.l.s4 1966171168
      %v2287 = vunpack.c.0.s8 %v2286
      %v2288 = vlaneseq
      %v2289 = vshrl.u32 %v2288, 7
      %v2290 = vsub.s32 %v2287, %v2289
      %v2291 = vrot.slane %v2275, %v2290
      %v2293 = vunpack.c.l.s4 1966171168
      %v2294 = vunpack.c.0.s8 %v2293
      %v2295 = vlaneseq
      %v2296 = vshrl.u32 %v2295, 7
      %v2297 = vsub.s32 %v2294, %v2296
      %v2298 = vrot.slane %v2276, %v2297
      %v2300 = vunpack.c.l.s4 1966171168
      %v2301 = vunpack.c.0.s8 %v2300
      %v2302 = vlaneseq
      %v2303 = vshrl.u32 %v2302, 7
      %v2304 = vsub.s32 %v2301, %v2303
      %v2305 = vrot.slane %v2277, %v2304
      %v2306 = vcombine.high %v2284, %v2284
      %v2307 = vcombine.high %v2291, %v2291
      %v2308 = vcombine.high %v2298, %v2298
      %v2309 = vcombine.high %v2305, %v2305
      %v2310 = vlaneseq
      %v2311 = vshrl.u32 %v2310, 7
      %v2312 = vsub.s32 0, %v2311
      %v2313 = vrot.slane %v2235, %v2312
      %v2314 = vlaneseq
      %v2315 = vshrl.u32 %v2314, 7
      %v2316 = vsub.s32 0, %v2315
      %v2317 = vrot.slane %v2249, %v2316
      %v2318 = vlaneseq
      %v2319 = vshrl.u32 %v2318, 7
      %v2320 = vsub.s32 0, %v2319
      %v2321 = vrot.slane %v2257, %v2320
      %v2322 = vlaneseq
      %v2323 = vshrl.u32 %v2322, 7
      %v2324 = vsub.s32 0, %v2323
      %v2325 = vrot.slane %v2259, %v2324
      %v2326 = vlaneseq
      %v2327 = vshrl.u32 %v2326, 7
      %v2328 = vsub.s32 0, %v2327
      %v2329 = vrot.slane %v2242, %v2328
      %v2330 = vlaneseq
      %v2331 = vshrl.u32 %v2330, 7
      %v2332 = vsub.s32 0, %v2331
      %v2333 = vrot.slane %v2256, %v2332
      %v2334 = vlaneseq
      %v2335 = vshrl.u32 %v2334, 7
      %v2336 = vsub.s32 0, %v2335
      %v2337 = vrot.slane %v2258, %v2336
      %v2338 = vlaneseq
      %v2339 = vshrl.u32 %v2338, 7
      %v2340 = vsub.s32 0, %v2339
      %v2341 = vrot.slane %v2260, %v2340
      %v2342 = vlaneseq
      %v2343 = vshrl.u32 %v2342, 7
      %v2344 = vsub.s32 0, %v2343
      %v2345 = vrot.slane %v2284, %v2344
      %v2346 = vlaneseq
      %v2347 = vshrl.u32 %v2346, 7
      %v2348 = vsub.s32 0, %v2347
      %v2349 = vrot.slane %v2298, %v2348
      %v2350 = vlaneseq
      %v2351 = vshrl.u32 %v2350, 7
      %v2352 = vsub.s32 0, %v2351
      %v2353 = vrot.slane %v2306, %v2352
      %v2354 = vlaneseq
      %v2355 = vshrl.u32 %v2354, 7
      %v2356 = vsub.s32 0, %v2355
      %v2357 = vrot.slane %v2308, %v2356
      %v2358 = vlaneseq
      %v2359 = vshrl.u32 %v2358, 7
      %v2360 = vsub.s32 0, %v2359
      %v2361 = vrot.slane %v2291, %v2360
      %v2362 = vlaneseq
      %v2363 = vshrl.u32 %v2362, 7
      %v2364 = vsub.s32 0, %v2363
      %v2365 = vrot.slane %v2305, %v2364
      %v2366 = vlaneseq
      %v2367 = vshrl.u32 %v2366, 7
      %v2368 = vsub.s32 0, %v2367
      %v2369 = vrot.slane %v2307, %v2368
      %v2370 = vlaneseq
      %v2371 = vshrl.u32 %v2370, 7
      %v2372 = vsub.s32 0, %v2371
      %v2373 = vrot.slane %v2309, %v2372
      %v2398 = vcombine.high %v2012, %v2012
      %v2399 = vcombine.high %v2015, %v2015
      %v2400 = vcombine.high %v2020, %v2020
      %v2401 = vcombine.high %v2023, %v2023
      %v2402 = vcombine.high %v2028, %v2028
      %v2403 = vcombine.high %v2031, %v2031
      %v2404 = vcombine.high %v2036, %v2036
      %v2405 = vcombine.high %v2039, %v2039
      %v2414 = vmul.f32 %v2313, %v2012
      %v2415 = vmul.f32 %v2317, %v2398
      %v2416 = vmul.f32 %v2321, %v2015
      %v2417 = vmul.f32 %v2325, %v2399
      %v2418 = vmul.f32 %v2329, %v2020
      %v2419 = vmul.f32 %v2333, %v2400
      %v2420 = vmul.f32 %v2337, %v2023
      %v2421 = vmul.f32 %v2341, %v2401
      %v2422 = vmul.f32 %v2345, %v2028
      %v2423 = vmul.f32 %v2349, %v2402
      %v2424 = vmul.f32 %v2353, %v2031
      %v2425 = vmul.f32 %v2357, %v2403
      %v2426 = vmul.f32 %v2361, %v2036
      %v2427 = vmul.f32 %v2365, %v2404
      %v2428 = vmul.f32 %v2369, %v2039
      %v2429 = vmul.f32 %v2373, %v2405
      %v2446 = vcombine.low %v2414, %v2415
      %v2447 = vcombine.low %v2416, %v2417
      %v2448 = vcombine.low %v2418, %v2419
      %v2449 = vcombine.low %v2420, %v2421
      %v2450 = vcombine.low %v2422, %v2423
      %v2451 = vcombine.low %v2424, %v2425
      %v2452 = vcombine.low %v2426, %v2427
      %v2453 = vcombine.low %v2428, %v2429
      %v2462 = vpack.c.bf16 %v2447, %v2446
      %v2463 = vpack.c.bf16 %v2449, %v2448
      %v2464 = vpack.c.bf16 %v2451, %v2450
      %v2465 = vpack.c.bf16 %v2453, %v2452
      %v2466 = vld [vmem:[%s5] sm:$0xf]
      %v2467 = vld [vmem:[%s5 + $0x4] sm:$0xf]
      %v2468 = vld [vmem:[%s5 + $0x8] sm:$0xf]
      %v2469 = vld [vmem:[%s5 + $0xc] sm:$0xf]
      %v2474 = vunpack.c.l.b16 %v2466
      %v2475 = vunpack.c.l.b16 %v2467
      %v2476 = vunpack.c.l.b16 %v2468
      %v2477 = vunpack.c.l.b16 %v2469
      %v2478 = vpack.c.b16 %v2475, %v2474
      %v2479 = vpack.c.b16 %v2477, %v2476
      %v2483 = vsel %vm883, %v2462, 0
      %v2486 = vsel %vm883, %v2463, 0
      %v2489 = vsel %vm883, %v2464, 0
      %v2492 = vsel %vm883, %v2465, 0
      %2494 = vmatprep.subr.bf16.mxu0 0
      %2495 = vmatpush1.bf16.msra.mxu0 %v2478
      %2496 = vmatprep.subr.bf16.mxu0 0
      %2497 = vmatpush1.bf16.msra.mxu0 %v2479
      %2498 = vmatprep.subr.bf16.mxu0 0
      %2499 = vmatpush1.bf16.msra.mxu0 0
      %2500 = vmatprep.subr.bf16.mxu0 0
      %2501 = vmatpush1.bf16.msra.mxu0 0
      %2502 = vmatprep.subr.bf16.mxu0 0
      %2503 = vmatpush1.bf16.msra.mxu0 0
      %2504 = vmatprep.subr.bf16.mxu0 0
      %2505 = vmatpush1.bf16.msra.mxu0 0
      %2506 = vmatprep.subr.bf16.mxu0 0
      %2507 = vmatpush1.bf16.msra.mxu0 0
      %2508 = vmatprep.subr.bf16.mxu0 0
      %2509 = vmatpush1.bf16.msra.mxu0 0
      %2510 = vmatprep.subr.bf16.mxu0 0
      %2511 = vmatpush1.bf16.msra.mxu0 0
      %2512 = vmatprep.subr.bf16.mxu0 0
      %2513 = vmatpush1.bf16.msra.mxu0 0
      %2514 = vmatprep.subr.bf16.mxu0 0
      %2515 = vmatpush1.bf16.msra.mxu0 0
      %2516 = vmatprep.subr.bf16.mxu0 0
      %2517 = vmatpush1.bf16.msra.mxu0 0
      %2518 = vmatprep.subr.bf16.mxu0 0
      %2519 = vmatpush1.bf16.msra.mxu0 0
      %2520 = vmatprep.subr.bf16.mxu0 0
      %2521 = vmatpush1.bf16.msra.mxu0 0
      %2522 = vmatprep.subr.bf16.mxu0 0
      %2523 = vmatpush1.bf16.msra.mxu0 0
      %2524 = vmatprep.subr.bf16.mxu0 0
      %2525 = vmatpush1.bf16.msra.mxu0 0
      %2526 = vmatprep.mubr.bf16.mxu0 0
      %2527 = vmatmul.mubr.bf16.gmra.mrb[0].mxu0 %v2483
      %v2528 = vpop.f32.mrb[0].mxu0
      %v2529 = vadd.f32 0.0, %v2528
      %v2530 = vpop.f32.mrb[0].mxu0
      %v2531 = vpop.f32.mrb[0].mxu0
      %v2532 = vadd.f32 0.0, %v2531
      %v2533 = vpop.f32.mrb[0].mxu0
      %2534 = vmatprep.mubr.bf16.mxu0 0
      %2535 = vmatmul.mubr.bf16.gmra.mrb[0].mxu0 %v2486
      %v2536 = vpop.f32.mrb[0].mxu0
      %v2537 = vadd.f32 0.0, %v2536
      %v2538 = vpop.f32.mrb[0].mxu0
      %v2539 = vpop.f32.mrb[0].mxu0
      %v2540 = vadd.f32 0.0, %v2539
      %v2541 = vpop.f32.mrb[0].mxu0
      %2542 = vmatprep.mubr.bf16.mxu0 0
      %2543 = vmatmul.mubr.bf16.gmra.mrb[0].mxu0 %v2489
      %v2544 = vpop.f32.mrb[0].mxu0
      %v2545 = vadd.f32 0.0, %v2544
      %v2546 = vpop.f32.mrb[0].mxu0
      %v2547 = vpop.f32.mrb[0].mxu0
      %v2548 = vadd.f32 0.0, %v2547
      %v2549 = vpop.f32.mrb[0].mxu0
      %2550 = vmatprep.mubr.bf16.mxu0 0
      %2551 = vmatmul.mubr.bf16.gmra.mrb[0].mxu0 %v2492
      %v2552 = vpop.f32.mrb[0].mxu0
      %v2553 = vadd.f32 0.0, %v2552
      %v2554 = vpop.f32.mrb[0].mxu0
      %v2555 = vpop.f32.mrb[0].mxu0
      %v2556 = vadd.f32 0.0, %v2555
      %v2557 = vpop.f32.mrb[0].mxu0
      %2558 = vdwg.mxu0
      %v2567 = vcombine.high %v2529, %v2529
      %v2568 = vcombine.high %v2532, %v2532
      %v2569 = vcombine.high %v2537, %v2537
      %v2570 = vcombine.high %v2540, %v2540
      %v2571 = vcombine.high %v2545, %v2545
      %v2572 = vcombine.high %v2548, %v2548
      %v2573 = vcombine.high %v2553, %v2553
      %v2574 = vcombine.high %v2556, %v2556
      %v2583 = vld [vmem:[%s4] sm:$0xff]
      %v2584 = vld [vmem:[%s4 + $0x8] sm:$0xff]
      %v2585 = vlaneseq
      %v2586 = vshrl.u32 %v2585, 7
      %v2587 = vsub.s32 0, %v2586
      %v2588 = vrot.slane %v2583, %v2587
      %2590 = vbcast.lane.b32.xlu0 %v2588, 256
      %v2591 = vpop.permute.xlu0 %2590
      %v2592 = vlaneseq
      %v2593 = vshrl.u32 %v2592, 7
      %v2594 = vsub.s32 1, %v2593
      %v2595 = vrot.slane %v2583, %v2594
      %2597 = vbcast.lane.b32.xlu0 %v2595, 256
      %v2598 = vpop.permute.xlu0 %2597
      %v2599 = vlaneseq
      %v2600 = vshrl.u32 %v2599, 7
      %v2601 = vsub.s32 2, %v2600
      %v2602 = vrot.slane %v2583, %v2601
      %2604 = vbcast.lane.b32.xlu0 %v2602, 256
      %v2605 = vpop.permute.xlu0 %2604
      %v2606 = vlaneseq
      %v2607 = vshrl.u32 %v2606, 7
      %v2608 = vsub.s32 3, %v2607
      %v2609 = vrot.slane %v2583, %v2608
      %2611 = vbcast.lane.b32.xlu0 %v2609, 256
      %v2612 = vpop.permute.xlu0 %2611
      %v2613 = vlaneseq
      %v2614 = vshrl.u32 %v2613, 7
      %v2615 = vsub.s32 4, %v2614
      %v2616 = vrot.slane %v2583, %v2615
      %2618 = vbcast.lane.b32.xlu0 %v2616, 256
      %v2619 = vpop.permute.xlu0 %2618
      %v2620 = vlaneseq
      %v2621 = vshrl.u32 %v2620, 7
      %v2622 = vsub.s32 5, %v2621
      %v2623 = vrot.slane %v2583, %v2622
      %2625 = vbcast.lane.b32.xlu0 %v2623, 256
      %v2626 = vpop.permute.xlu0 %2625
      %v2627 = vlaneseq
      %v2628 = vshrl.u32 %v2627, 7
      %v2629 = vsub.s32 6, %v2628
      %v2630 = vrot.slane %v2583, %v2629
      %2632 = vbcast.lane.b32.xlu0 %v2630, 256
      %v2633 = vpop.permute.xlu0 %2632
      %v2634 = vlaneseq
      %v2635 = vshrl.u32 %v2634, 7
      %v2636 = vsub.s32 7, %v2635
      %v2637 = vrot.slane %v2583, %v2636
      %2639 = vbcast.lane.b32.xlu0 %v2637, 256
      %v2640 = vpop.permute.xlu0 %2639
      %v2641 = vlaneseq
      %v2642 = vshrl.u32 %v2641, 7
      %v2643 = vsub.s32 0, %v2642
      %v2644 = vrot.slane %v2584, %v2643
      %2646 = vbcast.lane.b32.xlu0 %v2644, 256
      %v2647 = vpop.permute.xlu0 %2646
      %v2648 = vlaneseq
      %v2649 = vshrl.u32 %v2648, 7
      %v2650 = vsub.s32 1, %v2649
      %v2651 = vrot.slane %v2584, %v2650
      %2653 = vbcast.lane.b32.xlu0 %v2651, 256
      %v2654 = vpop.permute.xlu0 %2653
      %v2655 = vlaneseq
      %v2656 = vshrl.u32 %v2655, 7
      %v2657 = vsub.s32 2, %v2656
      %v2658 = vrot.slane %v2584, %v2657
      %2660 = vbcast.lane.b32.xlu0 %v2658, 256
      %v2661 = vpop.permute.xlu0 %2660
      %v2662 = vlaneseq
      %v2663 = vshrl.u32 %v2662, 7
      %v2664 = vsub.s32 3, %v2663
      %v2665 = vrot.slane %v2584, %v2664
      %2667 = vbcast.lane.b32.xlu0 %v2665, 256
      %v2668 = vpop.permute.xlu0 %2667
      %v2669 = vlaneseq
      %v2670 = vshrl.u32 %v2669, 7
      %v2671 = vsub.s32 4, %v2670
      %v2672 = vrot.slane %v2584, %v2671
      %2674 = vbcast.lane.b32.xlu0 %v2672, 256
      %v2675 = vpop.permute.xlu0 %2674
      %v2676 = vlaneseq
      %v2677 = vshrl.u32 %v2676, 7
      %v2678 = vsub.s32 5, %v2677
      %v2679 = vrot.slane %v2584, %v2678
      %2681 = vbcast.lane.b32.xlu0 %v2679, 256
      %v2682 = vpop.permute.xlu0 %2681
      %v2683 = vlaneseq
      %v2684 = vshrl.u32 %v2683, 7
      %v2685 = vsub.s32 6, %v2684
      %v2686 = vrot.slane %v2584, %v2685
      %2688 = vbcast.lane.b32.xlu0 %v2686, 256
      %v2689 = vpop.permute.xlu0 %2688
      %v2690 = vlaneseq
      %v2691 = vshrl.u32 %v2690, 7
      %v2692 = vsub.s32 7, %v2691
      %v2693 = vrot.slane %v2584, %v2692
      %2695 = vbcast.lane.b32.xlu0 %v2693, 256
      %v2696 = vpop.permute.xlu0 %2695
      %v2697 = vadd.f32 %v2529, %v2591
      %v2698 = vadd.f32 %v2567, %v2598
      %v2699 = vadd.f32 %v2532, %v2605
      %v2700 = vadd.f32 %v2568, %v2612
      %v2701 = vadd.f32 %v2537, %v2619
      %v2702 = vadd.f32 %v2569, %v2626
      %v2703 = vadd.f32 %v2540, %v2633
      %v2704 = vadd.f32 %v2570, %v2640
      %v2705 = vadd.f32 %v2545, %v2647
      %v2706 = vadd.f32 %v2571, %v2654
      %v2707 = vadd.f32 %v2548, %v2661
      %v2708 = vadd.f32 %v2572, %v2668
      %v2709 = vadd.f32 %v2553, %v2675
      %v2710 = vadd.f32 %v2573, %v2682
      %v2711 = vadd.f32 %v2556, %v2689
      %v2712 = vadd.f32 %v2574, %v2696
      %vm2713 = vcmask 27648
      %v2714 = vsel %vm2713, %v2697, -inf
      %v2715 = vrot.slane %v2714, 4
      %v2716 = vmax.f32 %v2714, %v2715
      %v2717 = vrot.slane %v2716, 2
      %v2718 = vmax.f32 %v2716, %v2717
      %v2719 = vrot.slane %v2718, 1
      %v2720 = vmax.f32 %v2718, %v2719
      %v2721 = vsel %vm2713, %v2698, -inf
      %v2722 = vrot.slane %v2721, 4
      %v2723 = vmax.f32 %v2721, %v2722
      %v2724 = vrot.slane %v2723, 2
      %v2725 = vmax.f32 %v2723, %v2724
      %v2726 = vrot.slane %v2725, 1
      %v2727 = vmax.f32 %v2725, %v2726
      %v2728 = vsel %vm2713, %v2699, -inf
      %v2729 = vrot.slane %v2728, 4
      %v2730 = vmax.f32 %v2728, %v2729
      %v2731 = vrot.slane %v2730, 2
      %v2732 = vmax.f32 %v2730, %v2731
      %v2733 = vrot.slane %v2732, 1
      %v2734 = vmax.f32 %v2732, %v2733
      %v2735 = vsel %vm2713, %v2700, -inf
      %v2736 = vrot.slane %v2735, 4
      %v2737 = vmax.f32 %v2735, %v2736
      %v2738 = vrot.slane %v2737, 2
      %v2739 = vmax.f32 %v2737, %v2738
      %v2740 = vrot.slane %v2739, 1
      %v2741 = vmax.f32 %v2739, %v2740
      %v2742 = vsel %vm2713, %v2701, -inf
      %v2743 = vrot.slane %v2742, 4
      %v2744 = vmax.f32 %v2742, %v2743
      %v2745 = vrot.slane %v2744, 2
      %v2746 = vmax.f32 %v2744, %v2745
      %v2747 = vrot.slane %v2746, 1
      %v2748 = vmax.f32 %v2746, %v2747
      %v2749 = vsel %vm2713, %v2702, -inf
      %v2750 = vrot.slane %v2749, 4
      %v2751 = vmax.f32 %v2749, %v2750
      %v2752 = vrot.slane %v2751, 2
      %v2753 = vmax.f32 %v2751, %v2752
      %v2754 = vrot.slane %v2753, 1
      %v2755 = vmax.f32 %v2753, %v2754
      %v2756 = vsel %vm2713, %v2703, -inf
      %v2757 = vrot.slane %v2756, 4
      %v2758 = vmax.f32 %v2756, %v2757
      %v2759 = vrot.slane %v2758, 2
      %v2760 = vmax.f32 %v2758, %v2759
      %v2761 = vrot.slane %v2760, 1
      %v2762 = vmax.f32 %v2760, %v2761
      %v2763 = vsel %vm2713, %v2704, -inf
      %v2764 = vrot.slane %v2763, 4
      %v2765 = vmax.f32 %v2763, %v2764
      %v2766 = vrot.slane %v2765, 2
      %v2767 = vmax.f32 %v2765, %v2766
      %v2768 = vrot.slane %v2767, 1
      %v2769 = vmax.f32 %v2767, %v2768
      %v2770 = vsel %vm2713, %v2705, -inf
      %v2771 = vrot.slane %v2770, 4
      %v2772 = vmax.f32 %v2770, %v2771
      %v2773 = vrot.slane %v2772, 2
      %v2774 = vmax.f32 %v2772, %v2773
      %v2775 = vrot.slane %v2774, 1
      %v2776 = vmax.f32 %v2774, %v2775
      %v2777 = vsel %vm2713, %v2706, -inf
      %v2778 = vrot.slane %v2777, 4
      %v2779 = vmax.f32 %v2777, %v2778
      %v2780 = vrot.slane %v2779, 2
      %v2781 = vmax.f32 %v2779, %v2780
      %v2782 = vrot.slane %v2781, 1
      %v2783 = vmax.f32 %v2781, %v2782
      %v2784 = vsel %vm2713, %v2707, -inf
      %v2785 = vrot.slane %v2784, 4
      %v2786 = vmax.f32 %v2784, %v2785
      %v2787 = vrot.slane %v2786, 2
      %v2788 = vmax.f32 %v2786, %v2787
      %v2789 = vrot.slane %v2788, 1
      %v2790 = vmax.f32 %v2788, %v2789
      %v2791 = vsel %vm2713, %v2708, -inf
      %v2792 = vrot.slane %v2791, 4
      %v2793 = vmax.f32 %v2791, %v2792
      %v2794 = vrot.slane %v2793, 2
      %v2795 = vmax.f32 %v2793, %v2794
      %v2796 = vrot.slane %v2795, 1
      %v2797 = vmax.f32 %v2795, %v2796
      %v2798 = vsel %vm2713, %v2709, -inf
      %v2799 = vrot.slane %v2798, 4
      %v2800 = vmax.f32 %v2798, %v2799
      %v2801 = vrot.slane %v2800, 2
      %v2802 = vmax.f32 %v2800, %v2801
      %v2803 = vrot.slane %v2802, 1
      %v2804 = vmax.f32 %v2802, %v2803
      %v2805 = vsel %vm2713, %v2710, -inf
      %v2806 = vrot.slane %v2805, 4
      %v2807 = vmax.f32 %v2805, %v2806
      %v2808 = vrot.slane %v2807, 2
      %v2809 = vmax.f32 %v2807, %v2808
      %v2810 = vrot.slane %v2809, 1
      %v2811 = vmax.f32 %v2809, %v2810
      %v2812 = vsel %vm2713, %v2711, -inf
      %v2813 = vrot.slane %v2812, 4
      %v2814 = vmax.f32 %v2812, %v2813
      %v2815 = vrot.slane %v2814, 2
      %v2816 = vmax.f32 %v2814, %v2815
      %v2817 = vrot.slane %v2816, 1
      %v2818 = vmax.f32 %v2816, %v2817
      %v2819 = vsel %vm2713, %v2712, -inf
      %v2820 = vrot.slane %v2819, 4
      %v2821 = vmax.f32 %v2819, %v2820
      %v2822 = vrot.slane %v2821, 2
      %v2823 = vmax.f32 %v2821, %v2822
      %v2824 = vrot.slane %v2823, 1
      %v2825 = vmax.f32 %v2823, %v2824
      %v2826 = vsub.f32 %v2697, %v2720
      %v2827 = vsub.f32 %v2698, %v2727
      %v2828 = vsub.f32 %v2699, %v2734
      %v2829 = vsub.f32 %v2700, %v2741
      %v2830 = vsub.f32 %v2701, %v2748
      %v2831 = vsub.f32 %v2702, %v2755
      %v2832 = vsub.f32 %v2703, %v2762
      %v2833 = vsub.f32 %v2704, %v2769
      %v2834 = vsub.f32 %v2705, %v2776
      %v2835 = vsub.f32 %v2706, %v2783
      %v2836 = vsub.f32 %v2707, %v2790
      %v2837 = vsub.f32 %v2708, %v2797
      %v2838 = vsub.f32 %v2709, %v2804
      %v2839 = vsub.f32 %v2710, %v2811
      %v2840 = vsub.f32 %v2711, %v2818
      %v2841 = vsub.f32 %v2712, %v2825
      %v2842 = vmul.f32 %v2826, 1.442695
      %v2843 = vpow.pop %v2842
      %v2844 = vmul.f32 %v2827, 1.442695
      %v2845 = vpow.pop %v2844
      %v2846 = vmul.f32 %v2828, 1.442695
      %v2847 = vpow.pop %v2846
      %v2848 = vmul.f32 %v2829, 1.442695
      %v2849 = vpow.pop %v2848
      %v2850 = vmul.f32 %v2830, 1.442695
      %v2851 = vpow.pop %v2850
      %v2852 = vmul.f32 %v2831, 1.442695
      %v2853 = vpow.pop %v2852
      %v2854 = vmul.f32 %v2832, 1.442695
      %v2855 = vpow.pop %v2854
      %v2856 = vmul.f32 %v2833, 1.442695
      %v2857 = vpow.pop %v2856
      %v2858 = vmul.f32 %v2834, 1.442695
      %v2859 = vpow.pop %v2858
      %v2860 = vmul.f32 %v2835, 1.442695
      %v2861 = vpow.pop %v2860
      %v2862 = vmul.f32 %v2836, 1.442695
      %v2863 = vpow.pop %v2862
      %v2864 = vmul.f32 %v2837, 1.442695
      %v2865 = vpow.pop %v2864
      %v2866 = vmul.f32 %v2838, 1.442695
      %v2867 = vpow.pop %v2866
      %v2868 = vmul.f32 %v2839, 1.442695
      %v2869 = vpow.pop %v2868
      %v2870 = vmul.f32 %v2840, 1.442695
      %v2871 = vpow.pop %v2870
      %v2872 = vmul.f32 %v2841, 1.442695
      %v2873 = vpow.pop %v2872
      %v2874 = vsel %vm2713, %v2843, 0.0
      %v2875 = vrot.slane %v2874, 4
      %v2876 = vadd.f32 %v2874, %v2875
      %v2877 = vrot.slane %v2876, 2
      %v2878 = vadd.f32 %v2876, %v2877
      %v2879 = vrot.slane %v2878, 1
      %v2880 = vadd.f32 %v2878, %v2879
      %v2881 = vsel %vm2713, %v2845, 0.0
      %v2882 = vrot.slane %v2881, 4
      %v2883 = vadd.f32 %v2881, %v2882
      %v2884 = vrot.slane %v2883, 2
      %v2885 = vadd.f32 %v2883, %v2884
      %v2886 = vrot.slane %v2885, 1
      %v2887 = vadd.f32 %v2885, %v2886
      %v2888 = vsel %vm2713, %v2847, 0.0
      %v2889 = vrot.slane %v2888, 4
      %v2890 = vadd.f32 %v2888, %v2889
      %v2891 = vrot.slane %v2890, 2
      %v2892 = vadd.f32 %v2890, %v2891
      %v2893 = vrot.slane %v2892, 1
      %v2894 = vadd.f32 %v2892, %v2893
      %v2895 = vsel %vm2713, %v2849, 0.0
      %v2896 = vrot.slane %v2895, 4
      %v2897 = vadd.f32 %v2895, %v2896
      %v2898 = vrot.slane %v2897, 2
      %v2899 = vadd.f32 %v2897, %v2898
      %v2900 = vrot.slane %v2899, 1
      %v2901 = vadd.f32 %v2899, %v2900
      %v2902 = vsel %vm2713, %v2851, 0.0
      %v2903 = vrot.slane %v2902, 4
      %v2904 = vadd.f32 %v2902, %v2903
      %v2905 = vrot.slane %v2904, 2
      %v2906 = vadd.f32 %v2904, %v2905
      %v2907 = vrot.slane %v2906, 1
      %v2908 = vadd.f32 %v2906, %v2907
      %v2909 = vsel %vm2713, %v2853, 0.0
      %v2910 = vrot.slane %v2909, 4
      %v2911 = vadd.f32 %v2909, %v2910
      %v2912 = vrot.slane %v2911, 2
      %v2913 = vadd.f32 %v2911, %v2912
      %v2914 = vrot.slane %v2913, 1
      %v2915 = vadd.f32 %v2913, %v2914
      %v2916 = vsel %vm2713, %v2855, 0.0
      %v2917 = vrot.slane %v2916, 4
      %v2918 = vadd.f32 %v2916, %v2917
      %v2919 = vrot.slane %v2918, 2
      %v2920 = vadd.f32 %v2918, %v2919
      %v2921 = vrot.slane %v2920, 1
      %v2922 = vadd.f32 %v2920, %v2921
      %v2923 = vsel %vm2713, %v2857, 0.0
      %v2924 = vrot.slane %v2923, 4
      %v2925 = vadd.f32 %v2923, %v2924
      %v2926 = vrot.slane %v2925, 2
      %v2927 = vadd.f32 %v2925, %v2926
      %v2928 = vrot.slane %v2927, 1
      %v2929 = vadd.f32 %v2927, %v2928
      %v2930 = vsel %vm2713, %v2859, 0.0
      %v2931 = vrot.slane %v2930, 4
      %v2932 = vadd.f32 %v2930, %v2931
      %v2933 = vrot.slane %v2932, 2
      %v2934 = vadd.f32 %v2932, %v2933
      %v2935 = vrot.slane %v2934, 1
      %v2936 = vadd.f32 %v2934, %v2935
      %v2937 = vsel %vm2713, %v2861, 0.0
      %v2938 = vrot.slane %v2937, 4
      %v2939 = vadd.f32 %v2937, %v2938
      %v2940 = vrot.slane %v2939, 2
      %v2941 = vadd.f32 %v2939, %v2940
      %v2942 = vrot.slane %v2941, 1
      %v2943 = vadd.f32 %v2941, %v2942
      %v2944 = vsel %vm2713, %v2863, 0.0
      %v2945 = vrot.slane %v2944, 4
      %v2946 = vadd.f32 %v2944, %v2945
      %v2947 = vrot.slane %v2946, 2
      %v2948 = vadd.f32 %v2946, %v2947
      %v2949 = vrot.slane %v2948, 1
      %v2950 = vadd.f32 %v2948, %v2949
      %v2951 = vsel %vm2713, %v2865, 0.0
      %v2952 = vrot.slane %v2951, 4
      %v2953 = vadd.f32 %v2951, %v2952
      %v2954 = vrot.slane %v2953, 2
      %v2955 = vadd.f32 %v2953, %v2954
      %v2956 = vrot.slane %v2955, 1
      %v2957 = vadd.f32 %v2955, %v2956
      %v2958 = vsel %vm2713, %v2867, 0.0
      %v2959 = vrot.slane %v2958, 4
      %v2960 = vadd.f32 %v2958, %v2959
      %v2961 = vrot.slane %v2960, 2
      %v2962 = vadd.f32 %v2960, %v2961
      %v2963 = vrot.slane %v2962, 1
      %v2964 = vadd.f32 %v2962, %v2963
      %v2965 = vsel %vm2713, %v2869, 0.0
      %v2966 = vrot.slane %v2965, 4
      %v2967 = vadd.f32 %v2965, %v2966
      %v2968 = vrot.slane %v2967, 2
      %v2969 = vadd.f32 %v2967, %v2968
      %v2970 = vrot.slane %v2969, 1
      %v2971 = vadd.f32 %v2969, %v2970
      %v2972 = vsel %vm2713, %v2871, 0.0
      %v2973 = vrot.slane %v2972, 4
      %v2974 = vadd.f32 %v2972, %v2973
      %v2975 = vrot.slane %v2974, 2
      %v2976 = vadd.f32 %v2974, %v2975
      %v2977 = vrot.slane %v2976, 1
      %v2978 = vadd.f32 %v2976, %v2977
      %v2979 = vsel %vm2713, %v2873, 0.0
      %v2980 = vrot.slane %v2979, 4
      %v2981 = vadd.f32 %v2979, %v2980
      %v2982 = vrot.slane %v2981, 2
      %v2983 = vadd.f32 %v2981, %v2982
      %v2984 = vrot.slane %v2983, 1
      %v2985 = vadd.f32 %v2983, %v2984
      %v2986 = vrcp.pop %v2880
      %v2987 = vrcp.pop %v2887
      %v2988 = vrcp.pop %v2894
      %v2989 = vrcp.pop %v2901
      %v2990 = vrcp.pop %v2908
      %v2991 = vrcp.pop %v2915
      %v2992 = vrcp.pop %v2922
      %v2993 = vrcp.pop %v2929
      %v2994 = vrcp.pop %v2936
      %v2995 = vrcp.pop %v2943
      %v2996 = vrcp.pop %v2950
      %v2997 = vrcp.pop %v2957
      %v2998 = vrcp.pop %v2964
      %v2999 = vrcp.pop %v2971
      %v3000 = vrcp.pop %v2978
      %v3001 = vrcp.pop %v2985
      %v3002 = vmul.f32 %v2843, %v2986
      %v3003 = vmul.f32 %v2845, %v2987
      %v3004 = vmul.f32 %v2847, %v2988
      %v3005 = vmul.f32 %v2849, %v2989
      %v3006 = vmul.f32 %v2851, %v2990
      %v3007 = vmul.f32 %v2853, %v2991
      %v3008 = vmul.f32 %v2855, %v2992
      %v3009 = vmul.f32 %v2857, %v2993
      %v3010 = vmul.f32 %v2859, %v2994
      %v3011 = vmul.f32 %v2861, %v2995
      %v3012 = vmul.f32 %v2863, %v2996
      %v3013 = vmul.f32 %v2865, %v2997
      %v3014 = vmul.f32 %v2867, %v2998
      %v3015 = vmul.f32 %v2869, %v2999
      %v3016 = vmul.f32 %v2871, %v3000
      %v3017 = vmul.f32 %v2873, %v3001
      %v3034 = vcombine.low %v3002, %v3003
      %v3035 = vcombine.low %v3004, %v3005
      %v3036 = vcombine.low %v3006, %v3007
      %v3037 = vcombine.low %v3008, %v3009
      %v3038 = vcombine.low %v3010, %v3011
      %v3039 = vcombine.low %v3012, %v3013
      %v3040 = vcombine.low %v3014, %v3015
      %v3041 = vcombine.low %v3016, %v3017
      %v3050 = vpack.c.bf16 %v3035, %v3034
      %v3051 = vpack.c.bf16 %v3037, %v3036
      %v3052 = vpack.c.bf16 %v3039, %v3038
      %v3053 = vpack.c.bf16 %v3041, %v3040
      %v3054 = vld [vmem:[%s6] sm:$0x3]
      %vm3055 = vcmask 31744
      %v3057 = vsel %vm3055, %v3050, 0
      %v3060 = vsel %vm3055, %v3051, 0
      %v3063 = vsel %vm3055, %v3052, 0
      %v3066 = vsel %vm3055, %v3053, 0
      %v3069 = vsel %vm1316, %v3054, 0
      %3071 = vmatprep.subr.bf16.mxu0 0
      %3072 = vmatpush1.bf16.msra.mxu0 %v3069
      %3073 = vmatprep.subr.bf16.mxu0 0
      %3074 = vmatpush1.bf16.msra.mxu0 0
      %3075 = vmatprep.subr.bf16.mxu0 0
      %3076 = vmatpush1.bf16.msra.mxu0 0
      %3077 = vmatprep.subr.bf16.mxu0 0
      %3078 = vmatpush1.bf16.msra.mxu0 0
      %3079 = vmatprep.subr.bf16.mxu0 0
      %3080 = vmatpush1.bf16.msra.mxu0 0
      %3081 = vmatprep.subr.bf16.mxu0 0
      %3082 = vmatpush1.bf16.msra.mxu0 0
      %3083 = vmatprep.subr.bf16.mxu0 0
      %3084 = vmatpush1.bf16.msra.mxu0 0
      %3085 = vmatprep.subr.bf16.mxu0 0
      %3086 = vmatpush1.bf16.msra.mxu0 0
      %3087 = vmatprep.subr.bf16.mxu0 0
      %3088 = vmatpush1.bf16.msra.mxu0 0
      %3089 = vmatprep.subr.bf16.mxu0 0
      %3090 = vmatpush1.bf16.msra.mxu0 0
      %3091 = vmatprep.subr.bf16.mxu0 0
      %3092 = vmatpush1.bf16.msra.mxu0 0
      %3093 = vmatprep.subr.bf16.mxu0 0
      %3094 = vmatpush1.bf16.msra.mxu0 0
      %3095 = vmatprep.subr.bf16.mxu0 0
      %3096 = vmatpush1.bf16.msra.mxu0 0
      %3097 = vmatprep.subr.bf16.mxu0 0
      %3098 = vmatpush1.bf16.msra.mxu0 0
      %3099 = vmatprep.subr.bf16.mxu0 0
      %3100 = vmatpush1.bf16.msra.mxu0 0
      %3101 = vmatprep.subr.bf16.mxu0 0
      %3102 = vmatpush1.bf16.msra.mxu0 0
      %3103 = vmatprep.mubr.bf16.mxu0 0
      %3104 = vmatmul.mubr.bf16.gmra.mrb[0].mxu0 %v3057
      %v3105 = vpop.f32.mrb[0].mxu0
      %v3106 = vadd.f32 0.0, %v3105
      %v3107 = vpop.f32.mrb[0].mxu0
      %v3108 = vpop.f32.mrb[0].mxu0
      %v3109 = vadd.f32 0.0, %v3108
      %v3110 = vpop.f32.mrb[0].mxu0
      %3111 = vmatprep.mubr.bf16.mxu0 0
      %3112 = vmatmul.mubr.bf16.gmra.mrb[0].mxu0 %v3060
      %v3113 = vpop.f32.mrb[0].mxu0
      %v3114 = vadd.f32 0.0, %v3113
      %v3115 = vpop.f32.mrb[0].mxu0
      %v3116 = vpop.f32.mrb[0].mxu0
      %v3117 = vadd.f32 0.0, %v3116
      %v3118 = vpop.f32.mrb[0].mxu0
      %3119 = vmatprep.mubr.bf16.mxu0 0
      %3120 = vmatmul.mubr.bf16.gmra.mrb[0].mxu0 %v3063
      %v3121 = vpop.f32.mrb[0].mxu0
      %v3122 = vadd.f32 0.0, %v3121
      %v3123 = vpop.f32.mrb[0].mxu0
      %v3124 = vpop.f32.mrb[0].mxu0
      %v3125 = vadd.f32 0.0, %v3124
      %v3126 = vpop.f32.mrb[0].mxu0
      %3127 = vmatprep.mubr.bf16.mxu0 0
      %3128 = vmatmul.mubr.bf16.gmra.mrb[0].mxu0 %v3066
      %v3129 = vpop.f32.mrb[0].mxu0
      %v3130 = vadd.f32 0.0, %v3129
      %v3131 = vpop.f32.mrb[0].mxu0
      %v3132 = vpop.f32.mrb[0].mxu0
      %v3133 = vadd.f32 0.0, %v3132
      %v3134 = vpop.f32.mrb[0].mxu0
      %3135 = vdwg.mxu0
      %v3136 = vmul.f32 %v3106, %v2202
      %v3137 = vmul.f32 %v3109, %v2203
      %v3138 = vmul.f32 %v3114, %v2204
      %v3139 = vmul.f32 %v3117, %v2205
      %v3140 = vmul.f32 %v3122, %v2206
      %v3141 = vmul.f32 %v3125, %v2207
      %v3142 = vmul.f32 %v3130, %v2208
      %v3143 = vmul.f32 %v3133, %v2209
      %v3152 = vcombine.high %v3136, %v3136
      %v3153 = vcombine.high %v3137, %v3137
      %v3154 = vcombine.high %v3138, %v3138
      %v3155 = vcombine.high %v3139, %v3139
      %v3156 = vcombine.high %v3140, %v3140
      %v3157 = vcombine.high %v3141, %v3141
      %v3158 = vcombine.high %v3142, %v3142
      %v3159 = vcombine.high %v3143, %v3143
      %vm3168 = vcmask 257024
      %v3169 = vsel %vm3168, %v3136, 0.0
      %v3170 = vrot.slane %v3169, 4
      %v3171 = vadd.f32 %v3169, %v3170
      %v3172 = vrot.slane %v3171, 2
      %v3173 = vadd.f32 %v3171, %v3172
      %v3174 = vrot.slane %v3173, 1
      %v3175 = vadd.f32 %v3173, %v3174
      %v3176 = vsel %vm3168, %v3152, 0.0
      %v3177 = vrot.slane %v3176, 4
      %v3178 = vadd.f32 %v3176, %v3177
      %v3179 = vrot.slane %v3178, 2
      %v3180 = vadd.f32 %v3178, %v3179
      %v3181 = vrot.slane %v3180, 1
      %v3182 = vadd.f32 %v3180, %v3181
      %v3183 = vsel %vm3168, %v3137, 0.0
      %v3184 = vrot.slane %v3183, 4
      %v3185 = vadd.f32 %v3183, %v3184
      %v3186 = vrot.slane %v3185, 2
      %v3187 = vadd.f32 %v3185, %v3186
      %v3188 = vrot.slane %v3187, 1
      %v3189 = vadd.f32 %v3187, %v3188
      %v3190 = vsel %vm3168, %v3153, 0.0
      %v3191 = vrot.slane %v3190, 4
      %v3192 = vadd.f32 %v3190, %v3191
      %v3193 = vrot.slane %v3192, 2
      %v3194 = vadd.f32 %v3192, %v3193
      %v3195 = vrot.slane %v3194, 1
      %v3196 = vadd.f32 %v3194, %v3195
      %v3197 = vsel %vm3168, %v3138, 0.0
      %v3198 = vrot.slane %v3197, 4
      %v3199 = vadd.f32 %v3197, %v3198
      %v3200 = vrot.slane %v3199, 2
      %v3201 = vadd.f32 %v3199, %v3200
      %v3202 = vrot.slane %v3201, 1
      %v3203 = vadd.f32 %v3201, %v3202
      %v3204 = vsel %vm3168, %v3154, 0.0
      %v3205 = vrot.slane %v3204, 4
      %v3206 = vadd.f32 %v3204, %v3205
      %v3207 = vrot.slane %v3206, 2
      %v3208 = vadd.f32 %v3206, %v3207
      %v3209 = vrot.slane %v3208, 1
      %v3210 = vadd.f32 %v3208, %v3209
      %v3211 = vsel %vm3168, %v3139, 0.0
      %v3212 = vrot.slane %v3211, 4
      %v3213 = vadd.f32 %v3211, %v3212
      %v3214 = vrot.slane %v3213, 2
      %v3215 = vadd.f32 %v3213, %v3214
      %v3216 = vrot.slane %v3215, 1
      %v3217 = vadd.f32 %v3215, %v3216
      %v3218 = vsel %vm3168, %v3155, 0.0
      %v3219 = vrot.slane %v3218, 4
      %v3220 = vadd.f32 %v3218, %v3219
      %v3221 = vrot.slane %v3220, 2
      %v3222 = vadd.f32 %v3220, %v3221
      %v3223 = vrot.slane %v3222, 1
      %v3224 = vadd.f32 %v3222, %v3223
      %v3225 = vsel %vm3168, %v3140, 0.0
      %v3226 = vrot.slane %v3225, 4
      %v3227 = vadd.f32 %v3225, %v3226
      %v3228 = vrot.slane %v3227, 2
      %v3229 = vadd.f32 %v3227, %v3228
      %v3230 = vrot.slane %v3229, 1
      %v3231 = vadd.f32 %v3229, %v3230
      %v3232 = vsel %vm3168, %v3156, 0.0
      %v3233 = vrot.slane %v3232, 4
      %v3234 = vadd.f32 %v3232, %v3233
      %v3235 = vrot.slane %v3234, 2
      %v3236 = vadd.f32 %v3234, %v3235
      %v3237 = vrot.slane %v3236, 1
      %v3238 = vadd.f32 %v3236, %v3237
      %v3239 = vsel %vm3168, %v3141, 0.0
      %v3240 = vrot.slane %v3239, 4
      %v3241 = vadd.f32 %v3239, %v3240
      %v3242 = vrot.slane %v3241, 2
      %v3243 = vadd.f32 %v3241, %v3242
      %v3244 = vrot.slane %v3243, 1
      %v3245 = vadd.f32 %v3243, %v3244
      %v3246 = vsel %vm3168, %v3157, 0.0
      %v3247 = vrot.slane %v3246, 4
      %v3248 = vadd.f32 %v3246, %v3247
      %v3249 = vrot.slane %v3248, 2
      %v3250 = vadd.f32 %v3248, %v3249
      %v3251 = vrot.slane %v3250, 1
      %v3252 = vadd.f32 %v3250, %v3251
      %v3253 = vsel %vm3168, %v3142, 0.0
      %v3254 = vrot.slane %v3253, 4
      %v3255 = vadd.f32 %v3253, %v3254
      %v3256 = vrot.slane %v3255, 2
      %v3257 = vadd.f32 %v3255, %v3256
      %v3258 = vrot.slane %v3257, 1
      %v3259 = vadd.f32 %v3257, %v3258
      %v3260 = vsel %vm3168, %v3158, 0.0
      %v3261 = vrot.slane %v3260, 4
      %v3262 = vadd.f32 %v3260, %v3261
      %v3263 = vrot.slane %v3262, 2
      %v3264 = vadd.f32 %v3262, %v3263
      %v3265 = vrot.slane %v3264, 1
      %v3266 = vadd.f32 %v3264, %v3265
      %v3267 = vsel %vm3168, %v3143, 0.0
      %v3268 = vrot.slane %v3267, 4
      %v3269 = vadd.f32 %v3267, %v3268
      %v3270 = vrot.slane %v3269, 2
      %v3271 = vadd.f32 %v3269, %v3270
      %v3272 = vrot.slane %v3271, 1
      %v3273 = vadd.f32 %v3271, %v3272
      %v3274 = vsel %vm3168, %v3159, 0.0
      %v3275 = vrot.slane %v3274, 4
      %v3276 = vadd.f32 %v3274, %v3275
      %v3277 = vrot.slane %v3276, 2
      %v3278 = vadd.f32 %v3276, %v3277
      %v3279 = vrot.slane %v3278, 1
      %v3280 = vadd.f32 %v3278, %v3279
      %vm3297 = vcmask 1041409
      %v3298 = vsel %vm3297, %v3182, %v3175
      %vm3299 = vcmask 1042434
      %v3300 = vsel %vm3299, %v3189, %v3298
      %vm3301 = vcmask 1043459
      %v3302 = vsel %vm3301, %v3196, %v3300
      %vm3303 = vcmask 1044484
      %v3304 = vsel %vm3303, %v3203, %v3302
      %vm3305 = vcmask 1045509
      %v3306 = vsel %vm3305, %v3210, %v3304
      %vm3307 = vcmask 1046534
      %v3308 = vsel %vm3307, %v3217, %v3306
      %vm3309 = vcmask 1047559
      %v3310 = vsel %vm3309, %v3224, %v3308
      %v3311 = vsel %vm3297, %v3238, %v3231
      %v3312 = vsel %vm3299, %v3245, %v3311
      %v3313 = vsel %vm3301, %v3252, %v3312
      %v3314 = vsel %vm3303, %v3259, %v3313
      %v3315 = vsel %vm3305, %v3266, %v3314
      %v3316 = vsel %vm3307, %v3273, %v3315
      %v3317 = vsel %vm3309, %v3280, %v3316
      %v3320 = vadd.f32 %v864, %v3310
      %v3321 = vadd.f32 %v865, %v3317
      %3322 = vst.msk [vmem:[#allocation2] sm:$0xff] %vm883, %v3320
      %3323 = vst.msk [vmem:[#allocation2 + $0x8] sm:$0xff] %vm883, %v3321
      %p3324 = scmp.eq.s32.totalorder %s32, 1
      // Predicated region
      $region109: #{ipa_transformer_forward.2} parent=103 // pred_check
        %p3325 = pneg %p3324
      $region110: #{ipa_transformer_forward.2} parent=103 // pred_check_branch
        %3327 = sbr.rel (%p3325) target = $region112
      $region111: #{ipa_transformer_forward.2} parent=103 // pred_region
        %v3328 = vld [vmem:[#allocation2] sm:$0xff]
        %v3329 = vld [vmem:[#allocation2 + $0x8] sm:$0xff]
        %3330 = vst.msk [vmem:[%s21] sm:$0xff] %vm883, %v3328
        %3331 = vst.msk [vmem:[%s21 + $0x8] sm:$0xff] %vm883, %v3329
      $region112: #{ipa_transformer_forward.2} parent=103 // pred_fallthru
        _
      // Predicated region
      $region113: #{ipa_transformer_forward.2} parent=103 // pred_check
        %p3332 = pneg %p556
      $region114: #{ipa_transformer_forward.2} parent=103 // pred_check_branch
        %3334 = sbr.rel (%p3332) target = $region116
      $region115: #{ipa_transformer_forward.2} parent=103 // pred_region
        _
      $region116: #{ipa_transformer_forward.2} parent=103 // pred_fallthru
        _
      // Predicated region
      $region117: #{ipa_transformer_forward.2} parent=103 // pred_check
        %p3335 = pneg %p556
      $region118: #{ipa_transformer_forward.2} parent=103 // pred_check_branch
        %3337 = sbr.rel (%p3335) target = $region120
      $region119: #{ipa_transformer_forward.2} parent=103 // pred_region
        _
      $region120: #{ipa_transformer_forward.2} parent=103 // pred_fallthru
        _
    $region104: #{ipa_transformer_forward.2} parent=5 // pred_fallthru
      _
    %p3338 = scmp.le.s32.totalorder 2, %s27
    // Predicated region
    $region121: #{ipa_transformer_forward.2} parent=5 // pred_check
      %p3339 = pneg %p3338
    $region122: #{ipa_transformer_forward.2} parent=5 // pred_check_branch
      %3341 = sbr.rel (%p3339) target = $region124
    $region123: #{ipa_transformer_forward.2} parent=5 // pred_region
      %s3342 = ssub.s32 %s27, 2
    $region124: #{ipa_transformer_forward.2} parent=5 // pred_fallthru
      _
  $region6: #{ipa_transformer_forward.2} parent=0 // loop_footer
    %s31 = sadd.s32 1, %s27
  $region7: #{ipa_transformer_forward.2} parent=0 // loop_footer_branch
    %26 = sbr.rel target = $region3
  $region8: #{ipa_transformer_forward.2} parent=0 // loop_exit
    _

</llo_original>
